<compile_context>
chip_gen: v5e
topology: v5e:2x2
jax: 0.10.0
libtpu: 0.0.40
codegen_flags: <defaults>
</compile_context>

<pallas_src>
import functools

import jax
import jax.numpy as jnp
from jax import lax
from jax.experimental import pallas as pl
from jax.experimental.pallas import tpu as pltpu

HIDDEN_SIZE = 50
INPUT_SIZE = 1
NUM_LAYERS = 2
OUTPUT_SIZE = 1

_LANE = 128
_SUBLANE = 8


def _lstm_fc_kernel(xp_ref,      # (T, Bp, 4*Hp)  precomputed layer-1 input projection (time-major)
                    w_hh1_ref,   # (Hp, 4*Hp)
                    w_ih2_ref,   # (Hp, 4*Hp)
                    w_hh2_ref,   # (Hp, 4*Hp)
                    b2_ref,      # (Bp, 4*Hp)     pre-broadcast (= b_ih_l1 + b_hh_l1)
                    w_fc_ref,    # (Hp, Op)
                    b_fc_ref,    # (Bp, Op)       pre-broadcast
                    o_ref):      # (Bp, Op)
    T, Bp, G = xp_ref.shape
    H = G // 4   # = H_pad = 128 -> every gate slice below is lane-aligned

    # Hoisted bias load (small, stays live across the unrolled loop).
    b2 = b2_ref[...]

    def cell(gates, c):
        # PyTorch gate order: i, f, g, o; each gate block is a full 128-lane slice.
        i_g = jax.nn.sigmoid(gates[:, 0 * H:1 * H])
        f_g = jax.nn.sigmoid(gates[:, 1 * H:2 * H])
        g_g = jnp.tanh(gates[:, 2 * H:3 * H])
        o_g = jax.nn.sigmoid(gates[:, 3 * H:4 * H])
        c_new = f_g * c + i_g * g_g
        h_new = o_g * jnp.tanh(c_new)
        return h_new, c_new

    def body(t, carry):
        h1, c1, h2, c2 = carry
        # Layer 1: input projection already includes x@W_ih1 + (b_ih+b_hh).
        g1 = xp_ref[t] + jnp.dot(h1, w_hh1_ref[...],
                                 preferred_element_type=jnp.float32)
        h1, c1 = cell(g1, c1)
        # TODO(synk): inter-layer LSTM dropout is train-mode only; identity here.
        g2 = (jnp.dot(h1, w_ih2_ref[...], preferred_element_type=jnp.float32)
              + jnp.dot(h2, w_hh2_ref[...], preferred_element_type=jnp.float32)
              + b2)
        h2, c2 = cell(g2, c2)
        return h1, c1, h2, c2

    z = jnp.zeros((Bp, H), jnp.float32)
    # State lives in the loop carry (vregs); T is static and small -> full unroll.
    _, _, h2, _ = lax.fori_loop(0, T, body, (z, z, z, z), unroll=True)

    # out[:, -1, :] is the final h2; dropout = identity (eval); then the FC head.
    o_ref[...] = (jnp.dot(h2, w_fc_ref[...], preferred_element_type=jnp.float32)
                  + b_fc_ref[...])


@functools.partial(jax.jit, static_argnames=("output_size",))
def stock_indicator_forward(x, packed, *, output_size=OUTPUT_SIZE):
    """x: (B, T, input_size) float32 -> (B, output_size) float32."""
    B, T, I = x.shape
    G = packed["w_hh1"].shape[1]           # 4 * H_pad
    O_pad = packed["w_fc"].shape[1]
    Bp = ((B + _SUBLANE - 1) // _SUBLANE) * _SUBLANE

    # Hoisted layer-1 input projection: one XLA matmul for all timesteps
    # (removes the degenerate K=1 per-step matmul from the serial recurrence).
    proj = (x.reshape(B * T, I).astype(jnp.float32) @ packed["w_ih1"]
            + packed["b1"])                                    # (B*T, G)
    proj = proj.reshape(B, T, G).transpose(1, 0, 2)            # (T, B, G) time-major
    proj = jnp.pad(proj, ((0, 0), (0, Bp - B), (0, 0)))        # (T, Bp, G)

    b2 = jnp.broadcast_to(packed["b2"], (Bp, G))
    b_fc = jnp.broadcast_to(packed["b_fc"], (Bp, O_pad))

    out = pl.pallas_call(
        _lstm_fc_kernel,
        out_shape=jax.ShapeDtypeStruct((Bp, O_pad), jnp.float32),
        in_specs=[pl.BlockSpec(memory_space=pltpu.MemorySpace.VMEM)] * 7,
        out_specs=pl.BlockSpec(memory_space=pltpu.MemorySpace.VMEM),
    )(proj, packed["w_hh1"], packed["w_ih2"], packed["w_hh2"],
      b2, packed["w_fc"], b_fc)

    return out[:B, :output_size]


def init_raw_params(key, input_size=INPUT_SIZE, hidden_size=HIDDEN_SIZE,
                    output_size=OUTPUT_SIZE):
    """Deterministic init mirroring PyTorch LSTM/Linear parameter shapes."""
    H = hidden_size
    bound = 1.0 / float(H) ** 0.5
    names_shapes = [
        ("weight_ih_l0", (4 * H, input_size)),
        ("weight_hh_l0", (4 * H, H)),
        ("bias_ih_l0", (4 * H,)),
        ("bias_hh_l0", (4 * H,)),
        ("weight_ih_l1", (4 * H, H)),
        ("weight_hh_l1", (4 * H, H)),
        ("bias_ih_l1", (4 * H,)),
        ("bias_hh_l1", (4 * H,)),
        ("fc_weight", (output_size, H)),
        ("fc_bias", (output_size,)),
    ]
    keys = jax.random.split(key, len(names_shapes))
    return {name: jax.random.uniform(k, shape, jnp.float32, -bound, bound)
            for (name, shape), k in zip(names_shapes, keys)}


def pack_params(raw, input_size=INPUT_SIZE, hidden_size=HIDDEN_SIZE,
                output_size=OUTPUT_SIZE):
    """Pack PyTorch-layout weights into lane-aligned, gate-blocked padded layouts.

    Each gate occupies its own H_pad(=128)-wide lane-aligned block; padded
    rows/columns are zero so padded hidden lanes stay identically zero.
    """
    H = hidden_size
    H_pad = ((H + _LANE - 1) // _LANE) * _LANE
    O_pad = ((output_size + _LANE - 1) // _LANE) * _LANE
    G = 4 * H_pad

    def gate_block(w, in_dim, in_pad):
        # w: PyTorch (4H, in_dim) -> (in_pad, 4*H_pad), transposed & gate-blocked.
        w_t = jnp.asarray(w, jnp.float32).T.reshape(in_dim, 4, H)
        out = jnp.zeros((in_pad, 4, H_pad), jnp.float32)
        out = out.at[:in_dim, :, :H].set(w_t)
        return out.reshape(in_pad, G)

    def gate_bias(b_ih, b_hh):
        b = (jnp.asarray(b_ih, jnp.float32)
             + jnp.asarray(b_hh, jnp.float32)).reshape(4, H)
        out = jnp.zeros((4, H_pad), jnp.float32).at[:, :H].set(b)
        return out.reshape(1, G)

    w_fc = jnp.zeros((H_pad, O_pad), jnp.float32).at[:H, :output_size].set(
        jnp.asarray(raw["fc_weight"], jnp.float32).T)
    b_fc = jnp.zeros((1, O_pad), jnp.float32).at[:, :output_size].set(
        jnp.asarray(raw["fc_bias"], jnp.float32).reshape(1, output_size))

    return {
        "w_ih1": gate_block(raw["weight_ih_l0"], input_size, input_size),
        "b1":    gate_bias(raw["bias_ih_l0"], raw["bias_hh_l0"]),
        "w_hh1": gate_block(raw["weight_hh_l0"], H, H_pad),
        "w_ih2": gate_block(raw["weight_ih_l1"], H, H_pad),
        "w_hh2": gate_block(raw["weight_hh_l1"], H, H_pad),
        "b2":    gate_bias(raw["bias_ih_l1"], raw["bias_hh_l1"]),
        "w_fc":  w_fc,
        "b_fc":  b_fc,
    }


if __name__ == "__main__":
    key = jax.random.PRNGKey(0)
    k_x, k_p = jax.random.split(key)

    B, T = 2, 8
    x = jax.random.normal(k_x, (B, T, INPUT_SIZE), jnp.float32)

    raw = init_raw_params(k_p)
    packed = pack_params(raw)

    pred = stock_indicator_forward(x, packed)
    pred = jax.block_until_ready(pred)

    assert pred.shape == (B, OUTPUT_SIZE), pred.shape
    assert pred.dtype == jnp.float32, pred.dtype
    assert bool(jnp.all(jnp.isfinite(pred))), "non-finite output"
    print("KERNEL_OK")
</pallas_src>

<mosaic_0001>
module attributes {stable_mosaic.version = 11 : i64} {
  func.func @_lstm_fc_kernel(%arg0: memref<8x8x512xf32, #tpu.memory_space<vmem>>, %arg1: memref<128x512xf32, #tpu.memory_space<vmem>>, %arg2: memref<128x512xf32, #tpu.memory_space<vmem>>, %arg3: memref<128x512xf32, #tpu.memory_space<vmem>>, %arg4: memref<8x512xf32, #tpu.memory_space<vmem>>, %arg5: memref<128x128xf32, #tpu.memory_space<vmem>>, %arg6: memref<8x128xf32, #tpu.memory_space<vmem>>, %arg7: memref<8x128xf32, #tpu.memory_space<vmem>>) attributes {dimension_semantics = [], scalar_prefetch = 0 : i64, scratch_operands = 0 : i64, tpu.core_type = #tpu.core_type<tc>} {
    %c0 = arith.constant 0 : index
    %c0_0 = arith.constant 0 : index
    %0 = vector.load %arg4[%c0, %c0_0] : memref<8x512xf32, #tpu.memory_space<vmem>>, vector<8x512xf32>
    %cst = arith.constant 0.000000e+00 : f32
    %1 = vector.broadcast %cst : f32 to vector<8x128xf32>
    %c0_i32 = arith.constant 0 : i32
    %2 = arith.index_cast %c0_i32 : i32 to index
    %c0_1 = arith.constant 0 : index
    %c0_2 = arith.constant 0 : index
    %3 = vector.load %arg0[%2, %c0_1, %c0_2] : memref<8x8x512xf32, #tpu.memory_space<vmem>>, vector<1x8x512xf32>
    %4 = vector.shape_cast %3 : vector<1x8x512xf32> to vector<8x512xf32>
    %c0_3 = arith.constant 0 : index
    %c0_4 = arith.constant 0 : index
    %5 = vector.load %arg1[%c0_3, %c0_4] : memref<128x512xf32, #tpu.memory_space<vmem>>, vector<128x512xf32>
    %cst_5 = arith.constant dense<0.000000e+00> : vector<8x512xf32>
    %6 = tpu.matmul %1, %5, %cst_5 {dimension_numbers = #tpu.dot_dimension_numbers<[1], [0], [0], [1], [0, 0, 1, 1], [], []>} : vector<8x128xf32>, vector<128x512xf32>, vector<8x512xf32> -> vector<8x512xf32>
    %7 = arith.addf %4, %6 : vector<8x512xf32>
    %8 = vector.extract_strided_slice %7 {offsets = [0, 0], sizes = [8, 128], strides = [1, 1]} : vector<8x512xf32> to vector<8x128xf32>
    %9 = arith.negf %8 : vector<8x128xf32>
    %10 = math.exp %9 : vector<8x128xf32>
    %cst_6 = arith.constant 1.000000e+00 : f32
    %11 = vector.broadcast %cst_6 : f32 to vector<8x128xf32>
    %12 = arith.addf %11, %10 : vector<8x128xf32>
    %13 = arith.divf %11, %12 : vector<8x128xf32>
    %14 = vector.extract_strided_slice %7 {offsets = [0, 128], sizes = [8, 128], strides = [1, 1]} : vector<8x512xf32> to vector<8x128xf32>
    %15 = arith.negf %14 : vector<8x128xf32>
    %16 = math.exp %15 : vector<8x128xf32>
    %cst_7 = arith.constant 1.000000e+00 : f32
    %17 = vector.broadcast %cst_7 : f32 to vector<8x128xf32>
    %18 = arith.addf %17, %16 : vector<8x128xf32>
    %19 = arith.divf %17, %18 : vector<8x128xf32>
    %20 = vector.extract_strided_slice %7 {offsets = [0, 256], sizes = [8, 128], strides = [1, 1]} : vector<8x512xf32> to vector<8x128xf32>
    %21 = math.tanh %20 : vector<8x128xf32>
    %22 = vector.extract_strided_slice %7 {offsets = [0, 384], sizes = [8, 128], strides = [1, 1]} : vector<8x512xf32> to vector<8x128xf32>
    %23 = arith.negf %22 : vector<8x128xf32>
    %24 = math.exp %23 : vector<8x128xf32>
    %cst_8 = arith.constant 1.000000e+00 : f32
    %25 = vector.broadcast %cst_8 : f32 to vector<8x128xf32>
    %26 = arith.addf %25, %24 : vector<8x128xf32>
    %27 = arith.divf %25, %26 : vector<8x128xf32>
    %28 = arith.mulf %19, %1 : vector<8x128xf32>
    %29 = arith.mulf %13, %21 : vector<8x128xf32>
    %30 = arith.addf %28, %29 : vector<8x128xf32>
    %31 = math.tanh %30 : vector<8x128xf32>
    %32 = arith.mulf %27, %31 : vector<8x128xf32>
    %c0_9 = arith.constant 0 : index
    %c0_10 = arith.constant 0 : index
    %33 = vector.load %arg2[%c0_9, %c0_10] : memref<128x512xf32, #tpu.memory_space<vmem>>, vector<128x512xf32>
    %cst_11 = arith.constant dense<0.000000e+00> : vector<8x512xf32>
    %34 = tpu.matmul %32, %33, %cst_11 {dimension_numbers = #tpu.dot_dimension_numbers<[1], [0], [0], [1], [0, 0, 1, 1], [], []>} : vector<8x128xf32>, vector<128x512xf32>, vector<8x512xf32> -> vector<8x512xf32>
    %c0_12 = arith.constant 0 : index
    %c0_13 = arith.constant 0 : index
    %35 = vector.load %arg3[%c0_12, %c0_13] : memref<128x512xf32, #tpu.memory_space<vmem>>, vector<128x512xf32>
    %cst_14 = arith.constant dense<0.000000e+00> : vector<8x512xf32>
    %36 = tpu.matmul %1, %35, %cst_14 {dimension_numbers = #tpu.dot_dimension_numbers<[1], [0], [0], [1], [0, 0, 1, 1], [], []>} : vector<8x128xf32>, vector<128x512xf32>, vector<8x512xf32> -> vector<8x512xf32>
    %37 = arith.addf %34, %36 : vector<8x512xf32>
    %38 = arith.addf %37, %0 : vector<8x512xf32>
    %39 = vector.extract_strided_slice %38 {offsets = [0, 0], sizes = [8, 128], strides = [1, 1]} : vector<8x512xf32> to vector<8x128xf32>
    %40 = arith.negf %39 : vector<8x128xf32>
    %41 = math.exp %40 : vector<8x128xf32>
    %cst_15 = arith.constant 1.000000e+00 : f32
    %42 = vector.broadcast %cst_15 : f32 to vector<8x128xf32>
    %43 = arith.addf %42, %41 : vector<8x128xf32>
    %44 = arith.divf %42, %43 : vector<8x128xf32>
    %45 = vector.extract_strided_slice %38 {offsets = [0, 128], sizes = [8, 128], strides = [1, 1]} : vector<8x512xf32> to vector<8x128xf32>
    %46 = arith.negf %45 : vector<8x128xf32>
    %47 = math.exp %46 : vector<8x128xf32>
    %cst_16 = arith.constant 1.000000e+00 : f32
    %48 = vector.broadcast %cst_16 : f32 to vector<8x128xf32>
    %49 = arith.addf %48, %47 : vector<8x128xf32>
    %50 = arith.divf %48, %49 : vector<8x128xf32>
    %51 = vector.extract_strided_slice %38 {offsets = [0, 256], sizes = [8, 128], strides = [1, 1]} : vector<8x512xf32> to vector<8x128xf32>
    %52 = math.tanh %51 : vector<8x128xf32>
    %53 = vector.extract_strided_slice %38 {offsets = [0, 384], sizes = [8, 128], strides = [1, 1]} : vector<8x512xf32> to vector<8x128xf32>
    %54 = arith.negf %53 : vector<8x128xf32>
    %55 = math.exp %54 : vector<8x128xf32>
    %cst_17 = arith.constant 1.000000e+00 : f32
    %56 = vector.broadcast %cst_17 : f32 to vector<8x128xf32>
    %57 = arith.addf %56, %55 : vector<8x128xf32>
    %58 = arith.divf %56, %57 : vector<8x128xf32>
    %59 = arith.mulf %50, %1 : vector<8x128xf32>
    %60 = arith.mulf %44, %52 : vector<8x128xf32>
    %61 = arith.addf %59, %60 : vector<8x128xf32>
    %62 = math.tanh %61 : vector<8x128xf32>
    %63 = arith.mulf %58, %62 : vector<8x128xf32>
    %c1_i32 = arith.constant 1 : i32
    %64 = arith.index_cast %c1_i32 : i32 to index
    %c0_18 = arith.constant 0 : index
    %c0_19 = arith.constant 0 : index
    %65 = vector.load %arg0[%64, %c0_18, %c0_19] : memref<8x8x512xf32, #tpu.memory_space<vmem>>, vector<1x8x512xf32>
    %66 = vector.shape_cast %65 : vector<1x8x512xf32> to vector<8x512xf32>
    %c0_20 = arith.constant 0 : index
    %c0_21 = arith.constant 0 : index
    %67 = vector.load %arg1[%c0_20, %c0_21] : memref<128x512xf32, #tpu.memory_space<vmem>>, vector<128x512xf32>
    %cst_22 = arith.constant dense<0.000000e+00> : vector<8x512xf32>
    %68 = tpu.matmul %32, %67, %cst_22 {dimension_numbers = #tpu.dot_dimension_numbers<[1], [0], [0], [1], [0, 0, 1, 1], [], []>} : vector<8x128xf32>, vector<128x512xf32>, vector<8x512xf32> -> vector<8x512xf32>
    %69 = arith.addf %66, %68 : vector<8x512xf32>
    %70 = vector.extract_strided_slice %69 {offsets = [0, 0], sizes = [8, 128], strides = [1, 1]} : vector<8x512xf32> to vector<8x128xf32>
    %71 = arith.negf %70 : vector<8x128xf32>
    %72 = math.exp %71 : vector<8x128xf32>
    %cst_23 = arith.constant 1.000000e+00 : f32
    %73 = vector.broadcast %cst_23 : f32 to vector<8x128xf32>
    %74 = arith.addf %73, %72 : vector<8x128xf32>
    %75 = arith.divf %73, %74 : vector<8x128xf32>
    %76 = vector.extract_strided_slice %69 {offsets = [0, 128], sizes = [8, 128], strides = [1, 1]} : vector<8x512xf32> to vector<8x128xf32>
    %77 = arith.negf %76 : vector<8x128xf32>
    %78 = math.exp %77 : vector<8x128xf32>
    %cst_24 = arith.constant 1.000000e+00 : f32
    %79 = vector.broadcast %cst_24 : f32 to vector<8x128xf32>
    %80 = arith.addf %79, %78 : vector<8x128xf32>
    %81 = arith.divf %79, %80 : vector<8x128xf32>
    %82 = vector.extract_strided_slice %69 {offsets = [0, 256], sizes = [8, 128], strides = [1, 1]} : vector<8x512xf32> to vector<8x128xf32>
    %83 = math.tanh %82 : vector<8x128xf32>
    %84 = vector.extract_strided_slice %69 {offsets = [0, 384], sizes = [8, 128], strides = [1, 1]} : vector<8x512xf32> to vector<8x128xf32>
    %85 = arith.negf %84 : vector<8x128xf32>
    %86 = math.exp %85 : vector<8x128xf32>
    %cst_25 = arith.constant 1.000000e+00 : f32
    %87 = vector.broadcast %cst_25 : f32 to vector<8x128xf32>
    %88 = arith.addf %87, %86 : vector<8x128xf32>
    %89 = arith.divf %87, %88 : vector<8x128xf32>
    %90 = arith.mulf %81, %30 : vector<8x128xf32>
    %91 = arith.mulf %75, %83 : vector<8x128xf32>
    %92 = arith.addf %90, %91 : vector<8x128xf32>
    %93 = math.tanh %92 : vector<8x128xf32>
    %94 = arith.mulf %89, %93 : vector<8x128xf32>
    %c0_26 = arith.constant 0 : index
    %c0_27 = arith.constant 0 : index
    %95 = vector.load %arg2[%c0_26, %c0_27] : memref<128x512xf32, #tpu.memory_space<vmem>>, vector<128x512xf32>
    %cst_28 = arith.constant dense<0.000000e+00> : vector<8x512xf32>
    %96 = tpu.matmul %94, %95, %cst_28 {dimension_numbers = #tpu.dot_dimension_numbers<[1], [0], [0], [1], [0, 0, 1, 1], [], []>} : vector<8x128xf32>, vector<128x512xf32>, vector<8x512xf32> -> vector<8x512xf32>
    %c0_29 = arith.constant 0 : index
    %c0_30 = arith.constant 0 : index
    %97 = vector.load %arg3[%c0_29, %c0_30] : memref<128x512xf32, #tpu.memory_space<vmem>>, vector<128x512xf32>
    %cst_31 = arith.constant dense<0.000000e+00> : vector<8x512xf32>
    %98 = tpu.matmul %63, %97, %cst_31 {dimension_numbers = #tpu.dot_dimension_numbers<[1], [0], [0], [1], [0, 0, 1, 1], [], []>} : vector<8x128xf32>, vector<128x512xf32>, vector<8x512xf32> -> vector<8x512xf32>
    %99 = arith.addf %96, %98 : vector<8x512xf32>
    %100 = arith.addf %99, %0 : vector<8x512xf32>
    %101 = vector.extract_strided_slice %100 {offsets = [0, 0], sizes = [8, 128], strides = [1, 1]} : vector<8x512xf32> to vector<8x128xf32>
    %102 = arith.negf %101 : vector<8x128xf32>
    %103 = math.exp %102 : vector<8x128xf32>
    %cst_32 = arith.constant 1.000000e+00 : f32
    %104 = vector.broadcast %cst_32 : f32 to vector<8x128xf32>
    %105 = arith.addf %104, %103 : vector<8x128xf32>
    %106 = arith.divf %104, %105 : vector<8x128xf32>
    %107 = vector.extract_strided_slice %100 {offsets = [0, 128], sizes = [8, 128], strides = [1, 1]} : vector<8x512xf32> to vector<8x128xf32>
    %108 = arith.negf %107 : vector<8x128xf32>
    %109 = math.exp %108 : vector<8x128xf32>
    %cst_33 = arith.constant 1.000000e+00 : f32
    %110 = vector.broadcast %cst_33 : f32 to vector<8x128xf32>
    %111 = arith.addf %110, %109 : vector<8x128xf32>
    %112 = arith.divf %110, %111 : vector<8x128xf32>
    %113 = vector.extract_strided_slice %100 {offsets = [0, 256], sizes = [8, 128], strides = [1, 1]} : vector<8x512xf32> to vector<8x128xf32>
    %114 = math.tanh %113 : vector<8x128xf32>
    %115 = vector.extract_strided_slice %100 {offsets = [0, 384], sizes = [8, 128], strides = [1, 1]} : vector<8x512xf32> to vector<8x128xf32>
    %116 = arith.negf %115 : vector<8x128xf32>
    %117 = math.exp %116 : vector<8x128xf32>
    %cst_34 = arith.constant 1.000000e+00 : f32
    %118 = vector.broadcast %cst_34 : f32 to vector<8x128xf32>
    %119 = arith.addf %118, %117 : vector<8x128xf32>
    %120 = arith.divf %118, %119 : vector<8x128xf32>
    %121 = arith.mulf %112, %61 : vector<8x128xf32>
    %122 = arith.mulf %106, %114 : vector<8x128xf32>
    %123 = arith.addf %121, %122 : vector<8x128xf32>
    %124 = math.tanh %123 : vector<8x128xf32>
    %125 = arith.mulf %120, %124 : vector<8x128xf32>
    %c2_i32 = arith.constant 2 : i32
    %126 = arith.index_cast %c2_i32 : i32 to index
    %c0_35 = arith.constant 0 : index
    %c0_36 = arith.constant 0 : index
    %127 = vector.load %arg0[%126, %c0_35, %c0_36] : memref<8x8x512xf32, #tpu.memory_space<vmem>>, vector<1x8x512xf32>
    %128 = vector.shape_cast %127 : vector<1x8x512xf32> to vector<8x512xf32>
    %c0_37 = arith.constant 0 : index
    %c0_38 = arith.constant 0 : index
    %129 = vector.load %arg1[%c0_37, %c0_38] : memref<128x512xf32, #tpu.memory_space<vmem>>, vector<128x512xf32>
    %cst_39 = arith.constant dense<0.000000e+00> : vector<8x512xf32>
    %130 = tpu.matmul %94, %129, %cst_39 {dimension_numbers = #tpu.dot_dimension_numbers<[1], [0], [0], [1], [0, 0, 1, 1], [], []>} : vector<8x128xf32>, vector<128x512xf32>, vector<8x512xf32> -> vector<8x512xf32>
    %131 = arith.addf %128, %130 : vector<8x512xf32>
    %132 = vector.extract_strided_slice %131 {offsets = [0, 0], sizes = [8, 128], strides = [1, 1]} : vector<8x512xf32> to vector<8x128xf32>
    %133 = arith.negf %132 : vector<8x128xf32>
    %134 = math.exp %133 : vector<8x128xf32>
    %cst_40 = arith.constant 1.000000e+00 : f32
    %135 = vector.broadcast %cst_40 : f32 to vector<8x128xf32>
    %136 = arith.addf %135, %134 : vector<8x128xf32>
    %137 = arith.divf %135, %136 : vector<8x128xf32>
    %138 = vector.extract_strided_slice %131 {offsets = [0, 128], sizes = [8, 128], strides = [1, 1]} : vector<8x512xf32> to vector<8x128xf32>
    %139 = arith.negf %138 : vector<8x128xf32>
    %140 = math.exp %139 : vector<8x128xf32>
    %cst_41 = arith.constant 1.000000e+00 : f32
    %141 = vector.broadcast %cst_41 : f32 to vector<8x128xf32>
    %142 = arith.addf %141, %140 : vector<8x128xf32>
    %143 = arith.divf %141, %142 : vector<8x128xf32>
    %144 = vector.extract_strided_slice %131 {offsets = [0, 256], sizes = [8, 128], strides = [1, 1]} : vector<8x512xf32> to vector<8x128xf32>
    %145 = math.tanh %144 : vector<8x128xf32>
    %146 = vector.extract_strided_slice %131 {offsets = [0, 384], sizes = [8, 128], strides = [1, 1]} : vector<8x512xf32> to vector<8x128xf32>
    %147 = arith.negf %146 : vector<8x128xf32>
    %148 = math.exp %147 : vector<8x128xf32>
    %cst_42 = arith.constant 1.000000e+00 : f32
    %149 = vector.broadcast %cst_42 : f32 to vector<8x128xf32>
    %150 = arith.addf %149, %148 : vector<8x128xf32>
    %151 = arith.divf %149, %150 : vector<8x128xf32>
    %152 = arith.mulf %143, %92 : vector<8x128xf32>
    %153 = arith.mulf %137, %145 : vector<8x128xf32>
    %154 = arith.addf %152, %153 : vector<8x128xf32>
    %155 = math.tanh %154 : vector<8x128xf32>
    %156 = arith.mulf %151, %155 : vector<8x128xf32>
    %c0_43 = arith.constant 0 : index
    %c0_44 = arith.constant 0 : index
    %157 = vector.load %arg2[%c0_43, %c0_44] : memref<128x512xf32, #tpu.memory_space<vmem>>, vector<128x512xf32>
    %cst_45 = arith.constant dense<0.000000e+00> : vector<8x512xf32>
    %158 = tpu.matmul %156, %157, %cst_45 {dimension_numbers = #tpu.dot_dimension_numbers<[1], [0], [0], [1], [0, 0, 1, 1], [], []>} : vector<8x128xf32>, vector<128x512xf32>, vector<8x512xf32> -> vector<8x512xf32>
    %c0_46 = arith.constant 0 : index
    %c0_47 = arith.constant 0 : index
    %159 = vector.load %arg3[%c0_46, %c0_47] : memref<128x512xf32, #tpu.memory_space<vmem>>, vector<128x512xf32>
    %cst_48 = arith.constant dense<0.000000e+00> : vector<8x512xf32>
    %160 = tpu.matmul %125, %159, %cst_48 {dimension_numbers = #tpu.dot_dimension_numbers<[1], [0], [0], [1], [0, 0, 1, 1], [], []>} : vector<8x128xf32>, vector<128x512xf32>, vector<8x512xf32> -> vector<8x512xf32>
    %161 = arith.addf %158, %160 : vector<8x512xf32>
    %162 = arith.addf %161, %0 : vector<8x512xf32>
    %163 = vector.extract_strided_slice %162 {offsets = [0, 0], sizes = [8, 128], strides = [1, 1]} : vector<8x512xf32> to vector<8x128xf32>
    %164 = arith.negf %163 : vector<8x128xf32>
    %165 = math.exp %164 : vector<8x128xf32>
    %cst_49 = arith.constant 1.000000e+00 : f32
    %166 = vector.broadcast %cst_49 : f32 to vector<8x128xf32>
    %167 = arith.addf %166, %165 : vector<8x128xf32>
    %168 = arith.divf %166, %167 : vector<8x128xf32>
    %169 = vector.extract_strided_slice %162 {offsets = [0, 128], sizes = [8, 128], strides = [1, 1]} : vector<8x512xf32> to vector<8x128xf32>
    %170 = arith.negf %169 : vector<8x128xf32>
    %171 = math.exp %170 : vector<8x128xf32>
    %cst_50 = arith.constant 1.000000e+00 : f32
    %172 = vector.broadcast %cst_50 : f32 to vector<8x128xf32>
    %173 = arith.addf %172, %171 : vector<8x128xf32>
    %174 = arith.divf %172, %173 : vector<8x128xf32>
    %175 = vector.extract_strided_slice %162 {offsets = [0, 256], sizes = [8, 128], strides = [1, 1]} : vector<8x512xf32> to vector<8x128xf32>
    %176 = math.tanh %175 : vector<8x128xf32>
    %177 = vector.extract_strided_slice %162 {offsets = [0, 384], sizes = [8, 128], strides = [1, 1]} : vector<8x512xf32> to vector<8x128xf32>
    %178 = arith.negf %177 : vector<8x128xf32>
    %179 = math.exp %178 : vector<8x128xf32>
    %cst_51 = arith.constant 1.000000e+00 : f32
    %180 = vector.broadcast %cst_51 : f32 to vector<8x128xf32>
    %181 = arith.addf %180, %179 : vector<8x128xf32>
    %182 = arith.divf %180, %181 : vector<8x128xf32>
    %183 = arith.mulf %174, %123 : vector<8x128xf32>
    %184 = arith.mulf %168, %176 : vector<8x128xf32>
    %185 = arith.addf %183, %184 : vector<8x128xf32>
    %186 = math.tanh %185 : vector<8x128xf32>
    %187 = arith.mulf %182, %186 : vector<8x128xf32>
    %c3_i32 = arith.constant 3 : i32
    %188 = arith.index_cast %c3_i32 : i32 to index
    %c0_52 = arith.constant 0 : index
    %c0_53 = arith.constant 0 : index
    %189 = vector.load %arg0[%188, %c0_52, %c0_53] : memref<8x8x512xf32, #tpu.memory_space<vmem>>, vector<1x8x512xf32>
    %190 = vector.shape_cast %189 : vector<1x8x512xf32> to vector<8x512xf32>
    %c0_54 = arith.constant 0 : index
    %c0_55 = arith.constant 0 : index
    %191 = vector.load %arg1[%c0_54, %c0_55] : memref<128x512xf32, #tpu.memory_space<vmem>>, vector<128x512xf32>
    %cst_56 = arith.constant dense<0.000000e+00> : vector<8x512xf32>
    %192 = tpu.matmul %156, %191, %cst_56 {dimension_numbers = #tpu.dot_dimension_numbers<[1], [0], [0], [1], [0, 0, 1, 1], [], []>} : vector<8x128xf32>, vector<128x512xf32>, vector<8x512xf32> -> vector<8x512xf32>
    %193 = arith.addf %190, %192 : vector<8x512xf32>
    %194 = vector.extract_strided_slice %193 {offsets = [0, 0], sizes = [8, 128], strides = [1, 1]} : vector<8x512xf32> to vector<8x128xf32>
    %195 = arith.negf %194 : vector<8x128xf32>
    %196 = math.exp %195 : vector<8x128xf32>
    %cst_57 = arith.constant 1.000000e+00 : f32
    %197 = vector.broadcast %cst_57 : f32 to vector<8x128xf32>
    %198 = arith.addf %197, %196 : vector<8x128xf32>
    %199 = arith.divf %197, %198 : vector<8x128xf32>
    %200 = vector.extract_strided_slice %193 {offsets = [0, 128], sizes = [8, 128], strides = [1, 1]} : vector<8x512xf32> to vector<8x128xf32>
    %201 = arith.negf %200 : vector<8x128xf32>
    %202 = math.exp %201 : vector<8x128xf32>
    %cst_58 = arith.constant 1.000000e+00 : f32
    %203 = vector.broadcast %cst_58 : f32 to vector<8x128xf32>
    %204 = arith.addf %203, %202 : vector<8x128xf32>
    %205 = arith.divf %203, %204 : vector<8x128xf32>
    %206 = vector.extract_strided_slice %193 {offsets = [0, 256], sizes = [8, 128], strides = [1, 1]} : vector<8x512xf32> to vector<8x128xf32>
    %207 = math.tanh %206 : vector<8x128xf32>
    %208 = vector.extract_strided_slice %193 {offsets = [0, 384], sizes = [8, 128], strides = [1, 1]} : vector<8x512xf32> to vector<8x128xf32>
    %209 = arith.negf %208 : vector<8x128xf32>
    %210 = math.exp %209 : vector<8x128xf32>
    %cst_59 = arith.constant 1.000000e+00 : f32
    %211 = vector.broadcast %cst_59 : f32 to vector<8x128xf32>
    %212 = arith.addf %211, %210 : vector<8x128xf32>
    %213 = arith.divf %211, %212 : vector<8x128xf32>
    %214 = arith.mulf %205, %154 : vector<8x128xf32>
    %215 = arith.mulf %199, %207 : vector<8x128xf32>
    %216 = arith.addf %214, %215 : vector<8x128xf32>
    %217 = math.tanh %216 : vector<8x128xf32>
    %218 = arith.mulf %213, %217 : vector<8x128xf32>
    %c0_60 = arith.constant 0 : index
    %c0_61 = arith.constant 0 : index
    %219 = vector.load %arg2[%c0_60, %c0_61] : memref<128x512xf32, #tpu.memory_space<vmem>>, vector<128x512xf32>
    %cst_62 = arith.constant dense<0.000000e+00> : vector<8x512xf32>
    %220 = tpu.matmul %218, %219, %cst_62 {dimension_numbers = #tpu.dot_dimension_numbers<[1], [0], [0], [1], [0, 0, 1, 1], [], []>} : vector<8x128xf32>, vector<128x512xf32>, vector<8x512xf32> -> vector<8x512xf32>
    %c0_63 = arith.constant 0 : index
    %c0_64 = arith.constant 0 : index
    %221 = vector.load %arg3[%c0_63, %c0_64] : memref<128x512xf32, #tpu.memory_space<vmem>>, vector<128x512xf32>
    %cst_65 = arith.constant dense<0.000000e+00> : vector<8x512xf32>
    %222 = tpu.matmul %187, %221, %cst_65 {dimension_numbers = #tpu.dot_dimension_numbers<[1], [0], [0], [1], [0, 0, 1, 1], [], []>} : vector<8x128xf32>, vector<128x512xf32>, vector<8x512xf32> -> vector<8x512xf32>
    %223 = arith.addf %220, %222 : vector<8x512xf32>
    %224 = arith.addf %223, %0 : vector<8x512xf32>
    %225 = vector.extract_strided_slice %224 {offsets = [0, 0], sizes = [8, 128], strides = [1, 1]} : vector<8x512xf32> to vector<8x128xf32>
    %226 = arith.negf %225 : vector<8x128xf32>
    %227 = math.exp %226 : vector<8x128xf32>
    %cst_66 = arith.constant 1.000000e+00 : f32
    %228 = vector.broadcast %cst_66 : f32 to vector<8x128xf32>
    %229 = arith.addf %228, %227 : vector<8x128xf32>
    %230 = arith.divf %228, %229 : vector<8x128xf32>
    %231 = vector.extract_strided_slice %224 {offsets = [0, 128], sizes = [8, 128], strides = [1, 1]} : vector<8x512xf32> to vector<8x128xf32>
    %232 = arith.negf %231 : vector<8x128xf32>
    %233 = math.exp %232 : vector<8x128xf32>
    %cst_67 = arith.constant 1.000000e+00 : f32
    %234 = vector.broadcast %cst_67 : f32 to vector<8x128xf32>
    %235 = arith.addf %234, %233 : vector<8x128xf32>
    %236 = arith.divf %234, %235 : vector<8x128xf32>
    %237 = vector.extract_strided_slice %224 {offsets = [0, 256], sizes = [8, 128], strides = [1, 1]} : vector<8x512xf32> to vector<8x128xf32>
    %238 = math.tanh %237 : vector<8x128xf32>
    %239 = vector.extract_strided_slice %224 {offsets = [0, 384], sizes = [8, 128], strides = [1, 1]} : vector<8x512xf32> to vector<8x128xf32>
    %240 = arith.negf %239 : vector<8x128xf32>
    %241 = math.exp %240 : vector<8x128xf32>
    %cst_68 = arith.constant 1.000000e+00 : f32
    %242 = vector.broadcast %cst_68 : f32 to vector<8x128xf32>
    %243 = arith.addf %242, %241 : vector<8x128xf32>
    %244 = arith.divf %242, %243 : vector<8x128xf32>
    %245 = arith.mulf %236, %185 : vector<8x128xf32>
    %246 = arith.mulf %230, %238 : vector<8x128xf32>
    %247 = arith.addf %245, %246 : vector<8x128xf32>
    %248 = math.tanh %247 : vector<8x128xf32>
    %249 = arith.mulf %244, %248 : vector<8x128xf32>
    %c4_i32 = arith.constant 4 : i32
    %250 = arith.index_cast %c4_i32 : i32 to index
    %c0_69 = arith.constant 0 : index
    %c0_70 = arith.constant 0 : index
    %251 = vector.load %arg0[%250, %c0_69, %c0_70] : memref<8x8x512xf32, #tpu.memory_space<vmem>>, vector<1x8x512xf32>
    %252 = vector.shape_cast %251 : vector<1x8x512xf32> to vector<8x512xf32>
    %c0_71 = arith.constant 0 : index
    %c0_72 = arith.constant 0 : index
    %253 = vector.load %arg1[%c0_71, %c0_72] : memref<128x512xf32, #tpu.memory_space<vmem>>, vector<128x512xf32>
    %cst_73 = arith.constant dense<0.000000e+00> : vector<8x512xf32>
    %254 = tpu.matmul %218, %253, %cst_73 {dimension_numbers = #tpu.dot_dimension_numbers<[1], [0], [0], [1], [0, 0, 1, 1], [], []>} : vector<8x128xf32>, vector<128x512xf32>, vector<8x512xf32> -> vector<8x512xf32>
    %255 = arith.addf %252, %254 : vector<8x512xf32>
    %256 = vector.extract_strided_slice %255 {offsets = [0, 0], sizes = [8, 128], strides = [1, 1]} : vector<8x512xf32> to vector<8x128xf32>
    %257 = arith.negf %256 : vector<8x128xf32>
    %258 = math.exp %257 : vector<8x128xf32>
    %cst_74 = arith.constant 1.000000e+00 : f32
    %259 = vector.broadcast %cst_74 : f32 to vector<8x128xf32>
    %260 = arith.addf %259, %258 : vector<8x128xf32>
    %261 = arith.divf %259, %260 : vector<8x128xf32>
    %262 = vector.extract_strided_slice %255 {offsets = [0, 128], sizes = [8, 128], strides = [1, 1]} : vector<8x512xf32> to vector<8x128xf32>
    %263 = arith.negf %262 : vector<8x128xf32>
    %264 = math.exp %263 : vector<8x128xf32>
    %cst_75 = arith.constant 1.000000e+00 : f32
    %265 = vector.broadcast %cst_75 : f32 to vector<8x128xf32>
    %266 = arith.addf %265, %264 : vector<8x128xf32>
    %267 = arith.divf %265, %266 : vector<8x128xf32>
    %268 = vector.extract_strided_slice %255 {offsets = [0, 256], sizes = [8, 128], strides = [1, 1]} : vector<8x512xf32> to vector<8x128xf32>
    %269 = math.tanh %268 : vector<8x128xf32>
    %270 = vector.extract_strided_slice %255 {offsets = [0, 384], sizes = [8, 128], strides = [1, 1]} : vector<8x512xf32> to vector<8x128xf32>
    %271 = arith.negf %270 : vector<8x128xf32>
    %272 = math.exp %271 : vector<8x128xf32>
    %cst_76 = arith.constant 1.000000e+00 : f32
    %273 = vector.broadcast %cst_76 : f32 to vector<8x128xf32>
    %274 = arith.addf %273, %272 : vector<8x128xf32>
    %275 = arith.divf %273, %274 : vector<8x128xf32>
    %276 = arith.mulf %267, %216 : vector<8x128xf32>
    %277 = arith.mulf %261, %269 : vector<8x128xf32>
    %278 = arith.addf %276, %277 : vector<8x128xf32>
    %279 = math.tanh %278 : vector<8x128xf32>
    %280 = arith.mulf %275, %279 : vector<8x128xf32>
    %c0_77 = arith.constant 0 : index
    %c0_78 = arith.constant 0 : index
    %281 = vector.load %arg2[%c0_77, %c0_78] : memref<128x512xf32, #tpu.memory_space<vmem>>, vector<128x512xf32>
    %cst_79 = arith.constant dense<0.000000e+00> : vector<8x512xf32>
    %282 = tpu.matmul %280, %281, %cst_79 {dimension_numbers = #tpu.dot_dimension_numbers<[1], [0], [0], [1], [0, 0, 1, 1], [], []>} : vector<8x128xf32>, vector<128x512xf32>, vector<8x512xf32> -> vector<8x512xf32>
    %c0_80 = arith.constant 0 : index
    %c0_81 = arith.constant 0 : index
    %283 = vector.load %arg3[%c0_80, %c0_81] : memref<128x512xf32, #tpu.memory_space<vmem>>, vector<128x512xf32>
    %cst_82 = arith.constant dense<0.000000e+00> : vector<8x512xf32>
    %284 = tpu.matmul %249, %283, %cst_82 {dimension_numbers = #tpu.dot_dimension_numbers<[1], [0], [0], [1], [0, 0, 1, 1], [], []>} : vector<8x128xf32>, vector<128x512xf32>, vector<8x512xf32> -> vector<8x512xf32>
    %285 = arith.addf %282, %284 : vector<8x512xf32>
    %286 = arith.addf %285, %0 : vector<8x512xf32>
    %287 = vector.extract_strided_slice %286 {offsets = [0, 0], sizes = [8, 128], strides = [1, 1]} : vector<8x512xf32> to vector<8x128xf32>
    %288 = arith.negf %287 : vector<8x128xf32>
    %289 = math.exp %288 : vector<8x128xf32>
    %cst_83 = arith.constant 1.000000e+00 : f32
    %290 = vector.broadcast %cst_83 : f32 to vector<8x128xf32>
    %291 = arith.addf %290, %289 : vector<8x128xf32>
    %292 = arith.divf %290, %291 : vector<8x128xf32>
    %293 = vector.extract_strided_slice %286 {offsets = [0, 128], sizes = [8, 128], strides = [1, 1]} : vector<8x512xf32> to vector<8x128xf32>
    %294 = arith.negf %293 : vector<8x128xf32>
    %295 = math.exp %294 : vector<8x128xf32>
    %cst_84 = arith.constant 1.000000e+00 : f32
    %296 = vector.broadcast %cst_84 : f32 to vector<8x128xf32>
    %297 = arith.addf %296, %295 : vector<8x128xf32>
    %298 = arith.divf %296, %297 : vector<8x128xf32>
    %299 = vector.extract_strided_slice %286 {offsets = [0, 256], sizes = [8, 128], strides = [1, 1]} : vector<8x512xf32> to vector<8x128xf32>
    %300 = math.tanh %299 : vector<8x128xf32>
    %301 = vector.extract_strided_slice %286 {offsets = [0, 384], sizes = [8, 128], strides = [1, 1]} : vector<8x512xf32> to vector<8x128xf32>
    %302 = arith.negf %301 : vector<8x128xf32>
    %303 = math.exp %302 : vector<8x128xf32>
    %cst_85 = arith.constant 1.000000e+00 : f32
    %304 = vector.broadcast %cst_85 : f32 to vector<8x128xf32>
    %305 = arith.addf %304, %303 : vector<8x128xf32>
    %306 = arith.divf %304, %305 : vector<8x128xf32>
    %307 = arith.mulf %298, %247 : vector<8x128xf32>
    %308 = arith.mulf %292, %300 : vector<8x128xf32>
    %309 = arith.addf %307, %308 : vector<8x128xf32>
    %310 = math.tanh %309 : vector<8x128xf32>
    %311 = arith.mulf %306, %310 : vector<8x128xf32>
    %c5_i32 = arith.constant 5 : i32
    %312 = arith.index_cast %c5_i32 : i32 to index
    %c0_86 = arith.constant 0 : index
    %c0_87 = arith.constant 0 : index
    %313 = vector.load %arg0[%312, %c0_86, %c0_87] : memref<8x8x512xf32, #tpu.memory_space<vmem>>, vector<1x8x512xf32>
    %314 = vector.shape_cast %313 : vector<1x8x512xf32> to vector<8x512xf32>
    %c0_88 = arith.constant 0 : index
    %c0_89 = arith.constant 0 : index
    %315 = vector.load %arg1[%c0_88, %c0_89] : memref<128x512xf32, #tpu.memory_space<vmem>>, vector<128x512xf32>
    %cst_90 = arith.constant dense<0.000000e+00> : vector<8x512xf32>
    %316 = tpu.matmul %280, %315, %cst_90 {dimension_numbers = #tpu.dot_dimension_numbers<[1], [0], [0], [1], [0, 0, 1, 1], [], []>} : vector<8x128xf32>, vector<128x512xf32>, vector<8x512xf32> -> vector<8x512xf32>
    %317 = arith.addf %314, %316 : vector<8x512xf32>
    %318 = vector.extract_strided_slice %317 {offsets = [0, 0], sizes = [8, 128], strides = [1, 1]} : vector<8x512xf32> to vector<8x128xf32>
    %319 = arith.negf %318 : vector<8x128xf32>
    %320 = math.exp %319 : vector<8x128xf32>
    %cst_91 = arith.constant 1.000000e+00 : f32
    %321 = vector.broadcast %cst_91 : f32 to vector<8x128xf32>
    %322 = arith.addf %321, %320 : vector<8x128xf32>
    %323 = arith.divf %321, %322 : vector<8x128xf32>
    %324 = vector.extract_strided_slice %317 {offsets = [0, 128], sizes = [8, 128], strides = [1, 1]} : vector<8x512xf32> to vector<8x128xf32>
    %325 = arith.negf %324 : vector<8x128xf32>
    %326 = math.exp %325 : vector<8x128xf32>
    %cst_92 = arith.constant 1.000000e+00 : f32
    %327 = vector.broadcast %cst_92 : f32 to vector<8x128xf32>
    %328 = arith.addf %327, %326 : vector<8x128xf32>
    %329 = arith.divf %327, %328 : vector<8x128xf32>
    %330 = vector.extract_strided_slice %317 {offsets = [0, 256], sizes = [8, 128], strides = [1, 1]} : vector<8x512xf32> to vector<8x128xf32>
    %331 = math.tanh %330 : vector<8x128xf32>
    %332 = vector.extract_strided_slice %317 {offsets = [0, 384], sizes = [8, 128], strides = [1, 1]} : vector<8x512xf32> to vector<8x128xf32>
    %333 = arith.negf %332 : vector<8x128xf32>
    %334 = math.exp %333 : vector<8x128xf32>
    %cst_93 = arith.constant 1.000000e+00 : f32
    %335 = vector.broadcast %cst_93 : f32 to vector<8x128xf32>
    %336 = arith.addf %335, %334 : vector<8x128xf32>
    %337 = arith.divf %335, %336 : vector<8x128xf32>
    %338 = arith.mulf %329, %278 : vector<8x128xf32>
    %339 = arith.mulf %323, %331 : vector<8x128xf32>
    %340 = arith.addf %338, %339 : vector<8x128xf32>
    %341 = math.tanh %340 : vector<8x128xf32>
    %342 = arith.mulf %337, %341 : vector<8x128xf32>
    %c0_94 = arith.constant 0 : index
    %c0_95 = arith.constant 0 : index
    %343 = vector.load %arg2[%c0_94, %c0_95] : memref<128x512xf32, #tpu.memory_space<vmem>>, vector<128x512xf32>
    %cst_96 = arith.constant dense<0.000000e+00> : vector<8x512xf32>
    %344 = tpu.matmul %342, %343, %cst_96 {dimension_numbers = #tpu.dot_dimension_numbers<[1], [0], [0], [1], [0, 0, 1, 1], [], []>} : vector<8x128xf32>, vector<128x512xf32>, vector<8x512xf32> -> vector<8x512xf32>
    %c0_97 = arith.constant 0 : index
    %c0_98 = arith.constant 0 : index
    %345 = vector.load %arg3[%c0_97, %c0_98] : memref<128x512xf32, #tpu.memory_space<vmem>>, vector<128x512xf32>
    %cst_99 = arith.constant dense<0.000000e+00> : vector<8x512xf32>
    %346 = tpu.matmul %311, %345, %cst_99 {dimension_numbers = #tpu.dot_dimension_numbers<[1], [0], [0], [1], [0, 0, 1, 1], [], []>} : vector<8x128xf32>, vector<128x512xf32>, vector<8x512xf32> -> vector<8x512xf32>
    %347 = arith.addf %344, %346 : vector<8x512xf32>
    %348 = arith.addf %347, %0 : vector<8x512xf32>
    %349 = vector.extract_strided_slice %348 {offsets = [0, 0], sizes = [8, 128], strides = [1, 1]} : vector<8x512xf32> to vector<8x128xf32>
    %350 = arith.negf %349 : vector<8x128xf32>
    %351 = math.exp %350 : vector<8x128xf32>
    %cst_100 = arith.constant 1.000000e+00 : f32
    %352 = vector.broadcast %cst_100 : f32 to vector<8x128xf32>
    %353 = arith.addf %352, %351 : vector<8x128xf32>
    %354 = arith.divf %352, %353 : vector<8x128xf32>
    %355 = vector.extract_strided_slice %348 {offsets = [0, 128], sizes = [8, 128], strides = [1, 1]} : vector<8x512xf32> to vector<8x128xf32>
    %356 = arith.negf %355 : vector<8x128xf32>
    %357 = math.exp %356 : vector<8x128xf32>
    %cst_101 = arith.constant 1.000000e+00 : f32
    %358 = vector.broadcast %cst_101 : f32 to vector<8x128xf32>
    %359 = arith.addf %358, %357 : vector<8x128xf32>
    %360 = arith.divf %358, %359 : vector<8x128xf32>
    %361 = vector.extract_strided_slice %348 {offsets = [0, 256], sizes = [8, 128], strides = [1, 1]} : vector<8x512xf32> to vector<8x128xf32>
    %362 = math.tanh %361 : vector<8x128xf32>
    %363 = vector.extract_strided_slice %348 {offsets = [0, 384], sizes = [8, 128], strides = [1, 1]} : vector<8x512xf32> to vector<8x128xf32>
    %364 = arith.negf %363 : vector<8x128xf32>
    %365 = math.exp %364 : vector<8x128xf32>
    %cst_102 = arith.constant 1.000000e+00 : f32
    %366 = vector.broadcast %cst_102 : f32 to vector<8x128xf32>
    %367 = arith.addf %366, %365 : vector<8x128xf32>
    %368 = arith.divf %366, %367 : vector<8x128xf32>
    %369 = arith.mulf %360, %309 : vector<8x128xf32>
    %370 = arith.mulf %354, %362 : vector<8x128xf32>
    %371 = arith.addf %369, %370 : vector<8x128xf32>
    %372 = math.tanh %371 : vector<8x128xf32>
    %373 = arith.mulf %368, %372 : vector<8x128xf32>
    %c6_i32 = arith.constant 6 : i32
    %374 = arith.index_cast %c6_i32 : i32 to index
    %c0_103 = arith.constant 0 : index
    %c0_104 = arith.constant 0 : index
    %375 = vector.load %arg0[%374, %c0_103, %c0_104] : memref<8x8x512xf32, #tpu.memory_space<vmem>>, vector<1x8x512xf32>
    %376 = vector.shape_cast %375 : vector<1x8x512xf32> to vector<8x512xf32>
    %c0_105 = arith.constant 0 : index
    %c0_106 = arith.constant 0 : index
    %377 = vector.load %arg1[%c0_105, %c0_106] : memref<128x512xf32, #tpu.memory_space<vmem>>, vector<128x512xf32>
    %cst_107 = arith.constant dense<0.000000e+00> : vector<8x512xf32>
    %378 = tpu.matmul %342, %377, %cst_107 {dimension_numbers = #tpu.dot_dimension_numbers<[1], [0], [0], [1], [0, 0, 1, 1], [], []>} : vector<8x128xf32>, vector<128x512xf32>, vector<8x512xf32> -> vector<8x512xf32>
    %379 = arith.addf %376, %378 : vector<8x512xf32>
    %380 = vector.extract_strided_slice %379 {offsets = [0, 0], sizes = [8, 128], strides = [1, 1]} : vector<8x512xf32> to vector<8x128xf32>
    %381 = arith.negf %380 : vector<8x128xf32>
    %382 = math.exp %381 : vector<8x128xf32>
    %cst_108 = arith.constant 1.000000e+00 : f32
    %383 = vector.broadcast %cst_108 : f32 to vector<8x128xf32>
    %384 = arith.addf %383, %382 : vector<8x128xf32>
    %385 = arith.divf %383, %384 : vector<8x128xf32>
    %386 = vector.extract_strided_slice %379 {offsets = [0, 128], sizes = [8, 128], strides = [1, 1]} : vector<8x512xf32> to vector<8x128xf32>
    %387 = arith.negf %386 : vector<8x128xf32>
    %388 = math.exp %387 : vector<8x128xf32>
    %cst_109 = arith.constant 1.000000e+00 : f32
    %389 = vector.broadcast %cst_109 : f32 to vector<8x128xf32>
    %390 = arith.addf %389, %388 : vector<8x128xf32>
    %391 = arith.divf %389, %390 : vector<8x128xf32>
    %392 = vector.extract_strided_slice %379 {offsets = [0, 256], sizes = [8, 128], strides = [1, 1]} : vector<8x512xf32> to vector<8x128xf32>
    %393 = math.tanh %392 : vector<8x128xf32>
    %394 = vector.extract_strided_slice %379 {offsets = [0, 384], sizes = [8, 128], strides = [1, 1]} : vector<8x512xf32> to vector<8x128xf32>
    %395 = arith.negf %394 : vector<8x128xf32>
    %396 = math.exp %395 : vector<8x128xf32>
    %cst_110 = arith.constant 1.000000e+00 : f32
    %397 = vector.broadcast %cst_110 : f32 to vector<8x128xf32>
    %398 = arith.addf %397, %396 : vector<8x128xf32>
    %399 = arith.divf %397, %398 : vector<8x128xf32>
    %400 = arith.mulf %391, %340 : vector<8x128xf32>
    %401 = arith.mulf %385, %393 : vector<8x128xf32>
    %402 = arith.addf %400, %401 : vector<8x128xf32>
    %403 = math.tanh %402 : vector<8x128xf32>
    %404 = arith.mulf %399, %403 : vector<8x128xf32>
    %c0_111 = arith.constant 0 : index
    %c0_112 = arith.constant 0 : index
    %405 = vector.load %arg2[%c0_111, %c0_112] : memref<128x512xf32, #tpu.memory_space<vmem>>, vector<128x512xf32>
    %cst_113 = arith.constant dense<0.000000e+00> : vector<8x512xf32>
    %406 = tpu.matmul %404, %405, %cst_113 {dimension_numbers = #tpu.dot_dimension_numbers<[1], [0], [0], [1], [0, 0, 1, 1], [], []>} : vector<8x128xf32>, vector<128x512xf32>, vector<8x512xf32> -> vector<8x512xf32>
    %c0_114 = arith.constant 0 : index
    %c0_115 = arith.constant 0 : index
    %407 = vector.load %arg3[%c0_114, %c0_115] : memref<128x512xf32, #tpu.memory_space<vmem>>, vector<128x512xf32>
    %cst_116 = arith.constant dense<0.000000e+00> : vector<8x512xf32>
    %408 = tpu.matmul %373, %407, %cst_116 {dimension_numbers = #tpu.dot_dimension_numbers<[1], [0], [0], [1], [0, 0, 1, 1], [], []>} : vector<8x128xf32>, vector<128x512xf32>, vector<8x512xf32> -> vector<8x512xf32>
    %409 = arith.addf %406, %408 : vector<8x512xf32>
    %410 = arith.addf %409, %0 : vector<8x512xf32>
    %411 = vector.extract_strided_slice %410 {offsets = [0, 0], sizes = [8, 128], strides = [1, 1]} : vector<8x512xf32> to vector<8x128xf32>
    %412 = arith.negf %411 : vector<8x128xf32>
    %413 = math.exp %412 : vector<8x128xf32>
    %cst_117 = arith.constant 1.000000e+00 : f32
    %414 = vector.broadcast %cst_117 : f32 to vector<8x128xf32>
    %415 = arith.addf %414, %413 : vector<8x128xf32>
    %416 = arith.divf %414, %415 : vector<8x128xf32>
    %417 = vector.extract_strided_slice %410 {offsets = [0, 128], sizes = [8, 128], strides = [1, 1]} : vector<8x512xf32> to vector<8x128xf32>
    %418 = arith.negf %417 : vector<8x128xf32>
    %419 = math.exp %418 : vector<8x128xf32>
    %cst_118 = arith.constant 1.000000e+00 : f32
    %420 = vector.broadcast %cst_118 : f32 to vector<8x128xf32>
    %421 = arith.addf %420, %419 : vector<8x128xf32>
    %422 = arith.divf %420, %421 : vector<8x128xf32>
    %423 = vector.extract_strided_slice %410 {offsets = [0, 256], sizes = [8, 128], strides = [1, 1]} : vector<8x512xf32> to vector<8x128xf32>
    %424 = math.tanh %423 : vector<8x128xf32>
    %425 = vector.extract_strided_slice %410 {offsets = [0, 384], sizes = [8, 128], strides = [1, 1]} : vector<8x512xf32> to vector<8x128xf32>
    %426 = arith.negf %425 : vector<8x128xf32>
    %427 = math.exp %426 : vector<8x128xf32>
    %cst_119 = arith.constant 1.000000e+00 : f32
    %428 = vector.broadcast %cst_119 : f32 to vector<8x128xf32>
    %429 = arith.addf %428, %427 : vector<8x128xf32>
    %430 = arith.divf %428, %429 : vector<8x128xf32>
    %431 = arith.mulf %422, %371 : vector<8x128xf32>
    %432 = arith.mulf %416, %424 : vector<8x128xf32>
    %433 = arith.addf %431, %432 : vector<8x128xf32>
    %434 = math.tanh %433 : vector<8x128xf32>
    %435 = arith.mulf %430, %434 : vector<8x128xf32>
    %c7_i32 = arith.constant 7 : i32
    %436 = arith.index_cast %c7_i32 : i32 to index
    %c0_120 = arith.constant 0 : index
    %c0_121 = arith.constant 0 : index
    %437 = vector.load %arg0[%436, %c0_120, %c0_121] : memref<8x8x512xf32, #tpu.memory_space<vmem>>, vector<1x8x512xf32>
    %438 = vector.shape_cast %437 : vector<1x8x512xf32> to vector<8x512xf32>
    %c0_122 = arith.constant 0 : index
    %c0_123 = arith.constant 0 : index
    %439 = vector.load %arg1[%c0_122, %c0_123] : memref<128x512xf32, #tpu.memory_space<vmem>>, vector<128x512xf32>
    %cst_124 = arith.constant dense<0.000000e+00> : vector<8x512xf32>
    %440 = tpu.matmul %404, %439, %cst_124 {dimension_numbers = #tpu.dot_dimension_numbers<[1], [0], [0], [1], [0, 0, 1, 1], [], []>} : vector<8x128xf32>, vector<128x512xf32>, vector<8x512xf32> -> vector<8x512xf32>
    %441 = arith.addf %438, %440 : vector<8x512xf32>
    %442 = vector.extract_strided_slice %441 {offsets = [0, 0], sizes = [8, 128], strides = [1, 1]} : vector<8x512xf32> to vector<8x128xf32>
    %443 = arith.negf %442 : vector<8x128xf32>
    %444 = math.exp %443 : vector<8x128xf32>
    %cst_125 = arith.constant 1.000000e+00 : f32
    %445 = vector.broadcast %cst_125 : f32 to vector<8x128xf32>
    %446 = arith.addf %445, %444 : vector<8x128xf32>
    %447 = arith.divf %445, %446 : vector<8x128xf32>
    %448 = vector.extract_strided_slice %441 {offsets = [0, 128], sizes = [8, 128], strides = [1, 1]} : vector<8x512xf32> to vector<8x128xf32>
    %449 = arith.negf %448 : vector<8x128xf32>
    %450 = math.exp %449 : vector<8x128xf32>
    %cst_126 = arith.constant 1.000000e+00 : f32
    %451 = vector.broadcast %cst_126 : f32 to vector<8x128xf32>
    %452 = arith.addf %451, %450 : vector<8x128xf32>
    %453 = arith.divf %451, %452 : vector<8x128xf32>
    %454 = vector.extract_strided_slice %441 {offsets = [0, 256], sizes = [8, 128], strides = [1, 1]} : vector<8x512xf32> to vector<8x128xf32>
    %455 = math.tanh %454 : vector<8x128xf32>
    %456 = vector.extract_strided_slice %441 {offsets = [0, 384], sizes = [8, 128], strides = [1, 1]} : vector<8x512xf32> to vector<8x128xf32>
    %457 = arith.negf %456 : vector<8x128xf32>
    %458 = math.exp %457 : vector<8x128xf32>
    %cst_127 = arith.constant 1.000000e+00 : f32
    %459 = vector.broadcast %cst_127 : f32 to vector<8x128xf32>
    %460 = arith.addf %459, %458 : vector<8x128xf32>
    %461 = arith.divf %459, %460 : vector<8x128xf32>
    %462 = arith.mulf %453, %402 : vector<8x128xf32>
    %463 = arith.mulf %447, %455 : vector<8x128xf32>
    %464 = arith.addf %462, %463 : vector<8x128xf32>
    %465 = math.tanh %464 : vector<8x128xf32>
    %466 = arith.mulf %461, %465 : vector<8x128xf32>
    %c0_128 = arith.constant 0 : index
    %c0_129 = arith.constant 0 : index
    %467 = vector.load %arg2[%c0_128, %c0_129] : memref<128x512xf32, #tpu.memory_space<vmem>>, vector<128x512xf32>
    %cst_130 = arith.constant dense<0.000000e+00> : vector<8x512xf32>
    %468 = tpu.matmul %466, %467, %cst_130 {dimension_numbers = #tpu.dot_dimension_numbers<[1], [0], [0], [1], [0, 0, 1, 1], [], []>} : vector<8x128xf32>, vector<128x512xf32>, vector<8x512xf32> -> vector<8x512xf32>
    %c0_131 = arith.constant 0 : index
    %c0_132 = arith.constant 0 : index
    %469 = vector.load %arg3[%c0_131, %c0_132] : memref<128x512xf32, #tpu.memory_space<vmem>>, vector<128x512xf32>
    %cst_133 = arith.constant dense<0.000000e+00> : vector<8x512xf32>
    %470 = tpu.matmul %435, %469, %cst_133 {dimension_numbers = #tpu.dot_dimension_numbers<[1], [0], [0], [1], [0, 0, 1, 1], [], []>} : vector<8x128xf32>, vector<128x512xf32>, vector<8x512xf32> -> vector<8x512xf32>
    %471 = arith.addf %468, %470 : vector<8x512xf32>
    %472 = arith.addf %471, %0 : vector<8x512xf32>
    %473 = vector.extract_strided_slice %472 {offsets = [0, 0], sizes = [8, 128], strides = [1, 1]} : vector<8x512xf32> to vector<8x128xf32>
    %474 = arith.negf %473 : vector<8x128xf32>
    %475 = math.exp %474 : vector<8x128xf32>
    %cst_134 = arith.constant 1.000000e+00 : f32
    %476 = vector.broadcast %cst_134 : f32 to vector<8x128xf32>
    %477 = arith.addf %476, %475 : vector<8x128xf32>
    %478 = arith.divf %476, %477 : vector<8x128xf32>
    %479 = vector.extract_strided_slice %472 {offsets = [0, 128], sizes = [8, 128], strides = [1, 1]} : vector<8x512xf32> to vector<8x128xf32>
    %480 = arith.negf %479 : vector<8x128xf32>
    %481 = math.exp %480 : vector<8x128xf32>
    %cst_135 = arith.constant 1.000000e+00 : f32
    %482 = vector.broadcast %cst_135 : f32 to vector<8x128xf32>
    %483 = arith.addf %482, %481 : vector<8x128xf32>
    %484 = arith.divf %482, %483 : vector<8x128xf32>
    %485 = vector.extract_strided_slice %472 {offsets = [0, 256], sizes = [8, 128], strides = [1, 1]} : vector<8x512xf32> to vector<8x128xf32>
    %486 = math.tanh %485 : vector<8x128xf32>
    %487 = vector.extract_strided_slice %472 {offsets = [0, 384], sizes = [8, 128], strides = [1, 1]} : vector<8x512xf32> to vector<8x128xf32>
    %488 = arith.negf %487 : vector<8x128xf32>
    %489 = math.exp %488 : vector<8x128xf32>
    %cst_136 = arith.constant 1.000000e+00 : f32
    %490 = vector.broadcast %cst_136 : f32 to vector<8x128xf32>
    %491 = arith.addf %490, %489 : vector<8x128xf32>
    %492 = arith.divf %490, %491 : vector<8x128xf32>
    %493 = arith.mulf %484, %433 : vector<8x128xf32>
    %494 = arith.mulf %478, %486 : vector<8x128xf32>
    %495 = arith.addf %493, %494 : vector<8x128xf32>
    %496 = math.tanh %495 : vector<8x128xf32>
    %497 = arith.mulf %492, %496 : vector<8x128xf32>
    %c8_i32 = arith.constant 8 : i32
    %c0_137 = arith.constant 0 : index
    %c0_138 = arith.constant 0 : index
    %498 = vector.load %arg5[%c0_137, %c0_138] : memref<128x128xf32, #tpu.memory_space<vmem>>, vector<128x128xf32>
    %cst_139 = arith.constant dense<0.000000e+00> : vector<8x128xf32>
    %499 = tpu.matmul %497, %498, %cst_139 {dimension_numbers = #tpu.dot_dimension_numbers<[1], [0], [0], [1], [0, 0, 1, 1], [], []>} : vector<8x128xf32>, vector<128x128xf32>, vector<8x128xf32> -> vector<8x128xf32>
    %c0_140 = arith.constant 0 : index
    %c0_141 = arith.constant 0 : index
    %500 = vector.load %arg6[%c0_140, %c0_141] : memref<8x128xf32, #tpu.memory_space<vmem>>, vector<8x128xf32>
    %501 = arith.addf %499, %500 : vector<8x128xf32>
    %c0_142 = arith.constant 0 : index
    %c0_143 = arith.constant 0 : index
    %502 = vector.load %arg7[%c0_142, %c0_143] : memref<8x128xf32, #tpu.memory_space<vmem>>, vector<8x128xf32>
    tpu.vector_store %arg7[%c0_142, %c0_143], %501 {strides = array<i32>} : memref<8x128xf32, #tpu.memory_space<vmem>>, vector<8x128xf32>,
    return
  }
}

</mosaic_0001>

<llo_original>
// kernel: stock_indicator_forward.1
$region0: #{stock_indicator_forward.1}
  #allocation0 [shape = 'u32[]', space=smem, size = 0x4, offset = 0x4, fixed_abs, tag = 'smem constant byte address 0x4 - core index']
  #allocation1 [shape = 'u32[72,128]{1,0:T(1,128)}', space=vmem, size = 0x9000, scoped, tag = 'internal scratch']
  %s0 = inlined_call_operand.vmem [shape: f32[8,8,512], index: 0, kind: input, shape index: {}]
  %s1 = inlined_call_operand.vmem [shape: f32[128,512], index: 1, kind: input, shape index: {}]
  %s2 = inlined_call_operand.hbm [shape: f32[128,512], index: 2, kind: input, shape index: {}]
  %s3 = inlined_call_operand.hbm [shape: f32[128,512], index: 3, kind: input, shape index: {}]
  %s4 = inlined_call_operand.vmem [shape: f32[8,512], index: 4, kind: input, shape index: {}]
  %s5 = inlined_call_operand.hbm [shape: f32[128,128], index: 5, kind: input, shape index: {}]
  %s6 = inlined_call_operand.vmem [shape: f32[8,128], index: 6, kind: input, shape index: {}]
  %s7 = inlined_call_operand.vmem [shape: f32[8,128], index: 7, kind: output, shape index: {}]
  %s8 = sld [smem:[#allocation0]]
  $region50: #{stock_indicator_forward.1} parent=0
    _
  %s10 = ssub.s32 1, %s8
  %s11 = scalar_select 0, %s10, %s8
  $region1: #{stock_indicator_forward.1} parent=0
    #allocation2 [shape = 'u8[262144]{0}', space=vmem, size = 0x40000, scoped, tag = 'input window, operand 2, single buffered']
    #allocation3 [shape = 's32[1]{0}', space=sflag, size = 0x4, scoped, tag = 'scoped memory for stock_indicator_forward.1']
    #allocation4 [shape = 'u8[262144]{0}', space=vmem, size = 0x40000, scoped, tag = 'input window, operand 3, single buffered']
    #allocation5 [shape = 's32[1]{0}', space=sflag, size = 0x4, scoped, tag = 'scoped memory for stock_indicator_forward.1']
    #allocation6 [shape = 'u8[65536]{0}', space=vmem, size = 0x10000, scoped, tag = 'input window, operand 5, single buffered']
    %12 = vsyncpa [#allocation3], 0
    %13 = vsyncpa [#allocation5], 0
    // Predicated region
    $region2: #{stock_indicator_forward.1} parent=1 // pred_check
      _
    $region3: #{stock_indicator_forward.1} parent=1 // pred_check_branch
      %15 = sbr.rel (0) target = $region5
    $region4: #{stock_indicator_forward.1} parent=1 // pred_region
      _
    $region5: #{stock_indicator_forward.1} parent=1 // pred_fallthru
      _
    // Predicated region
    $region6: #{stock_indicator_forward.1} parent=1 // pred_check
      _
    $region7: #{stock_indicator_forward.1} parent=1 // pred_check_branch
      %17 = sbr.rel (0) target = $region9
    $region8: #{stock_indicator_forward.1} parent=1 // pred_region
      _
    $region9: #{stock_indicator_forward.1} parent=1 // pred_fallthru
      _
    // Predicated region
    $region10: #{stock_indicator_forward.1} parent=1 // pred_check
      _
    $region11: #{stock_indicator_forward.1} parent=1 // pred_check_branch
      %19 = sbr.rel (0) target = $region13
    $region12: #{stock_indicator_forward.1} parent=1 // pred_region
      %21 = vsyncadd [#allocation3], 0
      %s22 = sshll.u32 %s2, 4
      %s23 = int_to_ptr.hbm [resolvable:$true] %s22
      %s24 = sshll.u32 [#allocation2], 4
      %s25 = int_to_ptr.vmem [resolvable:$true] %s24
      %30 = dma.hbm_to_vmem [thread:$0]  %s23, 8192, %s25, [#allocation3], 512, 512, 32
    $region13: #{stock_indicator_forward.1} parent=1 // pred_fallthru
      _
    // Predicated region
    $region14: #{stock_indicator_forward.1} parent=1 // pred_check
      _
    $region15: #{stock_indicator_forward.1} parent=1 // pred_check_branch
      %32 = sbr.rel (0) target = $region17
    $region16: #{stock_indicator_forward.1} parent=1 // pred_region
      %34 = vsyncadd [#allocation5], 0
      %s35 = sshll.u32 %s3, 4
      %s36 = int_to_ptr.hbm [resolvable:$true] %s35
      %s37 = sshll.u32 [#allocation4], 4
      %s38 = int_to_ptr.vmem [resolvable:$true] %s37
      %43 = dma.hbm_to_vmem [thread:$0]  %s36, 8192, %s38, [#allocation5], 512, 512, 32
    $region17: #{stock_indicator_forward.1} parent=1 // pred_fallthru
      _
    // Predicated region
    $region18: #{stock_indicator_forward.1} parent=1 // pred_check
      _
    $region19: #{stock_indicator_forward.1} parent=1 // pred_check_branch
      %45 = sbr.rel (0) target = $region21
    $region20: #{stock_indicator_forward.1} parent=1 // pred_region
      _
    $region21: #{stock_indicator_forward.1} parent=1 // pred_fallthru
      _
    // Predicated region
    $region22: #{stock_indicator_forward.1} parent=1 // pred_check
      _
    $region23: #{stock_indicator_forward.1} parent=1 // pred_check_branch
      %47 = sbr.rel (0) target = $region25
    $region24: #{stock_indicator_forward.1} parent=1 // pred_region
      %49 = vsyncadd [#allocation5], 0
      %s50 = sshll.u32 %s5, 4
      %s51 = int_to_ptr.hbm [resolvable:$true] %s50
      %s52 = sshll.u32 [#allocation6], 4
      %s53 = int_to_ptr.vmem [resolvable:$true] %s52
      %58 = dma.hbm_to_vmem [thread:$0]  %s51, 2048, %s53, [#allocation5], 128, 128, 8
    $region25: #{stock_indicator_forward.1} parent=1 // pred_fallthru
      _
    // Predicated region
    $region26: #{stock_indicator_forward.1} parent=1 // pred_check
      _
    $region27: #{stock_indicator_forward.1} parent=1 // pred_check_branch
      %60 = sbr.rel (0) target = $region29
    $region28: #{stock_indicator_forward.1} parent=1 // pred_region
      _
    $region29: #{stock_indicator_forward.1} parent=1 // pred_fallthru
      _
    // Predicated region
    $region30: #{stock_indicator_forward.1} parent=1 // pred_check
      _
    $region31: #{stock_indicator_forward.1} parent=1 // pred_check_branch
      %62 = sbr.rel (0) target = $region33
    $region32: #{stock_indicator_forward.1} parent=1 // pred_region
      %64 = dma.done [#allocation3], 8192
    $region33: #{stock_indicator_forward.1} parent=1 // pred_fallthru
      _
    // Predicated region
    $region34: #{stock_indicator_forward.1} parent=1 // pred_check
      _
    $region35: #{stock_indicator_forward.1} parent=1 // pred_check_branch
      %66 = sbr.rel (0) target = $region37
    $region36: #{stock_indicator_forward.1} parent=1 // pred_region
      %68 = dma.done [#allocation5], 8192
    $region37: #{stock_indicator_forward.1} parent=1 // pred_fallthru
      _
    // Predicated region
    $region38: #{stock_indicator_forward.1} parent=1 // pred_check
      _
    $region39: #{stock_indicator_forward.1} parent=1 // pred_check_branch
      %70 = sbr.rel (0) target = $region41
    $region40: #{stock_indicator_forward.1} parent=1 // pred_region
      %72 = dma.done [#allocation5], 2048
    $region41: #{stock_indicator_forward.1} parent=1 // pred_fallthru
      _
    %v73 = vld [vmem:[%s4] sm:$0xff]
    %v74 = vld [vmem:[%s4 + $0x8] sm:$0xff]
    %v75 = vld [vmem:[%s4 + $0x10] sm:$0xff]
    %v76 = vld [vmem:[%s4 + $0x18] sm:$0xff]
    %v77 = vld [vmem:[%s0] sm:$0xff]
    %v78 = vld [vmem:[%s0 + $0x8] sm:$0xff]
    %v79 = vld [vmem:[%s0 + $0x10] sm:$0xff]
    %v80 = vld [vmem:[%s0 + $0x18] sm:$0xff]
    %v81 = vld [vmem:[%s1] sm:$0xff]
    %v82 = vld [vmem:[%s1 + $0x8] sm:$0xff]
    %v83 = vld [vmem:[%s1 + $0x10] sm:$0xff]
    %v84 = vld [vmem:[%s1 + $0x18] sm:$0xff]
    %v85 = vld [vmem:[%s1 + $0x20] sm:$0xff]
    %v86 = vld [vmem:[%s1 + $0x28] sm:$0xff]
    %v87 = vld [vmem:[%s1 + $0x30] sm:$0xff]
    %v88 = vld [vmem:[%s1 + $0x38] sm:$0xff]
    %v89 = vld [vmem:[%s1 + $0x40] sm:$0xff]
    %v90 = vld [vmem:[%s1 + $0x48] sm:$0xff]
    %v91 = vld [vmem:[%s1 + $0x50] sm:$0xff]
    %v92 = vld [vmem:[%s1 + $0x58] sm:$0xff]
    %v93 = vld [vmem:[%s1 + $0x60] sm:$0xff]
    %v94 = vld [vmem:[%s1 + $0x68] sm:$0xff]
    %v95 = vld [vmem:[%s1 + $0x70] sm:$0xff]
    %v96 = vld [vmem:[%s1 + $0x78] sm:$0xff]
    %v97 = vld [vmem:[%s1 + $0x80] sm:$0xff]
    %v98 = vld [vmem:[%s1 + $0x88] sm:$0xff]
    %v99 = vld [vmem:[%s1 + $0x90] sm:$0xff]
    %v100 = vld [vmem:[%s1 + $0x98] sm:$0xff]
    %v101 = vld [vmem:[%s1 + $0xa0] sm:$0xff]
    %v102 = vld [vmem:[%s1 + $0xa8] sm:$0xff]
    %v103 = vld [vmem:[%s1 + $0xb0] sm:$0xff]
    %v104 = vld [vmem:[%s1 + $0xb8] sm:$0xff]
    %v105 = vld [vmem:[%s1 + $0xc0] sm:$0xff]
    %v106 = vld [vmem:[%s1 + $0xc8] sm:$0xff]
    %v107 = vld [vmem:[%s1 + $0xd0] sm:$0xff]
    %v108 = vld [vmem:[%s1 + $0xd8] sm:$0xff]
    %v109 = vld [vmem:[%s1 + $0xe0] sm:$0xff]
    %v110 = vld [vmem:[%s1 + $0xe8] sm:$0xff]
    %v111 = vld [vmem:[%s1 + $0xf0] sm:$0xff]
    %v112 = vld [vmem:[%s1 + $0xf8] sm:$0xff]
    %v113 = vld [vmem:[%s1 + $0x100] sm:$0xff]
    %v114 = vld [vmem:[%s1 + $0x108] sm:$0xff]
    %v115 = vld [vmem:[%s1 + $0x110] sm:$0xff]
    %v116 = vld [vmem:[%s1 + $0x118] sm:$0xff]
    %v117 = vld [vmem:[%s1 + $0x120] sm:$0xff]
    %v118 = vld [vmem:[%s1 + $0x128] sm:$0xff]
    %v119 = vld [vmem:[%s1 + $0x130] sm:$0xff]
    %v120 = vld [vmem:[%s1 + $0x138] sm:$0xff]
    %v121 = vld [vmem:[%s1 + $0x140] sm:$0xff]
    %v122 = vld [vmem:[%s1 + $0x148] sm:$0xff]
    %v123 = vld [vmem:[%s1 + $0x150] sm:$0xff]
    %v124 = vld [vmem:[%s1 + $0x158] sm:$0xff]
    %v125 = vld [vmem:[%s1 + $0x160] sm:$0xff]
    %v126 = vld [vmem:[%s1 + $0x168] sm:$0xff]
    %v127 = vld [vmem:[%s1 + $0x170] sm:$0xff]
    %v128 = vld [vmem:[%s1 + $0x178] sm:$0xff]
    %v129 = vld [vmem:[%s1 + $0x180] sm:$0xff]
    %v130 = vld [vmem:[%s1 + $0x188] sm:$0xff]
    %v131 = vld [vmem:[%s1 + $0x190] sm:$0xff]
    %v132 = vld [vmem:[%s1 + $0x198] sm:$0xff]
    %v133 = vld [vmem:[%s1 + $0x1a0] sm:$0xff]
    %v134 = vld [vmem:[%s1 + $0x1a8] sm:$0xff]
    %v135 = vld [vmem:[%s1 + $0x1b0] sm:$0xff]
    %v136 = vld [vmem:[%s1 + $0x1b8] sm:$0xff]
    %v137 = vld [vmem:[%s1 + $0x1c0] sm:$0xff]
    %v138 = vld [vmem:[%s1 + $0x1c8] sm:$0xff]
    %v139 = vld [vmem:[%s1 + $0x1d0] sm:$0xff]
    %v140 = vld [vmem:[%s1 + $0x1d8] sm:$0xff]
    %v141 = vld [vmem:[%s1 + $0x1e0] sm:$0xff]
    %v142 = vld [vmem:[%s1 + $0x1e8] sm:$0xff]
    %v143 = vld [vmem:[%s1 + $0x1f0] sm:$0xff]
    %v144 = vld [vmem:[%s1 + $0x1f8] sm:$0xff]
    %145 = vmatpush.msra.mxu0 %v141
    %146 = vmatpush.msra.mxu0 %v137
    %147 = vmatpush.msra.mxu0 %v133
    %148 = vmatpush.msra.mxu0 %v129
    %149 = vmatpush.msra.mxu0 %v125
    %150 = vmatpush.msra.mxu0 %v121
    %151 = vmatpush.msra.mxu0 %v117
    %152 = vmatpush.msra.mxu0 %v113
    %153 = vmatpush.msra.mxu0 %v109
    %154 = vmatpush.msra.mxu0 %v105
    %155 = vmatpush.msra.mxu0 %v101
    %156 = vmatpush.msra.mxu0 %v97
    %157 = vmatpush.msra.mxu0 %v93
    %158 = vmatpush.msra.mxu0 %v89
    %159 = vmatpush.msra.mxu0 %v85
    %160 = vmatpush.msra.mxu0 %v81
    %161 = vmatmul.f32.gmra.mxu0 0.0
    %v162 = vpop.f32.mrf.mxu0
    %v163 = vadd.f32 0.0, %v162
    %164 = vdwg.mxu0
    %165 = vmatpush.msra.mxu0 %v142
    %166 = vmatpush.msra.mxu0 %v138
    %167 = vmatpush.msra.mxu0 %v134
    %168 = vmatpush.msra.mxu0 %v130
    %169 = vmatpush.msra.mxu0 %v126
    %170 = vmatpush.msra.mxu0 %v122
    %171 = vmatpush.msra.mxu0 %v118
    %172 = vmatpush.msra.mxu0 %v114
    %173 = vmatpush.msra.mxu0 %v110
    %174 = vmatpush.msra.mxu0 %v106
    %175 = vmatpush.msra.mxu0 %v102
    %176 = vmatpush.msra.mxu0 %v98
    %177 = vmatpush.msra.mxu0 %v94
    %178 = vmatpush.msra.mxu0 %v90
    %179 = vmatpush.msra.mxu0 %v86
    %180 = vmatpush.msra.mxu0 %v82
    %181 = vmatmul.f32.gmra.mxu0 0.0
    %v182 = vpop.f32.mrf.mxu0
    %v183 = vadd.f32 0.0, %v182
    %184 = vdwg.mxu0
    %185 = vmatpush.msra.mxu0 %v143
    %186 = vmatpush.msra.mxu0 %v139
    %187 = vmatpush.msra.mxu0 %v135
    %188 = vmatpush.msra.mxu0 %v131
    %189 = vmatpush.msra.mxu0 %v127
    %190 = vmatpush.msra.mxu0 %v123
    %191 = vmatpush.msra.mxu0 %v119
    %192 = vmatpush.msra.mxu0 %v115
    %193 = vmatpush.msra.mxu0 %v111
    %194 = vmatpush.msra.mxu0 %v107
    %195 = vmatpush.msra.mxu0 %v103
    %196 = vmatpush.msra.mxu0 %v99
    %197 = vmatpush.msra.mxu0 %v95
    %198 = vmatpush.msra.mxu0 %v91
    %199 = vmatpush.msra.mxu0 %v87
    %200 = vmatpush.msra.mxu0 %v83
    %201 = vmatmul.f32.gmra.mxu0 0.0
    %v202 = vpop.f32.mrf.mxu0
    %v203 = vadd.f32 0.0, %v202
    %204 = vdwg.mxu0
    %205 = vmatpush.msra.mxu0 %v144
    %206 = vmatpush.msra.mxu0 %v140
    %207 = vmatpush.msra.mxu0 %v136
    %208 = vmatpush.msra.mxu0 %v132
    %209 = vmatpush.msra.mxu0 %v128
    %210 = vmatpush.msra.mxu0 %v124
    %211 = vmatpush.msra.mxu0 %v120
    %212 = vmatpush.msra.mxu0 %v116
    %213 = vmatpush.msra.mxu0 %v112
    %214 = vmatpush.msra.mxu0 %v108
    %215 = vmatpush.msra.mxu0 %v104
    %216 = vmatpush.msra.mxu0 %v100
    %217 = vmatpush.msra.mxu0 %v96
    %218 = vmatpush.msra.mxu0 %v92
    %219 = vmatpush.msra.mxu0 %v88
    %220 = vmatpush.msra.mxu0 %v84
    %221 = vmatmul.f32.gmra.mxu0 0.0
    %v222 = vpop.f32.mrf.mxu0
    %v223 = vadd.f32 0.0, %v222
    %224 = vdwg.mxu0
    %v225 = vadd.f32 %v77, %v163
    %v226 = vadd.f32 %v78, %v183
    %v227 = vadd.f32 %v79, %v203
    %v228 = vadd.f32 %v80, %v223
    %v229 = vxor.u32 %v225, 2147483648
    %v230 = vmul.f32 %v229, 1.442695
    %v231 = vpow.pop %v230
    %v232 = vadd.f32 %v231, 1.0
    %v233 = vrcp.pop %v232
    %v234 = vmul.f32 %v232, %v233
    %v235 = vsub.f32 1.0, %v234
    %v236 = vmul.f32 %v233, %v235
    %v237 = vadd.f32 %v233, %v236
    %vm238 = vweird.f32 %v232
    %vm239 = vweird.f32 %v233
    %vm240 = vmor %vm238, %vm239
    %v241 = vsel %vm240, %v233, %v237
    %v242 = vand.u32 2147483647, %v232
    %vm243 = vcmp.eq.f32.partialorder %v242, 8.507059e+37
    %v244 = vand.u32 %v232, 2147483648
    %v245 = vor.u32 1.1754944e-38, %v244
    %v246 = vsel %vm243, %v245, %v241
    %v247 = vmul.f32 1.0, %v246
    %v248 = vxor.u32 %v226, 2147483648
    %v249 = vmul.f32 %v248, 1.442695
    %v250 = vpow.pop %v249
    %v251 = vadd.f32 %v250, 1.0
    %v252 = vrcp.pop %v251
    %v253 = vmul.f32 %v251, %v252
    %v254 = vsub.f32 1.0, %v253
    %v255 = vmul.f32 %v252, %v254
    %v256 = vadd.f32 %v252, %v255
    %vm257 = vweird.f32 %v251
    %vm258 = vweird.f32 %v252
    %vm259 = vmor %vm257, %vm258
    %v260 = vsel %vm259, %v252, %v256
    %v261 = vand.u32 2147483647, %v251
    %vm262 = vcmp.eq.f32.partialorder %v261, 8.507059e+37
    %v263 = vand.u32 %v251, 2147483648
    %v264 = vor.u32 1.1754944e-38, %v263
    %v265 = vsel %vm262, %v264, %v260
    %v266 = vmul.f32 1.0, %v265
    %v267 = vtanh.pop %v227
    %v268 = vxor.u32 %v228, 2147483648
    %v269 = vmul.f32 %v268, 1.442695
    %v270 = vpow.pop %v269
    %v271 = vadd.f32 %v270, 1.0
    %v272 = vrcp.pop %v271
    %v273 = vmul.f32 %v271, %v272
    %v274 = vsub.f32 1.0, %v273
    %v275 = vmul.f32 %v272, %v274
    %v276 = vadd.f32 %v272, %v275
    %vm277 = vweird.f32 %v271
    %vm278 = vweird.f32 %v272
    %vm279 = vmor %vm277, %vm278
    %v280 = vsel %vm279, %v272, %v276
    %v281 = vand.u32 2147483647, %v271
    %vm282 = vcmp.eq.f32.partialorder %v281, 8.507059e+37
    %v283 = vand.u32 %v271, 2147483648
    %v284 = vor.u32 1.1754944e-38, %v283
    %v285 = vsel %vm282, %v284, %v280
    %v286 = vmul.f32 1.0, %v285
    %v287 = vmul.f32 %v266, 0.0
    %v288 = vmul.f32 %v247, %v267
    %v289 = vadd.f32 %v287, %v288
    %v290 = vtanh.pop %v289
    %v291 = vmul.f32 %v286, %v290
    %v292 = vld [vmem:[#allocation2] sm:$0xff]
    %v293 = vld [vmem:[#allocation2 + $0x8] sm:$0xff]
    %v294 = vld [vmem:[#allocation2 + $0x10] sm:$0xff]
    %v295 = vld [vmem:[#allocation2 + $0x18] sm:$0xff]
    %v296 = vld [vmem:[#allocation2 + $0x20] sm:$0xff]
    %v297 = vld [vmem:[#allocation2 + $0x28] sm:$0xff]
    %v298 = vld [vmem:[#allocation2 + $0x30] sm:$0xff]
    %v299 = vld [vmem:[#allocation2 + $0x38] sm:$0xff]
    %v300 = vld [vmem:[#allocation2 + $0x40] sm:$0xff]
    %v301 = vld [vmem:[#allocation2 + $0x48] sm:$0xff]
    %v302 = vld [vmem:[#allocation2 + $0x50] sm:$0xff]
    %v303 = vld [vmem:[#allocation2 + $0x58] sm:$0xff]
    %v304 = vld [vmem:[#allocation2 + $0x60] sm:$0xff]
    %v305 = vld [vmem:[#allocation2 + $0x68] sm:$0xff]
    %v306 = vld [vmem:[#allocation2 + $0x70] sm:$0xff]
    %v307 = vld [vmem:[#allocation2 + $0x78] sm:$0xff]
    %v308 = vld [vmem:[#allocation2 + $0x80] sm:$0xff]
    %v309 = vld [vmem:[#allocation2 + $0x88] sm:$0xff]
    %v310 = vld [vmem:[#allocation2 + $0x90] sm:$0xff]
    %v311 = vld [vmem:[#allocation2 + $0x98] sm:$0xff]
    %v312 = vld [vmem:[#allocation2 + $0xa0] sm:$0xff]
    %v313 = vld [vmem:[#allocation2 + $0xa8] sm:$0xff]
    %v314 = vld [vmem:[#allocation2 + $0xb0] sm:$0xff]
    %v315 = vld [vmem:[#allocation2 + $0xb8] sm:$0xff]
    %v316 = vld [vmem:[#allocation2 + $0xc0] sm:$0xff]
    %v317 = vld [vmem:[#allocation2 + $0xc8] sm:$0xff]
    %v318 = vld [vmem:[#allocation2 + $0xd0] sm:$0xff]
    %v319 = vld [vmem:[#allocation2 + $0xd8] sm:$0xff]
    %v320 = vld [vmem:[#allocation2 + $0xe0] sm:$0xff]
    %v321 = vld [vmem:[#allocation2 + $0xe8] sm:$0xff]
    %v322 = vld [vmem:[#allocation2 + $0xf0] sm:$0xff]
    %v323 = vld [vmem:[#allocation2 + $0xf8] sm:$0xff]
    %v324 = vld [vmem:[#allocation2 + $0x100] sm:$0xff]
    %v325 = vld [vmem:[#allocation2 + $0x108] sm:$0xff]
    %v326 = vld [vmem:[#allocation2 + $0x110] sm:$0xff]
    %v327 = vld [vmem:[#allocation2 + $0x118] sm:$0xff]
    %v328 = vld [vmem:[#allocation2 + $0x120] sm:$0xff]
    %v329 = vld [vmem:[#allocation2 + $0x128] sm:$0xff]
    %v330 = vld [vmem:[#allocation2 + $0x130] sm:$0xff]
    %v331 = vld [vmem:[#allocation2 + $0x138] sm:$0xff]
    %v332 = vld [vmem:[#allocation2 + $0x140] sm:$0xff]
    %v333 = vld [vmem:[#allocation2 + $0x148] sm:$0xff]
    %v334 = vld [vmem:[#allocation2 + $0x150] sm:$0xff]
    %v335 = vld [vmem:[#allocation2 + $0x158] sm:$0xff]
    %v336 = vld [vmem:[#allocation2 + $0x160] sm:$0xff]
    %v337 = vld [vmem:[#allocation2 + $0x168] sm:$0xff]
    %v338 = vld [vmem:[#allocation2 + $0x170] sm:$0xff]
    %v339 = vld [vmem:[#allocation2 + $0x178] sm:$0xff]
    %v340 = vld [vmem:[#allocation2 + $0x180] sm:$0xff]
    %v341 = vld [vmem:[#allocation2 + $0x188] sm:$0xff]
    %v342 = vld [vmem:[#allocation2 + $0x190] sm:$0xff]
    %v343 = vld [vmem:[#allocation2 + $0x198] sm:$0xff]
    %v344 = vld [vmem:[#allocation2 + $0x1a0] sm:$0xff]
    %v345 = vld [vmem:[#allocation2 + $0x1a8] sm:$0xff]
    %v346 = vld [vmem:[#allocation2 + $0x1b0] sm:$0xff]
    %v347 = vld [vmem:[#allocation2 + $0x1b8] sm:$0xff]
    %v348 = vld [vmem:[#allocation2 + $0x1c0] sm:$0xff]
    %v349 = vld [vmem:[#allocation2 + $0x1c8] sm:$0xff]
    %v350 = vld [vmem:[#allocation2 + $0x1d0] sm:$0xff]
    %v351 = vld [vmem:[#allocation2 + $0x1d8] sm:$0xff]
    %v352 = vld [vmem:[#allocation2 + $0x1e0] sm:$0xff]
    %v353 = vld [vmem:[#allocation2 + $0x1e8] sm:$0xff]
    %v354 = vld [vmem:[#allocation2 + $0x1f0] sm:$0xff]
    %v355 = vld [vmem:[#allocation2 + $0x1f8] sm:$0xff]
    %v356 = vld [vmem:[#allocation4] sm:$0xff]
    %v357 = vld [vmem:[#allocation4 + $0x8] sm:$0xff]
    %v358 = vld [vmem:[#allocation4 + $0x10] sm:$0xff]
    %v359 = vld [vmem:[#allocation4 + $0x18] sm:$0xff]
    %v360 = vld [vmem:[#allocation4 + $0x20] sm:$0xff]
    %v361 = vld [vmem:[#allocation4 + $0x28] sm:$0xff]
    %v362 = vld [vmem:[#allocation4 + $0x30] sm:$0xff]
    %v363 = vld [vmem:[#allocation4 + $0x38] sm:$0xff]
    %v364 = vld [vmem:[#allocation4 + $0x40] sm:$0xff]
    %v365 = vld [vmem:[#allocation4 + $0x48] sm:$0xff]
    %v366 = vld [vmem:[#allocation4 + $0x50] sm:$0xff]
    %v367 = vld [vmem:[#allocation4 + $0x58] sm:$0xff]
    %v368 = vld [vmem:[#allocation4 + $0x60] sm:$0xff]
    %v369 = vld [vmem:[#allocation4 + $0x68] sm:$0xff]
    %v370 = vld [vmem:[#allocation4 + $0x70] sm:$0xff]
    %v371 = vld [vmem:[#allocation4 + $0x78] sm:$0xff]
    %v372 = vld [vmem:[#allocation4 + $0x80] sm:$0xff]
    %v373 = vld [vmem:[#allocation4 + $0x88] sm:$0xff]
    %v374 = vld [vmem:[#allocation4 + $0x90] sm:$0xff]
    %v375 = vld [vmem:[#allocation4 + $0x98] sm:$0xff]
    %v376 = vld [vmem:[#allocation4 + $0xa0] sm:$0xff]
    %v377 = vld [vmem:[#allocation4 + $0xa8] sm:$0xff]
    %v378 = vld [vmem:[#allocation4 + $0xb0] sm:$0xff]
    %v379 = vld [vmem:[#allocation4 + $0xb8] sm:$0xff]
    %v380 = vld [vmem:[#allocation4 + $0xc0] sm:$0xff]
    %v381 = vld [vmem:[#allocation4 + $0xc8] sm:$0xff]
    %v382 = vld [vmem:[#allocation4 + $0xd0] sm:$0xff]
    %v383 = vld [vmem:[#allocation4 + $0xd8] sm:$0xff]
    %v384 = vld [vmem:[#allocation4 + $0xe0] sm:$0xff]
    %v385 = vld [vmem:[#allocation4 + $0xe8] sm:$0xff]
    %v386 = vld [vmem:[#allocation4 + $0xf0] sm:$0xff]
    %v387 = vld [vmem:[#allocation4 + $0xf8] sm:$0xff]
    %v388 = vld [vmem:[#allocation4 + $0x100] sm:$0xff]
    %v389 = vld [vmem:[#allocation4 + $0x108] sm:$0xff]
    %v390 = vld [vmem:[#allocation4 + $0x110] sm:$0xff]
    %v391 = vld [vmem:[#allocation4 + $0x118] sm:$0xff]
    %v392 = vld [vmem:[#allocation4 + $0x120] sm:$0xff]
    %v393 = vld [vmem:[#allocation4 + $0x128] sm:$0xff]
    %v394 = vld [vmem:[#allocation4 + $0x130] sm:$0xff]
    %v395 = vld [vmem:[#allocation4 + $0x138] sm:$0xff]
    %v396 = vld [vmem:[#allocation4 + $0x140] sm:$0xff]
    %v397 = vld [vmem:[#allocation4 + $0x148] sm:$0xff]
    %v398 = vld [vmem:[#allocation4 + $0x150] sm:$0xff]
    %v399 = vld [vmem:[#allocation4 + $0x158] sm:$0xff]
    %v400 = vld [vmem:[#allocation4 + $0x160] sm:$0xff]
    %v401 = vld [vmem:[#allocation4 + $0x168] sm:$0xff]
    %v402 = vld [vmem:[#allocation4 + $0x170] sm:$0xff]
    %v403 = vld [vmem:[#allocation4 + $0x178] sm:$0xff]
    %v404 = vld [vmem:[#allocation4 + $0x180] sm:$0xff]
    %v405 = vld [vmem:[#allocation4 + $0x188] sm:$0xff]
    %v406 = vld [vmem:[#allocation4 + $0x190] sm:$0xff]
    %v407 = vld [vmem:[#allocation4 + $0x198] sm:$0xff]
    %v408 = vld [vmem:[#allocation4 + $0x1a0] sm:$0xff]
    %v409 = vld [vmem:[#allocation4 + $0x1a8] sm:$0xff]
    %v410 = vld [vmem:[#allocation4 + $0x1b0] sm:$0xff]
    %v411 = vld [vmem:[#allocation4 + $0x1b8] sm:$0xff]
    %v412 = vld [vmem:[#allocation4 + $0x1c0] sm:$0xff]
    %v413 = vld [vmem:[#allocation4 + $0x1c8] sm:$0xff]
    %v414 = vld [vmem:[#allocation4 + $0x1d0] sm:$0xff]
    %v415 = vld [vmem:[#allocation4 + $0x1d8] sm:$0xff]
    %v416 = vld [vmem:[#allocation4 + $0x1e0] sm:$0xff]
    %v417 = vld [vmem:[#allocation4 + $0x1e8] sm:$0xff]
    %v418 = vld [vmem:[#allocation4 + $0x1f0] sm:$0xff]
    %v419 = vld [vmem:[#allocation4 + $0x1f8] sm:$0xff]
    %420 = vmatpush.msra.mxu0 %v416
    %421 = vmatpush.msra.mxu0 %v412
    %422 = vmatpush.msra.mxu0 %v408
    %423 = vmatpush.msra.mxu0 %v404
    %424 = vmatpush.msra.mxu0 %v400
    %425 = vmatpush.msra.mxu0 %v396
    %426 = vmatpush.msra.mxu0 %v392
    %427 = vmatpush.msra.mxu0 %v388
    %428 = vmatpush.msra.mxu0 %v384
    %429 = vmatpush.msra.mxu0 %v380
    %430 = vmatpush.msra.mxu0 %v376
    %431 = vmatpush.msra.mxu0 %v372
    %432 = vmatpush.msra.mxu0 %v368
    %433 = vmatpush.msra.mxu0 %v364
    %434 = vmatpush.msra.mxu0 %v360
    %435 = vmatpush.msra.mxu0 %v356
    %436 = vmatmul.f32.gmra.mxu0 0.0
    %v437 = vpop.f32.mrf.mxu0
    %v438 = vadd.f32 0.0, %v437
    %439 = vdwg.mxu0
    %440 = vmatpush.msra.mxu0 %v417
    %441 = vmatpush.msra.mxu0 %v413
    %442 = vmatpush.msra.mxu0 %v409
    %443 = vmatpush.msra.mxu0 %v405
    %444 = vmatpush.msra.mxu0 %v401
    %445 = vmatpush.msra.mxu0 %v397
    %446 = vmatpush.msra.mxu0 %v393
    %447 = vmatpush.msra.mxu0 %v389
    %448 = vmatpush.msra.mxu0 %v385
    %449 = vmatpush.msra.mxu0 %v381
    %450 = vmatpush.msra.mxu0 %v377
    %451 = vmatpush.msra.mxu0 %v373
    %452 = vmatpush.msra.mxu0 %v369
    %453 = vmatpush.msra.mxu0 %v365
    %454 = vmatpush.msra.mxu0 %v361
    %455 = vmatpush.msra.mxu0 %v357
    %456 = vmatmul.f32.gmra.mxu0 0.0
    %v457 = vpop.f32.mrf.mxu0
    %v458 = vadd.f32 0.0, %v457
    %459 = vdwg.mxu0
    %460 = vmatpush.msra.mxu0 %v418
    %461 = vmatpush.msra.mxu0 %v414
    %462 = vmatpush.msra.mxu0 %v410
    %463 = vmatpush.msra.mxu0 %v406
    %464 = vmatpush.msra.mxu0 %v402
    %465 = vmatpush.msra.mxu0 %v398
    %466 = vmatpush.msra.mxu0 %v394
    %467 = vmatpush.msra.mxu0 %v390
    %468 = vmatpush.msra.mxu0 %v386
    %469 = vmatpush.msra.mxu0 %v382
    %470 = vmatpush.msra.mxu0 %v378
    %471 = vmatpush.msra.mxu0 %v374
    %472 = vmatpush.msra.mxu0 %v370
    %473 = vmatpush.msra.mxu0 %v366
    %474 = vmatpush.msra.mxu0 %v362
    %475 = vmatpush.msra.mxu0 %v358
    %476 = vmatmul.f32.gmra.mxu0 0.0
    %v477 = vpop.f32.mrf.mxu0
    %v478 = vadd.f32 0.0, %v477
    %479 = vdwg.mxu0
    %480 = vmatpush.msra.mxu0 %v419
    %481 = vmatpush.msra.mxu0 %v415
    %482 = vmatpush.msra.mxu0 %v411
    %483 = vmatpush.msra.mxu0 %v407
    %484 = vmatpush.msra.mxu0 %v403
    %485 = vmatpush.msra.mxu0 %v399
    %486 = vmatpush.msra.mxu0 %v395
    %487 = vmatpush.msra.mxu0 %v391
    %488 = vmatpush.msra.mxu0 %v387
    %489 = vmatpush.msra.mxu0 %v383
    %490 = vmatpush.msra.mxu0 %v379
    %491 = vmatpush.msra.mxu0 %v375
    %492 = vmatpush.msra.mxu0 %v371
    %493 = vmatpush.msra.mxu0 %v367
    %494 = vmatpush.msra.mxu0 %v363
    %495 = vmatpush.msra.mxu0 %v359
    %496 = vmatmul.f32.gmra.mxu0 0.0
    %v497 = vpop.f32.mrf.mxu0
    %v498 = vadd.f32 0.0, %v497
    %499 = vdwg.mxu0
    %500 = vmatpush.msra.mxu0 %v352
    %501 = vmatpush.msra.mxu0 %v348
    %502 = vmatpush.msra.mxu0 %v344
    %503 = vmatpush.msra.mxu0 %v340
    %504 = vmatpush.msra.mxu0 %v336
    %505 = vmatpush.msra.mxu0 %v332
    %506 = vmatpush.msra.mxu0 %v328
    %507 = vmatpush.msra.mxu0 %v324
    %508 = vmatpush.msra.mxu0 %v320
    %509 = vmatpush.msra.mxu0 %v316
    %510 = vmatpush.msra.mxu0 %v312
    %511 = vmatpush.msra.mxu0 %v308
    %512 = vmatpush.msra.mxu0 %v304
    %513 = vmatpush.msra.mxu0 %v300
    %514 = vmatpush.msra.mxu0 %v296
    %515 = vmatpush.msra.mxu0 %v292
    %516 = vmatmul.f32.gmra.mxu0 %v291
    %v517 = vpop.f32.mrf.mxu0
    %v518 = vadd.f32 %v438, %v517
    %519 = vdwg.mxu0
    %520 = vmatpush.msra.mxu0 %v353
    %521 = vmatpush.msra.mxu0 %v349
    %522 = vmatpush.msra.mxu0 %v345
    %523 = vmatpush.msra.mxu0 %v341
    %524 = vmatpush.msra.mxu0 %v337
    %525 = vmatpush.msra.mxu0 %v333
    %526 = vmatpush.msra.mxu0 %v329
    %527 = vmatpush.msra.mxu0 %v325
    %528 = vmatpush.msra.mxu0 %v321
    %529 = vmatpush.msra.mxu0 %v317
    %530 = vmatpush.msra.mxu0 %v313
    %531 = vmatpush.msra.mxu0 %v309
    %532 = vmatpush.msra.mxu0 %v305
    %533 = vmatpush.msra.mxu0 %v301
    %534 = vmatpush.msra.mxu0 %v297
    %535 = vmatpush.msra.mxu0 %v293
    %536 = vmatmul.f32.gmra.mxu0 %v291
    %v537 = vpop.f32.mrf.mxu0
    %v538 = vadd.f32 %v458, %v537
    %539 = vdwg.mxu0
    %540 = vmatpush.msra.mxu0 %v354
    %541 = vmatpush.msra.mxu0 %v350
    %542 = vmatpush.msra.mxu0 %v346
    %543 = vmatpush.msra.mxu0 %v342
    %544 = vmatpush.msra.mxu0 %v338
    %545 = vmatpush.msra.mxu0 %v334
    %546 = vmatpush.msra.mxu0 %v330
    %547 = vmatpush.msra.mxu0 %v326
    %548 = vmatpush.msra.mxu0 %v322
    %549 = vmatpush.msra.mxu0 %v318
    %550 = vmatpush.msra.mxu0 %v314
    %551 = vmatpush.msra.mxu0 %v310
    %552 = vmatpush.msra.mxu0 %v306
    %553 = vmatpush.msra.mxu0 %v302
    %554 = vmatpush.msra.mxu0 %v298
    %555 = vmatpush.msra.mxu0 %v294
    %556 = vmatmul.f32.gmra.mxu0 %v291
    %v557 = vpop.f32.mrf.mxu0
    %v558 = vadd.f32 %v478, %v557
    %559 = vdwg.mxu0
    %560 = vmatpush.msra.mxu0 %v355
    %561 = vmatpush.msra.mxu0 %v351
    %562 = vmatpush.msra.mxu0 %v347
    %563 = vmatpush.msra.mxu0 %v343
    %564 = vmatpush.msra.mxu0 %v339
    %565 = vmatpush.msra.mxu0 %v335
    %566 = vmatpush.msra.mxu0 %v331
    %567 = vmatpush.msra.mxu0 %v327
    %568 = vmatpush.msra.mxu0 %v323
    %569 = vmatpush.msra.mxu0 %v319
    %570 = vmatpush.msra.mxu0 %v315
    %571 = vmatpush.msra.mxu0 %v311
    %572 = vmatpush.msra.mxu0 %v307
    %573 = vmatpush.msra.mxu0 %v303
    %574 = vmatpush.msra.mxu0 %v299
    %575 = vmatpush.msra.mxu0 %v295
    %576 = vmatmul.f32.gmra.mxu0 %v291
    %v577 = vpop.f32.mrf.mxu0
    %v578 = vadd.f32 %v498, %v577
    %579 = vdwg.mxu0
    %v580 = vadd.f32 %v518, %v73
    %v581 = vadd.f32 %v538, %v74
    %v582 = vadd.f32 %v558, %v75
    %v583 = vadd.f32 %v578, %v76
    %v584 = vxor.u32 %v580, 2147483648
    %v585 = vmul.f32 %v584, 1.442695
    %v586 = vpow.pop %v585
    %v587 = vadd.f32 %v586, 1.0
    %v588 = vrcp.pop %v587
    %v589 = vmul.f32 %v587, %v588
    %v590 = vsub.f32 1.0, %v589
    %v591 = vmul.f32 %v588, %v590
    %v592 = vadd.f32 %v588, %v591
    %vm593 = vweird.f32 %v587
    %vm594 = vweird.f32 %v588
    %vm595 = vmor %vm593, %vm594
    %v596 = vsel %vm595, %v588, %v592
    %v597 = vand.u32 2147483647, %v587
    %vm598 = vcmp.eq.f32.partialorder %v597, 8.507059e+37
    %v599 = vand.u32 %v587, 2147483648
    %v600 = vor.u32 1.1754944e-38, %v599
    %v601 = vsel %vm598, %v600, %v596
    %v602 = vmul.f32 1.0, %v601
    %v603 = vxor.u32 %v581, 2147483648
    %v604 = vmul.f32 %v603, 1.442695
    %v605 = vpow.pop %v604
    %v606 = vadd.f32 %v605, 1.0
    %v607 = vrcp.pop %v606
    %v608 = vmul.f32 %v606, %v607
    %v609 = vsub.f32 1.0, %v608
    %v610 = vmul.f32 %v607, %v609
    %v611 = vadd.f32 %v607, %v610
    %vm612 = vweird.f32 %v606
    %vm613 = vweird.f32 %v607
    %vm614 = vmor %vm612, %vm613
    %v615 = vsel %vm614, %v607, %v611
    %v616 = vand.u32 2147483647, %v606
    %vm617 = vcmp.eq.f32.partialorder %v616, 8.507059e+37
    %v618 = vand.u32 %v606, 2147483648
    %v619 = vor.u32 1.1754944e-38, %v618
    %v620 = vsel %vm617, %v619, %v615
    %v621 = vmul.f32 1.0, %v620
    %v622 = vtanh.pop %v582
    %v623 = vxor.u32 %v583, 2147483648
    %v624 = vmul.f32 %v623, 1.442695
    %v625 = vpow.pop %v624
    %v626 = vadd.f32 %v625, 1.0
    %v627 = vrcp.pop %v626
    %v628 = vmul.f32 %v626, %v627
    %v629 = vsub.f32 1.0, %v628
    %v630 = vmul.f32 %v627, %v629
    %v631 = vadd.f32 %v627, %v630
    %vm632 = vweird.f32 %v626
    %vm633 = vweird.f32 %v627
    %vm634 = vmor %vm632, %vm633
    %v635 = vsel %vm634, %v627, %v631
    %v636 = vand.u32 2147483647, %v626
    %vm637 = vcmp.eq.f32.partialorder %v636, 8.507059e+37
    %v638 = vand.u32 %v626, 2147483648
    %v639 = vor.u32 1.1754944e-38, %v638
    %v640 = vsel %vm637, %v639, %v635
    %v641 = vmul.f32 1.0, %v640
    %v642 = vmul.f32 %v621, 0.0
    %v643 = vmul.f32 %v602, %v622
    %v644 = vadd.f32 %v642, %v643
    %v645 = vtanh.pop %v644
    %v646 = vmul.f32 %v641, %v645
    %s647 = scalar_lea.vmem %s0, 32
    %v648 = vld [vmem:[%s647] sm:$0xff]
    %v649 = vld [vmem:[%s647 + $0x8] sm:$0xff]
    %v650 = vld [vmem:[%s647 + $0x10] sm:$0xff]
    %v651 = vld [vmem:[%s647 + $0x18] sm:$0xff]
    %652 = vmatpush.msra.mxu0 %v141
    %653 = vmatpush.msra.mxu0 %v137
    %654 = vmatpush.msra.mxu0 %v133
    %655 = vmatpush.msra.mxu0 %v129
    %656 = vmatpush.msra.mxu0 %v125
    %657 = vmatpush.msra.mxu0 %v121
    %658 = vmatpush.msra.mxu0 %v117
    %659 = vmatpush.msra.mxu0 %v113
    %660 = vmatpush.msra.mxu0 %v109
    %661 = vmatpush.msra.mxu0 %v105
    %662 = vmatpush.msra.mxu0 %v101
    %663 = vmatpush.msra.mxu0 %v97
    %664 = vmatpush.msra.mxu0 %v93
    %665 = vmatpush.msra.mxu0 %v89
    %666 = vmatpush.msra.mxu0 %v85
    %667 = vmatpush.msra.mxu0 %v81
    %668 = vmatmul.f32.gmra.mxu0 %v291
    %v669 = vpop.f32.mrf.mxu0
    %v670 = vadd.f32 0.0, %v669
    %671 = vdwg.mxu0
    %672 = vmatpush.msra.mxu0 %v142
    %673 = vmatpush.msra.mxu0 %v138
    %674 = vmatpush.msra.mxu0 %v134
    %675 = vmatpush.msra.mxu0 %v130
    %676 = vmatpush.msra.mxu0 %v126
    %677 = vmatpush.msra.mxu0 %v122
    %678 = vmatpush.msra.mxu0 %v118
    %679 = vmatpush.msra.mxu0 %v114
    %680 = vmatpush.msra.mxu0 %v110
    %681 = vmatpush.msra.mxu0 %v106
    %682 = vmatpush.msra.mxu0 %v102
    %683 = vmatpush.msra.mxu0 %v98
    %684 = vmatpush.msra.mxu0 %v94
    %685 = vmatpush.msra.mxu0 %v90
    %686 = vmatpush.msra.mxu0 %v86
    %687 = vmatpush.msra.mxu0 %v82
    %688 = vmatmul.f32.gmra.mxu0 %v291
    %v689 = vpop.f32.mrf.mxu0
    %v690 = vadd.f32 0.0, %v689
    %691 = vdwg.mxu0
    %692 = vmatpush.msra.mxu0 %v143
    %693 = vmatpush.msra.mxu0 %v139
    %694 = vmatpush.msra.mxu0 %v135
    %695 = vmatpush.msra.mxu0 %v131
    %696 = vmatpush.msra.mxu0 %v127
    %697 = vmatpush.msra.mxu0 %v123
    %698 = vmatpush.msra.mxu0 %v119
    %699 = vmatpush.msra.mxu0 %v115
    %700 = vmatpush.msra.mxu0 %v111
    %701 = vmatpush.msra.mxu0 %v107
    %702 = vmatpush.msra.mxu0 %v103
    %703 = vmatpush.msra.mxu0 %v99
    %704 = vmatpush.msra.mxu0 %v95
    %705 = vmatpush.msra.mxu0 %v91
    %706 = vmatpush.msra.mxu0 %v87
    %707 = vmatpush.msra.mxu0 %v83
    %708 = vmatmul.f32.gmra.mxu0 %v291
    %v709 = vpop.f32.mrf.mxu0
    %v710 = vadd.f32 0.0, %v709
    %711 = vdwg.mxu0
    %712 = vmatpush.msra.mxu0 %v144
    %713 = vmatpush.msra.mxu0 %v140
    %714 = vmatpush.msra.mxu0 %v136
    %715 = vmatpush.msra.mxu0 %v132
    %716 = vmatpush.msra.mxu0 %v128
    %717 = vmatpush.msra.mxu0 %v124
    %718 = vmatpush.msra.mxu0 %v120
    %719 = vmatpush.msra.mxu0 %v116
    %720 = vmatpush.msra.mxu0 %v112
    %721 = vmatpush.msra.mxu0 %v108
    %722 = vmatpush.msra.mxu0 %v104
    %723 = vmatpush.msra.mxu0 %v100
    %724 = vmatpush.msra.mxu0 %v96
    %725 = vmatpush.msra.mxu0 %v92
    %726 = vmatpush.msra.mxu0 %v88
    %727 = vmatpush.msra.mxu0 %v84
    %728 = vmatmul.f32.gmra.mxu0 %v291
    %v729 = vpop.f32.mrf.mxu0
    %v730 = vadd.f32 0.0, %v729
    %731 = vdwg.mxu0
    %v732 = vadd.f32 %v648, %v670
    %v733 = vadd.f32 %v649, %v690
    %v734 = vadd.f32 %v650, %v710
    %v735 = vadd.f32 %v651, %v730
    %v736 = vxor.u32 %v732, 2147483648
    %v737 = vmul.f32 %v736, 1.442695
    %v738 = vpow.pop %v737
    %v739 = vadd.f32 %v738, 1.0
    %v740 = vrcp.pop %v739
    %v741 = vmul.f32 %v739, %v740
    %v742 = vsub.f32 1.0, %v741
    %v743 = vmul.f32 %v740, %v742
    %v744 = vadd.f32 %v740, %v743
    %vm745 = vweird.f32 %v739
    %vm746 = vweird.f32 %v740
    %vm747 = vmor %vm745, %vm746
    %v748 = vsel %vm747, %v740, %v744
    %v749 = vand.u32 2147483647, %v739
    %vm750 = vcmp.eq.f32.partialorder %v749, 8.507059e+37
    %v751 = vand.u32 %v739, 2147483648
    %v752 = vor.u32 1.1754944e-38, %v751
    %v753 = vsel %vm750, %v752, %v748
    %v754 = vmul.f32 1.0, %v753
    %v755 = vxor.u32 %v733, 2147483648
    %v756 = vmul.f32 %v755, 1.442695
    %v757 = vpow.pop %v756
    %v758 = vadd.f32 %v757, 1.0
    %v759 = vrcp.pop %v758
    %v760 = vmul.f32 %v758, %v759
    %v761 = vsub.f32 1.0, %v760
    %v762 = vmul.f32 %v759, %v761
    %v763 = vadd.f32 %v759, %v762
    %vm764 = vweird.f32 %v758
    %vm765 = vweird.f32 %v759
    %vm766 = vmor %vm764, %vm765
    %v767 = vsel %vm766, %v759, %v763
    %v768 = vand.u32 2147483647, %v758
    %vm769 = vcmp.eq.f32.partialorder %v768, 8.507059e+37
    %v770 = vand.u32 %v758, 2147483648
    %v771 = vor.u32 1.1754944e-38, %v770
    %v772 = vsel %vm769, %v771, %v767
    %v773 = vmul.f32 1.0, %v772
    %v774 = vtanh.pop %v734
    %v775 = vxor.u32 %v735, 2147483648
    %v776 = vmul.f32 %v775, 1.442695
    %v777 = vpow.pop %v776
    %v778 = vadd.f32 %v777, 1.0
    %v779 = vrcp.pop %v778
    %v780 = vmul.f32 %v778, %v779
    %v781 = vsub.f32 1.0, %v780
    %v782 = vmul.f32 %v779, %v781
    %v783 = vadd.f32 %v779, %v782
    %vm784 = vweird.f32 %v778
    %vm785 = vweird.f32 %v779
    %vm786 = vmor %vm784, %vm785
    %v787 = vsel %vm786, %v779, %v783
    %v788 = vand.u32 2147483647, %v778
    %vm789 = vcmp.eq.f32.partialorder %v788, 8.507059e+37
    %v790 = vand.u32 %v778, 2147483648
    %v791 = vor.u32 1.1754944e-38, %v790
    %v792 = vsel %vm789, %v791, %v787
    %v793 = vmul.f32 1.0, %v792
    %v794 = vmul.f32 %v773, %v289
    %v795 = vmul.f32 %v754, %v774
    %v796 = vadd.f32 %v794, %v795
    %v797 = vtanh.pop %v796
    %v798 = vmul.f32 %v793, %v797
    %799 = vmatpush.msra.mxu0 %v416
    %800 = vmatpush.msra.mxu0 %v412
    %801 = vmatpush.msra.mxu0 %v408
    %802 = vmatpush.msra.mxu0 %v404
    %803 = vmatpush.msra.mxu0 %v400
    %804 = vmatpush.msra.mxu0 %v396
    %805 = vmatpush.msra.mxu0 %v392
    %806 = vmatpush.msra.mxu0 %v388
    %807 = vmatpush.msra.mxu0 %v384
    %808 = vmatpush.msra.mxu0 %v380
    %809 = vmatpush.msra.mxu0 %v376
    %810 = vmatpush.msra.mxu0 %v372
    %811 = vmatpush.msra.mxu0 %v368
    %812 = vmatpush.msra.mxu0 %v364
    %813 = vmatpush.msra.mxu0 %v360
    %814 = vmatpush.msra.mxu0 %v356
    %815 = vmatmul.f32.gmra.mxu0 %v646
    %v816 = vpop.f32.mrf.mxu0
    %v817 = vadd.f32 0.0, %v816
    %818 = vdwg.mxu0
    %819 = vmatpush.msra.mxu0 %v417
    %820 = vmatpush.msra.mxu0 %v413
    %821 = vmatpush.msra.mxu0 %v409
    %822 = vmatpush.msra.mxu0 %v405
    %823 = vmatpush.msra.mxu0 %v401
    %824 = vmatpush.msra.mxu0 %v397
    %825 = vmatpush.msra.mxu0 %v393
    %826 = vmatpush.msra.mxu0 %v389
    %827 = vmatpush.msra.mxu0 %v385
    %828 = vmatpush.msra.mxu0 %v381
    %829 = vmatpush.msra.mxu0 %v377
    %830 = vmatpush.msra.mxu0 %v373
    %831 = vmatpush.msra.mxu0 %v369
    %832 = vmatpush.msra.mxu0 %v365
    %833 = vmatpush.msra.mxu0 %v361
    %834 = vmatpush.msra.mxu0 %v357
    %835 = vmatmul.f32.gmra.mxu0 %v646
    %v836 = vpop.f32.mrf.mxu0
    %v837 = vadd.f32 0.0, %v836
    %838 = vdwg.mxu0
    %839 = vmatpush.msra.mxu0 %v418
    %840 = vmatpush.msra.mxu0 %v414
    %841 = vmatpush.msra.mxu0 %v410
    %842 = vmatpush.msra.mxu0 %v406
    %843 = vmatpush.msra.mxu0 %v402
    %844 = vmatpush.msra.mxu0 %v398
    %845 = vmatpush.msra.mxu0 %v394
    %846 = vmatpush.msra.mxu0 %v390
    %847 = vmatpush.msra.mxu0 %v386
    %848 = vmatpush.msra.mxu0 %v382
    %849 = vmatpush.msra.mxu0 %v378
    %850 = vmatpush.msra.mxu0 %v374
    %851 = vmatpush.msra.mxu0 %v370
    %852 = vmatpush.msra.mxu0 %v366
    %853 = vmatpush.msra.mxu0 %v362
    %854 = vmatpush.msra.mxu0 %v358
    %855 = vmatmul.f32.gmra.mxu0 %v646
    %v856 = vpop.f32.mrf.mxu0
    %v857 = vadd.f32 0.0, %v856
    %858 = vdwg.mxu0
    %859 = vmatpush.msra.mxu0 %v419
    %860 = vmatpush.msra.mxu0 %v415
    %861 = vmatpush.msra.mxu0 %v411
    %862 = vmatpush.msra.mxu0 %v407
    %863 = vmatpush.msra.mxu0 %v403
    %864 = vmatpush.msra.mxu0 %v399
    %865 = vmatpush.msra.mxu0 %v395
    %866 = vmatpush.msra.mxu0 %v391
    %867 = vmatpush.msra.mxu0 %v387
    %868 = vmatpush.msra.mxu0 %v383
    %869 = vmatpush.msra.mxu0 %v379
    %870 = vmatpush.msra.mxu0 %v375
    %871 = vmatpush.msra.mxu0 %v371
    %872 = vmatpush.msra.mxu0 %v367
    %873 = vmatpush.msra.mxu0 %v363
    %874 = vmatpush.msra.mxu0 %v359
    %875 = vmatmul.f32.gmra.mxu0 %v646
    %v876 = vpop.f32.mrf.mxu0
    %v877 = vadd.f32 0.0, %v876
    %878 = vdwg.mxu0
    %879 = vmatpush.msra.mxu0 %v352
    %880 = vmatpush.msra.mxu0 %v348
    %881 = vmatpush.msra.mxu0 %v344
    %882 = vmatpush.msra.mxu0 %v340
    %883 = vmatpush.msra.mxu0 %v336
    %884 = vmatpush.msra.mxu0 %v332
    %885 = vmatpush.msra.mxu0 %v328
    %886 = vmatpush.msra.mxu0 %v324
    %887 = vmatpush.msra.mxu0 %v320
    %888 = vmatpush.msra.mxu0 %v316
    %889 = vmatpush.msra.mxu0 %v312
    %890 = vmatpush.msra.mxu0 %v308
    %891 = vmatpush.msra.mxu0 %v304
    %892 = vmatpush.msra.mxu0 %v300
    %893 = vmatpush.msra.mxu0 %v296
    %894 = vmatpush.msra.mxu0 %v292
    %895 = vmatmul.f32.gmra.mxu0 %v798
    %v896 = vpop.f32.mrf.mxu0
    %v897 = vadd.f32 %v817, %v896
    %898 = vdwg.mxu0
    %899 = vmatpush.msra.mxu0 %v353
    %900 = vmatpush.msra.mxu0 %v349
    %901 = vmatpush.msra.mxu0 %v345
    %902 = vmatpush.msra.mxu0 %v341
    %903 = vmatpush.msra.mxu0 %v337
    %904 = vmatpush.msra.mxu0 %v333
    %905 = vmatpush.msra.mxu0 %v329
    %906 = vmatpush.msra.mxu0 %v325
    %907 = vmatpush.msra.mxu0 %v321
    %908 = vmatpush.msra.mxu0 %v317
    %909 = vmatpush.msra.mxu0 %v313
    %910 = vmatpush.msra.mxu0 %v309
    %911 = vmatpush.msra.mxu0 %v305
    %912 = vmatpush.msra.mxu0 %v301
    %913 = vmatpush.msra.mxu0 %v297
    %914 = vmatpush.msra.mxu0 %v293
    %915 = vmatmul.f32.gmra.mxu0 %v798
    %v916 = vpop.f32.mrf.mxu0
    %v917 = vadd.f32 %v837, %v916
    %918 = vdwg.mxu0
    %919 = vmatpush.msra.mxu0 %v354
    %920 = vmatpush.msra.mxu0 %v350
    %921 = vmatpush.msra.mxu0 %v346
    %922 = vmatpush.msra.mxu0 %v342
    %923 = vmatpush.msra.mxu0 %v338
    %924 = vmatpush.msra.mxu0 %v334
    %925 = vmatpush.msra.mxu0 %v330
    %926 = vmatpush.msra.mxu0 %v326
    %927 = vmatpush.msra.mxu0 %v322
    %928 = vmatpush.msra.mxu0 %v318
    %929 = vmatpush.msra.mxu0 %v314
    %930 = vmatpush.msra.mxu0 %v310
    %931 = vmatpush.msra.mxu0 %v306
    %932 = vmatpush.msra.mxu0 %v302
    %933 = vmatpush.msra.mxu0 %v298
    %934 = vmatpush.msra.mxu0 %v294
    %935 = vmatmul.f32.gmra.mxu0 %v798
    %v936 = vpop.f32.mrf.mxu0
    %v937 = vadd.f32 %v857, %v936
    %938 = vdwg.mxu0
    %939 = vmatpush.msra.mxu0 %v355
    %940 = vmatpush.msra.mxu0 %v351
    %941 = vmatpush.msra.mxu0 %v347
    %942 = vmatpush.msra.mxu0 %v343
    %943 = vmatpush.msra.mxu0 %v339
    %944 = vmatpush.msra.mxu0 %v335
    %945 = vmatpush.msra.mxu0 %v331
    %946 = vmatpush.msra.mxu0 %v327
    %947 = vmatpush.msra.mxu0 %v323
    %948 = vmatpush.msra.mxu0 %v319
    %949 = vmatpush.msra.mxu0 %v315
    %950 = vmatpush.msra.mxu0 %v311
    %951 = vmatpush.msra.mxu0 %v307
    %952 = vmatpush.msra.mxu0 %v303
    %953 = vmatpush.msra.mxu0 %v299
    %954 = vmatpush.msra.mxu0 %v295
    %955 = vmatmul.f32.gmra.mxu0 %v798
    %v956 = vpop.f32.mrf.mxu0
    %v957 = vadd.f32 %v877, %v956
    %958 = vdwg.mxu0
    %v959 = vadd.f32 %v897, %v73
    %v960 = vadd.f32 %v917, %v74
    %v961 = vadd.f32 %v937, %v75
    %v962 = vadd.f32 %v957, %v76
    %v963 = vxor.u32 %v959, 2147483648
    %v964 = vmul.f32 %v963, 1.442695
    %v965 = vpow.pop %v964
    %v966 = vadd.f32 %v965, 1.0
    %v967 = vrcp.pop %v966
    %v968 = vmul.f32 %v966, %v967
    %v969 = vsub.f32 1.0, %v968
    %v970 = vmul.f32 %v967, %v969
    %v971 = vadd.f32 %v967, %v970
    %vm972 = vweird.f32 %v966
    %vm973 = vweird.f32 %v967
    %vm974 = vmor %vm972, %vm973
    %v975 = vsel %vm974, %v967, %v971
    %v976 = vand.u32 2147483647, %v966
    %vm977 = vcmp.eq.f32.partialorder %v976, 8.507059e+37
    %v978 = vand.u32 %v966, 2147483648
    %v979 = vor.u32 1.1754944e-38, %v978
    %v980 = vsel %vm977, %v979, %v975
    %v981 = vmul.f32 1.0, %v980
    %v982 = vxor.u32 %v960, 2147483648
    %v983 = vmul.f32 %v982, 1.442695
    %v984 = vpow.pop %v983
    %v985 = vadd.f32 %v984, 1.0
    %v986 = vrcp.pop %v985
    %v987 = vmul.f32 %v985, %v986
    %v988 = vsub.f32 1.0, %v987
    %v989 = vmul.f32 %v986, %v988
    %v990 = vadd.f32 %v986, %v989
    %vm991 = vweird.f32 %v985
    %vm992 = vweird.f32 %v986
    %vm993 = vmor %vm991, %vm992
    %v994 = vsel %vm993, %v986, %v990
    %v995 = vand.u32 2147483647, %v985
    %vm996 = vcmp.eq.f32.partialorder %v995, 8.507059e+37
    %v997 = vand.u32 %v985, 2147483648
    %v998 = vor.u32 1.1754944e-38, %v997
    %v999 = vsel %vm996, %v998, %v994
    %v1000 = vmul.f32 1.0, %v999
    %v1001 = vtanh.pop %v961
    %v1002 = vxor.u32 %v962, 2147483648
    %v1003 = vmul.f32 %v1002, 1.442695
    %v1004 = vpow.pop %v1003
    %v1005 = vadd.f32 %v1004, 1.0
    %v1006 = vrcp.pop %v1005
    %v1007 = vmul.f32 %v1005, %v1006
    %v1008 = vsub.f32 1.0, %v1007
    %v1009 = vmul.f32 %v1006, %v1008
    %v1010 = vadd.f32 %v1006, %v1009
    %vm1011 = vweird.f32 %v1005
    %vm1012 = vweird.f32 %v1006
    %vm1013 = vmor %vm1011, %vm1012
    %v1014 = vsel %vm1013, %v1006, %v1010
    %v1015 = vand.u32 2147483647, %v1005
    %vm1016 = vcmp.eq.f32.partialorder %v1015, 8.507059e+37
    %v1017 = vand.u32 %v1005, 2147483648
    %v1018 = vor.u32 1.1754944e-38, %v1017
    %v1019 = vsel %vm1016, %v1018, %v1014
    %v1020 = vmul.f32 1.0, %v1019
    %v1021 = vmul.f32 %v1000, %v644
    %v1022 = vmul.f32 %v981, %v1001
    %v1023 = vadd.f32 %v1021, %v1022
    %v1024 = vtanh.pop %v1023
    %v1025 = vmul.f32 %v1020, %v1024
    %s1026 = scalar_lea.vmem %s0, 64
    %v1027 = vld [vmem:[%s1026] sm:$0xff]
    %v1028 = vld [vmem:[%s1026 + $0x8] sm:$0xff]
    %v1029 = vld [vmem:[%s1026 + $0x10] sm:$0xff]
    %v1030 = vld [vmem:[%s1026 + $0x18] sm:$0xff]
    %1031 = vmatpush.msra.mxu0 %v141
    %1032 = vmatpush.msra.mxu0 %v137
    %1033 = vmatpush.msra.mxu0 %v133
    %1034 = vmatpush.msra.mxu0 %v129
    %1035 = vmatpush.msra.mxu0 %v125
    %1036 = vmatpush.msra.mxu0 %v121
    %1037 = vmatpush.msra.mxu0 %v117
    %1038 = vmatpush.msra.mxu0 %v113
    %1039 = vmatpush.msra.mxu0 %v109
    %1040 = vmatpush.msra.mxu0 %v105
    %1041 = vmatpush.msra.mxu0 %v101
    %1042 = vmatpush.msra.mxu0 %v97
    %1043 = vmatpush.msra.mxu0 %v93
    %1044 = vmatpush.msra.mxu0 %v89
    %1045 = vmatpush.msra.mxu0 %v85
    %1046 = vmatpush.msra.mxu0 %v81
    %1047 = vmatmul.f32.gmra.mxu0 %v798
    %v1048 = vpop.f32.mrf.mxu0
    %v1049 = vadd.f32 0.0, %v1048
    %1050 = vdwg.mxu0
    %1051 = vmatpush.msra.mxu0 %v142
    %1052 = vmatpush.msra.mxu0 %v138
    %1053 = vmatpush.msra.mxu0 %v134
    %1054 = vmatpush.msra.mxu0 %v130
    %1055 = vmatpush.msra.mxu0 %v126
    %1056 = vmatpush.msra.mxu0 %v122
    %1057 = vmatpush.msra.mxu0 %v118
    %1058 = vmatpush.msra.mxu0 %v114
    %1059 = vmatpush.msra.mxu0 %v110
    %1060 = vmatpush.msra.mxu0 %v106
    %1061 = vmatpush.msra.mxu0 %v102
    %1062 = vmatpush.msra.mxu0 %v98
    %1063 = vmatpush.msra.mxu0 %v94
    %1064 = vmatpush.msra.mxu0 %v90
    %1065 = vmatpush.msra.mxu0 %v86
    %1066 = vmatpush.msra.mxu0 %v82
    %1067 = vmatmul.f32.gmra.mxu0 %v798
    %v1068 = vpop.f32.mrf.mxu0
    %v1069 = vadd.f32 0.0, %v1068
    %1070 = vdwg.mxu0
    %1071 = vmatpush.msra.mxu0 %v143
    %1072 = vmatpush.msra.mxu0 %v139
    %1073 = vmatpush.msra.mxu0 %v135
    %1074 = vmatpush.msra.mxu0 %v131
    %1075 = vmatpush.msra.mxu0 %v127
    %1076 = vmatpush.msra.mxu0 %v123
    %1077 = vmatpush.msra.mxu0 %v119
    %1078 = vmatpush.msra.mxu0 %v115
    %1079 = vmatpush.msra.mxu0 %v111
    %1080 = vmatpush.msra.mxu0 %v107
    %1081 = vmatpush.msra.mxu0 %v103
    %1082 = vmatpush.msra.mxu0 %v99
    %1083 = vmatpush.msra.mxu0 %v95
    %1084 = vmatpush.msra.mxu0 %v91
    %1085 = vmatpush.msra.mxu0 %v87
    %1086 = vmatpush.msra.mxu0 %v83
    %1087 = vmatmul.f32.gmra.mxu0 %v798
    %v1088 = vpop.f32.mrf.mxu0
    %v1089 = vadd.f32 0.0, %v1088
    %1090 = vdwg.mxu0
    %1091 = vmatpush.msra.mxu0 %v144
    %1092 = vmatpush.msra.mxu0 %v140
    %1093 = vmatpush.msra.mxu0 %v136
    %1094 = vmatpush.msra.mxu0 %v132
    %1095 = vmatpush.msra.mxu0 %v128
    %1096 = vmatpush.msra.mxu0 %v124
    %1097 = vmatpush.msra.mxu0 %v120
    %1098 = vmatpush.msra.mxu0 %v116
    %1099 = vmatpush.msra.mxu0 %v112
    %1100 = vmatpush.msra.mxu0 %v108
    %1101 = vmatpush.msra.mxu0 %v104
    %1102 = vmatpush.msra.mxu0 %v100
    %1103 = vmatpush.msra.mxu0 %v96
    %1104 = vmatpush.msra.mxu0 %v92
    %1105 = vmatpush.msra.mxu0 %v88
    %1106 = vmatpush.msra.mxu0 %v84
    %1107 = vmatmul.f32.gmra.mxu0 %v798
    %v1108 = vpop.f32.mrf.mxu0
    %v1109 = vadd.f32 0.0, %v1108
    %1110 = vdwg.mxu0
    %v1111 = vadd.f32 %v1027, %v1049
    %v1112 = vadd.f32 %v1028, %v1069
    %v1113 = vadd.f32 %v1029, %v1089
    %v1114 = vadd.f32 %v1030, %v1109
    %v1115 = vxor.u32 %v1111, 2147483648
    %v1116 = vmul.f32 %v1115, 1.442695
    %v1117 = vpow.pop %v1116
    %v1118 = vadd.f32 %v1117, 1.0
    %v1119 = vrcp.pop %v1118
    %v1120 = vmul.f32 %v1118, %v1119
    %v1121 = vsub.f32 1.0, %v1120
    %v1122 = vmul.f32 %v1119, %v1121
    %v1123 = vadd.f32 %v1119, %v1122
    %vm1124 = vweird.f32 %v1118
    %vm1125 = vweird.f32 %v1119
    %vm1126 = vmor %vm1124, %vm1125
    %v1127 = vsel %vm1126, %v1119, %v1123
    %v1128 = vand.u32 2147483647, %v1118
    %vm1129 = vcmp.eq.f32.partialorder %v1128, 8.507059e+37
    %v1130 = vand.u32 %v1118, 2147483648
    %v1131 = vor.u32 1.1754944e-38, %v1130
    %v1132 = vsel %vm1129, %v1131, %v1127
    %v1133 = vmul.f32 1.0, %v1132
    %v1134 = vxor.u32 %v1112, 2147483648
    %v1135 = vmul.f32 %v1134, 1.442695
    %v1136 = vpow.pop %v1135
    %v1137 = vadd.f32 %v1136, 1.0
    %v1138 = vrcp.pop %v1137
    %v1139 = vmul.f32 %v1137, %v1138
    %v1140 = vsub.f32 1.0, %v1139
    %v1141 = vmul.f32 %v1138, %v1140
    %v1142 = vadd.f32 %v1138, %v1141
    %vm1143 = vweird.f32 %v1137
    %vm1144 = vweird.f32 %v1138
    %vm1145 = vmor %vm1143, %vm1144
    %v1146 = vsel %vm1145, %v1138, %v1142
    %v1147 = vand.u32 2147483647, %v1137
    %vm1148 = vcmp.eq.f32.partialorder %v1147, 8.507059e+37
    %v1149 = vand.u32 %v1137, 2147483648
    %v1150 = vor.u32 1.1754944e-38, %v1149
    %v1151 = vsel %vm1148, %v1150, %v1146
    %v1152 = vmul.f32 1.0, %v1151
    %v1153 = vtanh.pop %v1113
    %v1154 = vxor.u32 %v1114, 2147483648
    %v1155 = vmul.f32 %v1154, 1.442695
    %v1156 = vpow.pop %v1155
    %v1157 = vadd.f32 %v1156, 1.0
    %v1158 = vrcp.pop %v1157
    %v1159 = vmul.f32 %v1157, %v1158
    %v1160 = vsub.f32 1.0, %v1159
    %v1161 = vmul.f32 %v1158, %v1160
    %v1162 = vadd.f32 %v1158, %v1161
    %vm1163 = vweird.f32 %v1157
    %vm1164 = vweird.f32 %v1158
    %vm1165 = vmor %vm1163, %vm1164
    %v1166 = vsel %vm1165, %v1158, %v1162
    %v1167 = vand.u32 2147483647, %v1157
    %vm1168 = vcmp.eq.f32.partialorder %v1167, 8.507059e+37
    %v1169 = vand.u32 %v1157, 2147483648
    %v1170 = vor.u32 1.1754944e-38, %v1169
    %v1171 = vsel %vm1168, %v1170, %v1166
    %v1172 = vmul.f32 1.0, %v1171
    %v1173 = vmul.f32 %v1152, %v796
    %v1174 = vmul.f32 %v1133, %v1153
    %v1175 = vadd.f32 %v1173, %v1174
    %v1176 = vtanh.pop %v1175
    %v1177 = vmul.f32 %v1172, %v1176
    %1178 = vmatpush.msra.mxu0 %v416
    %1179 = vmatpush.msra.mxu0 %v412
    %1180 = vmatpush.msra.mxu0 %v408
    %1181 = vmatpush.msra.mxu0 %v404
    %1182 = vmatpush.msra.mxu0 %v400
    %1183 = vmatpush.msra.mxu0 %v396
    %1184 = vmatpush.msra.mxu0 %v392
    %1185 = vmatpush.msra.mxu0 %v388
    %1186 = vmatpush.msra.mxu0 %v384
    %1187 = vmatpush.msra.mxu0 %v380
    %1188 = vmatpush.msra.mxu0 %v376
    %1189 = vmatpush.msra.mxu0 %v372
    %1190 = vmatpush.msra.mxu0 %v368
    %1191 = vmatpush.msra.mxu0 %v364
    %1192 = vmatpush.msra.mxu0 %v360
    %1193 = vmatpush.msra.mxu0 %v356
    %1194 = vmatmul.f32.gmra.mxu0 %v1025
    %v1195 = vpop.f32.mrf.mxu0
    %v1196 = vadd.f32 0.0, %v1195
    %1197 = vdwg.mxu0
    %1198 = vmatpush.msra.mxu0 %v417
    %1199 = vmatpush.msra.mxu0 %v413
    %1200 = vmatpush.msra.mxu0 %v409
    %1201 = vmatpush.msra.mxu0 %v405
    %1202 = vmatpush.msra.mxu0 %v401
    %1203 = vmatpush.msra.mxu0 %v397
    %1204 = vmatpush.msra.mxu0 %v393
    %1205 = vmatpush.msra.mxu0 %v389
    %1206 = vmatpush.msra.mxu0 %v385
    %1207 = vmatpush.msra.mxu0 %v381
    %1208 = vmatpush.msra.mxu0 %v377
    %1209 = vmatpush.msra.mxu0 %v373
    %1210 = vmatpush.msra.mxu0 %v369
    %1211 = vmatpush.msra.mxu0 %v365
    %1212 = vmatpush.msra.mxu0 %v361
    %1213 = vmatpush.msra.mxu0 %v357
    %1214 = vmatmul.f32.gmra.mxu0 %v1025
    %v1215 = vpop.f32.mrf.mxu0
    %v1216 = vadd.f32 0.0, %v1215
    %1217 = vdwg.mxu0
    %1218 = vmatpush.msra.mxu0 %v418
    %1219 = vmatpush.msra.mxu0 %v414
    %1220 = vmatpush.msra.mxu0 %v410
    %1221 = vmatpush.msra.mxu0 %v406
    %1222 = vmatpush.msra.mxu0 %v402
    %1223 = vmatpush.msra.mxu0 %v398
    %1224 = vmatpush.msra.mxu0 %v394
    %1225 = vmatpush.msra.mxu0 %v390
    %1226 = vmatpush.msra.mxu0 %v386
    %1227 = vmatpush.msra.mxu0 %v382
    %1228 = vmatpush.msra.mxu0 %v378
    %1229 = vmatpush.msra.mxu0 %v374
    %1230 = vmatpush.msra.mxu0 %v370
    %1231 = vmatpush.msra.mxu0 %v366
    %1232 = vmatpush.msra.mxu0 %v362
    %1233 = vmatpush.msra.mxu0 %v358
    %1234 = vmatmul.f32.gmra.mxu0 %v1025
    %v1235 = vpop.f32.mrf.mxu0
    %v1236 = vadd.f32 0.0, %v1235
    %1237 = vdwg.mxu0
    %1238 = vmatpush.msra.mxu0 %v419
    %1239 = vmatpush.msra.mxu0 %v415
    %1240 = vmatpush.msra.mxu0 %v411
    %1241 = vmatpush.msra.mxu0 %v407
    %1242 = vmatpush.msra.mxu0 %v403
    %1243 = vmatpush.msra.mxu0 %v399
    %1244 = vmatpush.msra.mxu0 %v395
    %1245 = vmatpush.msra.mxu0 %v391
    %1246 = vmatpush.msra.mxu0 %v387
    %1247 = vmatpush.msra.mxu0 %v383
    %1248 = vmatpush.msra.mxu0 %v379
    %1249 = vmatpush.msra.mxu0 %v375
    %1250 = vmatpush.msra.mxu0 %v371
    %1251 = vmatpush.msra.mxu0 %v367
    %1252 = vmatpush.msra.mxu0 %v363
    %1253 = vmatpush.msra.mxu0 %v359
    %1254 = vmatmul.f32.gmra.mxu0 %v1025
    %v1255 = vpop.f32.mrf.mxu0
    %v1256 = vadd.f32 0.0, %v1255
    %1257 = vdwg.mxu0
    %1258 = vmatpush.msra.mxu0 %v352
    %1259 = vmatpush.msra.mxu0 %v348
    %1260 = vmatpush.msra.mxu0 %v344
    %1261 = vmatpush.msra.mxu0 %v340
    %1262 = vmatpush.msra.mxu0 %v336
    %1263 = vmatpush.msra.mxu0 %v332
    %1264 = vmatpush.msra.mxu0 %v328
    %1265 = vmatpush.msra.mxu0 %v324
    %1266 = vmatpush.msra.mxu0 %v320
    %1267 = vmatpush.msra.mxu0 %v316
    %1268 = vmatpush.msra.mxu0 %v312
    %1269 = vmatpush.msra.mxu0 %v308
    %1270 = vmatpush.msra.mxu0 %v304
    %1271 = vmatpush.msra.mxu0 %v300
    %1272 = vmatpush.msra.mxu0 %v296
    %1273 = vmatpush.msra.mxu0 %v292
    %1274 = vmatmul.f32.gmra.mxu0 %v1177
    %v1275 = vpop.f32.mrf.mxu0
    %v1276 = vadd.f32 %v1196, %v1275
    %1277 = vdwg.mxu0
    %1278 = vmatpush.msra.mxu0 %v353
    %1279 = vmatpush.msra.mxu0 %v349
    %1280 = vmatpush.msra.mxu0 %v345
    %1281 = vmatpush.msra.mxu0 %v341
    %1282 = vmatpush.msra.mxu0 %v337
    %1283 = vmatpush.msra.mxu0 %v333
    %1284 = vmatpush.msra.mxu0 %v329
    %1285 = vmatpush.msra.mxu0 %v325
    %1286 = vmatpush.msra.mxu0 %v321
    %1287 = vmatpush.msra.mxu0 %v317
    %1288 = vmatpush.msra.mxu0 %v313
    %1289 = vmatpush.msra.mxu0 %v309
    %1290 = vmatpush.msra.mxu0 %v305
    %1291 = vmatpush.msra.mxu0 %v301
    %1292 = vmatpush.msra.mxu0 %v297
    %1293 = vmatpush.msra.mxu0 %v293
    %1294 = vmatmul.f32.gmra.mxu0 %v1177
    %v1295 = vpop.f32.mrf.mxu0
    %v1296 = vadd.f32 %v1216, %v1295
    %1297 = vdwg.mxu0
    %1298 = vmatpush.msra.mxu0 %v354
    %1299 = vmatpush.msra.mxu0 %v350
    %1300 = vmatpush.msra.mxu0 %v346
    %1301 = vmatpush.msra.mxu0 %v342
    %1302 = vmatpush.msra.mxu0 %v338
    %1303 = vmatpush.msra.mxu0 %v334
    %1304 = vmatpush.msra.mxu0 %v330
    %1305 = vmatpush.msra.mxu0 %v326
    %1306 = vmatpush.msra.mxu0 %v322
    %1307 = vmatpush.msra.mxu0 %v318
    %1308 = vmatpush.msra.mxu0 %v314
    %1309 = vmatpush.msra.mxu0 %v310
    %1310 = vmatpush.msra.mxu0 %v306
    %1311 = vmatpush.msra.mxu0 %v302
    %1312 = vmatpush.msra.mxu0 %v298
    %1313 = vmatpush.msra.mxu0 %v294
    %1314 = vmatmul.f32.gmra.mxu0 %v1177
    %v1315 = vpop.f32.mrf.mxu0
    %v1316 = vadd.f32 %v1236, %v1315
    %1317 = vdwg.mxu0
    %1318 = vmatpush.msra.mxu0 %v355
    %1319 = vmatpush.msra.mxu0 %v351
    %1320 = vmatpush.msra.mxu0 %v347
    %1321 = vmatpush.msra.mxu0 %v343
    %1322 = vmatpush.msra.mxu0 %v339
    %1323 = vmatpush.msra.mxu0 %v335
    %1324 = vmatpush.msra.mxu0 %v331
    %1325 = vmatpush.msra.mxu0 %v327
    %1326 = vmatpush.msra.mxu0 %v323
    %1327 = vmatpush.msra.mxu0 %v319
    %1328 = vmatpush.msra.mxu0 %v315
    %1329 = vmatpush.msra.mxu0 %v311
    %1330 = vmatpush.msra.mxu0 %v307
    %1331 = vmatpush.msra.mxu0 %v303
    %1332 = vmatpush.msra.mxu0 %v299
    %1333 = vmatpush.msra.mxu0 %v295
    %1334 = vmatmul.f32.gmra.mxu0 %v1177
    %v1335 = vpop.f32.mrf.mxu0
    %v1336 = vadd.f32 %v1256, %v1335
    %1337 = vdwg.mxu0
    %v1338 = vadd.f32 %v1276, %v73
    %v1339 = vadd.f32 %v1296, %v74
    %v1340 = vadd.f32 %v1316, %v75
    %v1341 = vadd.f32 %v1336, %v76
    %v1342 = vxor.u32 %v1338, 2147483648
    %v1343 = vmul.f32 %v1342, 1.442695
    %v1344 = vpow.pop %v1343
    %v1345 = vadd.f32 %v1344, 1.0
    %v1346 = vrcp.pop %v1345
    %v1347 = vmul.f32 %v1345, %v1346
    %v1348 = vsub.f32 1.0, %v1347
    %v1349 = vmul.f32 %v1346, %v1348
    %v1350 = vadd.f32 %v1346, %v1349
    %vm1351 = vweird.f32 %v1345
    %vm1352 = vweird.f32 %v1346
    %vm1353 = vmor %vm1351, %vm1352
    %v1354 = vsel %vm1353, %v1346, %v1350
    %v1355 = vand.u32 2147483647, %v1345
    %vm1356 = vcmp.eq.f32.partialorder %v1355, 8.507059e+37
    %v1357 = vand.u32 %v1345, 2147483648
    %v1358 = vor.u32 1.1754944e-38, %v1357
    %v1359 = vsel %vm1356, %v1358, %v1354
    %v1360 = vmul.f32 1.0, %v1359
    %v1361 = vxor.u32 %v1339, 2147483648
    %v1362 = vmul.f32 %v1361, 1.442695
    %v1363 = vpow.pop %v1362
    %v1364 = vadd.f32 %v1363, 1.0
    %v1365 = vrcp.pop %v1364
    %v1366 = vmul.f32 %v1364, %v1365
    %v1367 = vsub.f32 1.0, %v1366
    %v1368 = vmul.f32 %v1365, %v1367
    %v1369 = vadd.f32 %v1365, %v1368
    %vm1370 = vweird.f32 %v1364
    %vm1371 = vweird.f32 %v1365
    %vm1372 = vmor %vm1370, %vm1371
    %v1373 = vsel %vm1372, %v1365, %v1369
    %v1374 = vand.u32 2147483647, %v1364
    %vm1375 = vcmp.eq.f32.partialorder %v1374, 8.507059e+37
    %v1376 = vand.u32 %v1364, 2147483648
    %v1377 = vor.u32 1.1754944e-38, %v1376
    %v1378 = vsel %vm1375, %v1377, %v1373
    %v1379 = vmul.f32 1.0, %v1378
    %v1380 = vtanh.pop %v1340
    %v1381 = vxor.u32 %v1341, 2147483648
    %v1382 = vmul.f32 %v1381, 1.442695
    %v1383 = vpow.pop %v1382
    %v1384 = vadd.f32 %v1383, 1.0
    %v1385 = vrcp.pop %v1384
    %v1386 = vmul.f32 %v1384, %v1385
    %v1387 = vsub.f32 1.0, %v1386
    %v1388 = vmul.f32 %v1385, %v1387
    %v1389 = vadd.f32 %v1385, %v1388
    %vm1390 = vweird.f32 %v1384
    %vm1391 = vweird.f32 %v1385
    %vm1392 = vmor %vm1390, %vm1391
    %v1393 = vsel %vm1392, %v1385, %v1389
    %v1394 = vand.u32 2147483647, %v1384
    %vm1395 = vcmp.eq.f32.partialorder %v1394, 8.507059e+37
    %v1396 = vand.u32 %v1384, 2147483648
    %v1397 = vor.u32 1.1754944e-38, %v1396
    %v1398 = vsel %vm1395, %v1397, %v1393
    %v1399 = vmul.f32 1.0, %v1398
    %v1400 = vmul.f32 %v1379, %v1023
    %v1401 = vmul.f32 %v1360, %v1380
    %v1402 = vadd.f32 %v1400, %v1401
    %v1403 = vtanh.pop %v1402
    %v1404 = vmul.f32 %v1399, %v1403
    %s1405 = scalar_lea.vmem %s0, 96
    %v1406 = vld [vmem:[%s1405] sm:$0xff]
    %v1407 = vld [vmem:[%s1405 + $0x8] sm:$0xff]
    %v1408 = vld [vmem:[%s1405 + $0x10] sm:$0xff]
    %v1409 = vld [vmem:[%s1405 + $0x18] sm:$0xff]
    %1410 = vmatpush.msra.mxu0 %v141
    %1411 = vmatpush.msra.mxu0 %v137
    %1412 = vmatpush.msra.mxu0 %v133
    %1413 = vmatpush.msra.mxu0 %v129
    %1414 = vmatpush.msra.mxu0 %v125
    %1415 = vmatpush.msra.mxu0 %v121
    %1416 = vmatpush.msra.mxu0 %v117
    %1417 = vmatpush.msra.mxu0 %v113
    %1418 = vmatpush.msra.mxu0 %v109
    %1419 = vmatpush.msra.mxu0 %v105
    %1420 = vmatpush.msra.mxu0 %v101
    %1421 = vmatpush.msra.mxu0 %v97
    %1422 = vmatpush.msra.mxu0 %v93
    %1423 = vmatpush.msra.mxu0 %v89
    %1424 = vmatpush.msra.mxu0 %v85
    %1425 = vmatpush.msra.mxu0 %v81
    %1426 = vmatmul.f32.gmra.mxu0 %v1177
    %v1427 = vpop.f32.mrf.mxu0
    %v1428 = vadd.f32 0.0, %v1427
    %1429 = vdwg.mxu0
    %1430 = vmatpush.msra.mxu0 %v142
    %1431 = vmatpush.msra.mxu0 %v138
    %1432 = vmatpush.msra.mxu0 %v134
    %1433 = vmatpush.msra.mxu0 %v130
    %1434 = vmatpush.msra.mxu0 %v126
    %1435 = vmatpush.msra.mxu0 %v122
    %1436 = vmatpush.msra.mxu0 %v118
    %1437 = vmatpush.msra.mxu0 %v114
    %1438 = vmatpush.msra.mxu0 %v110
    %1439 = vmatpush.msra.mxu0 %v106
    %1440 = vmatpush.msra.mxu0 %v102
    %1441 = vmatpush.msra.mxu0 %v98
    %1442 = vmatpush.msra.mxu0 %v94
    %1443 = vmatpush.msra.mxu0 %v90
    %1444 = vmatpush.msra.mxu0 %v86
    %1445 = vmatpush.msra.mxu0 %v82
    %1446 = vmatmul.f32.gmra.mxu0 %v1177
    %v1447 = vpop.f32.mrf.mxu0
    %v1448 = vadd.f32 0.0, %v1447
    %1449 = vdwg.mxu0
    %1450 = vmatpush.msra.mxu0 %v143
    %1451 = vmatpush.msra.mxu0 %v139
    %1452 = vmatpush.msra.mxu0 %v135
    %1453 = vmatpush.msra.mxu0 %v131
    %1454 = vmatpush.msra.mxu0 %v127
    %1455 = vmatpush.msra.mxu0 %v123
    %1456 = vmatpush.msra.mxu0 %v119
    %1457 = vmatpush.msra.mxu0 %v115
    %1458 = vmatpush.msra.mxu0 %v111
    %1459 = vmatpush.msra.mxu0 %v107
    %1460 = vmatpush.msra.mxu0 %v103
    %1461 = vmatpush.msra.mxu0 %v99
    %1462 = vmatpush.msra.mxu0 %v95
    %1463 = vmatpush.msra.mxu0 %v91
    %1464 = vmatpush.msra.mxu0 %v87
    %1465 = vmatpush.msra.mxu0 %v83
    %1466 = vmatmul.f32.gmra.mxu0 %v1177
    %v1467 = vpop.f32.mrf.mxu0
    %v1468 = vadd.f32 0.0, %v1467
    %1469 = vdwg.mxu0
    %1470 = vmatpush.msra.mxu0 %v144
    %1471 = vmatpush.msra.mxu0 %v140
    %1472 = vmatpush.msra.mxu0 %v136
    %1473 = vmatpush.msra.mxu0 %v132
    %1474 = vmatpush.msra.mxu0 %v128
    %1475 = vmatpush.msra.mxu0 %v124
    %1476 = vmatpush.msra.mxu0 %v120
    %1477 = vmatpush.msra.mxu0 %v116
    %1478 = vmatpush.msra.mxu0 %v112
    %1479 = vmatpush.msra.mxu0 %v108
    %1480 = vmatpush.msra.mxu0 %v104
    %1481 = vmatpush.msra.mxu0 %v100
    %1482 = vmatpush.msra.mxu0 %v96
    %1483 = vmatpush.msra.mxu0 %v92
    %1484 = vmatpush.msra.mxu0 %v88
    %1485 = vmatpush.msra.mxu0 %v84
    %1486 = vmatmul.f32.gmra.mxu0 %v1177
    %v1487 = vpop.f32.mrf.mxu0
    %v1488 = vadd.f32 0.0, %v1487
    %1489 = vdwg.mxu0
    %v1490 = vadd.f32 %v1406, %v1428
    %v1491 = vadd.f32 %v1407, %v1448
    %v1492 = vadd.f32 %v1408, %v1468
    %v1493 = vadd.f32 %v1409, %v1488
    %v1494 = vxor.u32 %v1490, 2147483648
    %v1495 = vmul.f32 %v1494, 1.442695
    %v1496 = vpow.pop %v1495
    %v1497 = vadd.f32 %v1496, 1.0
    %v1498 = vrcp.pop %v1497
    %v1499 = vmul.f32 %v1497, %v1498
    %v1500 = vsub.f32 1.0, %v1499
    %v1501 = vmul.f32 %v1498, %v1500
    %v1502 = vadd.f32 %v1498, %v1501
    %vm1503 = vweird.f32 %v1497
    %vm1504 = vweird.f32 %v1498
    %vm1505 = vmor %vm1503, %vm1504
    %v1506 = vsel %vm1505, %v1498, %v1502
    %v1507 = vand.u32 2147483647, %v1497
    %vm1508 = vcmp.eq.f32.partialorder %v1507, 8.507059e+37
    %v1509 = vand.u32 %v1497, 2147483648
    %v1510 = vor.u32 1.1754944e-38, %v1509
    %v1511 = vsel %vm1508, %v1510, %v1506
    %v1512 = vmul.f32 1.0, %v1511
    %v1513 = vxor.u32 %v1491, 2147483648
    %v1514 = vmul.f32 %v1513, 1.442695
    %v1515 = vpow.pop %v1514
    %v1516 = vadd.f32 %v1515, 1.0
    %v1517 = vrcp.pop %v1516
    %v1518 = vmul.f32 %v1516, %v1517
    %v1519 = vsub.f32 1.0, %v1518
    %v1520 = vmul.f32 %v1517, %v1519
    %v1521 = vadd.f32 %v1517, %v1520
    %vm1522 = vweird.f32 %v1516
    %vm1523 = vweird.f32 %v1517
    %vm1524 = vmor %vm1522, %vm1523
    %v1525 = vsel %vm1524, %v1517, %v1521
    %v1526 = vand.u32 2147483647, %v1516
    %vm1527 = vcmp.eq.f32.partialorder %v1526, 8.507059e+37
    %v1528 = vand.u32 %v1516, 2147483648
    %v1529 = vor.u32 1.1754944e-38, %v1528
    %v1530 = vsel %vm1527, %v1529, %v1525
    %v1531 = vmul.f32 1.0, %v1530
    %v1532 = vtanh.pop %v1492
    %v1533 = vxor.u32 %v1493, 2147483648
    %v1534 = vmul.f32 %v1533, 1.442695
    %v1535 = vpow.pop %v1534
    %v1536 = vadd.f32 %v1535, 1.0
    %v1537 = vrcp.pop %v1536
    %v1538 = vmul.f32 %v1536, %v1537
    %v1539 = vsub.f32 1.0, %v1538
    %v1540 = vmul.f32 %v1537, %v1539
    %v1541 = vadd.f32 %v1537, %v1540
    %vm1542 = vweird.f32 %v1536
    %vm1543 = vweird.f32 %v1537
    %vm1544 = vmor %vm1542, %vm1543
    %v1545 = vsel %vm1544, %v1537, %v1541
    %v1546 = vand.u32 2147483647, %v1536
    %vm1547 = vcmp.eq.f32.partialorder %v1546, 8.507059e+37
    %v1548 = vand.u32 %v1536, 2147483648
    %v1549 = vor.u32 1.1754944e-38, %v1548
    %v1550 = vsel %vm1547, %v1549, %v1545
    %v1551 = vmul.f32 1.0, %v1550
    %v1552 = vmul.f32 %v1531, %v1175
    %v1553 = vmul.f32 %v1512, %v1532
    %v1554 = vadd.f32 %v1552, %v1553
    %v1555 = vtanh.pop %v1554
    %v1556 = vmul.f32 %v1551, %v1555
    %1557 = vmatpush.msra.mxu0 %v416
    %1558 = vmatpush.msra.mxu0 %v412
    %1559 = vmatpush.msra.mxu0 %v408
    %1560 = vmatpush.msra.mxu0 %v404
    %1561 = vmatpush.msra.mxu0 %v400
    %1562 = vmatpush.msra.mxu0 %v396
    %1563 = vmatpush.msra.mxu0 %v392
    %1564 = vmatpush.msra.mxu0 %v388
    %1565 = vmatpush.msra.mxu0 %v384
    %1566 = vmatpush.msra.mxu0 %v380
    %1567 = vmatpush.msra.mxu0 %v376
    %1568 = vmatpush.msra.mxu0 %v372
    %1569 = vmatpush.msra.mxu0 %v368
    %1570 = vmatpush.msra.mxu0 %v364
    %1571 = vmatpush.msra.mxu0 %v360
    %1572 = vmatpush.msra.mxu0 %v356
    %1573 = vmatmul.f32.gmra.mxu0 %v1404
    %v1574 = vpop.f32.mrf.mxu0
    %v1575 = vadd.f32 0.0, %v1574
    %1576 = vdwg.mxu0
    %1577 = vmatpush.msra.mxu0 %v417
    %1578 = vmatpush.msra.mxu0 %v413
    %1579 = vmatpush.msra.mxu0 %v409
    %1580 = vmatpush.msra.mxu0 %v405
    %1581 = vmatpush.msra.mxu0 %v401
    %1582 = vmatpush.msra.mxu0 %v397
    %1583 = vmatpush.msra.mxu0 %v393
    %1584 = vmatpush.msra.mxu0 %v389
    %1585 = vmatpush.msra.mxu0 %v385
    %1586 = vmatpush.msra.mxu0 %v381
    %1587 = vmatpush.msra.mxu0 %v377
    %1588 = vmatpush.msra.mxu0 %v373
    %1589 = vmatpush.msra.mxu0 %v369
    %1590 = vmatpush.msra.mxu0 %v365
    %1591 = vmatpush.msra.mxu0 %v361
    %1592 = vmatpush.msra.mxu0 %v357
    %1593 = vmatmul.f32.gmra.mxu0 %v1404
    %v1594 = vpop.f32.mrf.mxu0
    %v1595 = vadd.f32 0.0, %v1594
    %1596 = vdwg.mxu0
    %1597 = vmatpush.msra.mxu0 %v418
    %1598 = vmatpush.msra.mxu0 %v414
    %1599 = vmatpush.msra.mxu0 %v410
    %1600 = vmatpush.msra.mxu0 %v406
    %1601 = vmatpush.msra.mxu0 %v402
    %1602 = vmatpush.msra.mxu0 %v398
    %1603 = vmatpush.msra.mxu0 %v394
    %1604 = vmatpush.msra.mxu0 %v390
    %1605 = vmatpush.msra.mxu0 %v386
    %1606 = vmatpush.msra.mxu0 %v382
    %1607 = vmatpush.msra.mxu0 %v378
    %1608 = vmatpush.msra.mxu0 %v374
    %1609 = vmatpush.msra.mxu0 %v370
    %1610 = vmatpush.msra.mxu0 %v366
    %1611 = vmatpush.msra.mxu0 %v362
    %1612 = vmatpush.msra.mxu0 %v358
    %1613 = vmatmul.f32.gmra.mxu0 %v1404
    %v1614 = vpop.f32.mrf.mxu0
    %v1615 = vadd.f32 0.0, %v1614
    %1616 = vdwg.mxu0
    %1617 = vmatpush.msra.mxu0 %v419
    %1618 = vmatpush.msra.mxu0 %v415
    %1619 = vmatpush.msra.mxu0 %v411
    %1620 = vmatpush.msra.mxu0 %v407
    %1621 = vmatpush.msra.mxu0 %v403
    %1622 = vmatpush.msra.mxu0 %v399
    %1623 = vmatpush.msra.mxu0 %v395
    %1624 = vmatpush.msra.mxu0 %v391
    %1625 = vmatpush.msra.mxu0 %v387
    %1626 = vmatpush.msra.mxu0 %v383
    %1627 = vmatpush.msra.mxu0 %v379
    %1628 = vmatpush.msra.mxu0 %v375
    %1629 = vmatpush.msra.mxu0 %v371
    %1630 = vmatpush.msra.mxu0 %v367
    %1631 = vmatpush.msra.mxu0 %v363
    %1632 = vmatpush.msra.mxu0 %v359
    %1633 = vmatmul.f32.gmra.mxu0 %v1404
    %v1634 = vpop.f32.mrf.mxu0
    %v1635 = vadd.f32 0.0, %v1634
    %1636 = vdwg.mxu0
    %1637 = vmatpush.msra.mxu0 %v352
    %1638 = vmatpush.msra.mxu0 %v348
    %1639 = vmatpush.msra.mxu0 %v344
    %1640 = vmatpush.msra.mxu0 %v340
    %1641 = vmatpush.msra.mxu0 %v336
    %1642 = vmatpush.msra.mxu0 %v332
    %1643 = vmatpush.msra.mxu0 %v328
    %1644 = vmatpush.msra.mxu0 %v324
    %1645 = vmatpush.msra.mxu0 %v320
    %1646 = vmatpush.msra.mxu0 %v316
    %1647 = vmatpush.msra.mxu0 %v312
    %1648 = vmatpush.msra.mxu0 %v308
    %1649 = vmatpush.msra.mxu0 %v304
    %1650 = vmatpush.msra.mxu0 %v300
    %1651 = vmatpush.msra.mxu0 %v296
    %1652 = vmatpush.msra.mxu0 %v292
    %1653 = vmatmul.f32.gmra.mxu0 %v1556
    %v1654 = vpop.f32.mrf.mxu0
    %v1655 = vadd.f32 %v1575, %v1654
    %1656 = vdwg.mxu0
    %1657 = vmatpush.msra.mxu0 %v353
    %1658 = vmatpush.msra.mxu0 %v349
    %1659 = vmatpush.msra.mxu0 %v345
    %1660 = vmatpush.msra.mxu0 %v341
    %1661 = vmatpush.msra.mxu0 %v337
    %1662 = vmatpush.msra.mxu0 %v333
    %1663 = vmatpush.msra.mxu0 %v329
    %1664 = vmatpush.msra.mxu0 %v325
    %1665 = vmatpush.msra.mxu0 %v321
    %1666 = vmatpush.msra.mxu0 %v317
    %1667 = vmatpush.msra.mxu0 %v313
    %1668 = vmatpush.msra.mxu0 %v309
    %1669 = vmatpush.msra.mxu0 %v305
    %1670 = vmatpush.msra.mxu0 %v301
    %1671 = vmatpush.msra.mxu0 %v297
    %1672 = vmatpush.msra.mxu0 %v293
    %1673 = vmatmul.f32.gmra.mxu0 %v1556
    %v1674 = vpop.f32.mrf.mxu0
    %v1675 = vadd.f32 %v1595, %v1674
    %1676 = vdwg.mxu0
    %1677 = vmatpush.msra.mxu0 %v354
    %1678 = vmatpush.msra.mxu0 %v350
    %1679 = vmatpush.msra.mxu0 %v346
    %1680 = vmatpush.msra.mxu0 %v342
    %1681 = vmatpush.msra.mxu0 %v338
    %1682 = vmatpush.msra.mxu0 %v334
    %1683 = vmatpush.msra.mxu0 %v330
    %1684 = vmatpush.msra.mxu0 %v326
    %1685 = vmatpush.msra.mxu0 %v322
    %1686 = vmatpush.msra.mxu0 %v318
    %1687 = vmatpush.msra.mxu0 %v314
    %1688 = vmatpush.msra.mxu0 %v310
    %1689 = vmatpush.msra.mxu0 %v306
    %1690 = vmatpush.msra.mxu0 %v302
    %1691 = vmatpush.msra.mxu0 %v298
    %1692 = vmatpush.msra.mxu0 %v294
    %1693 = vmatmul.f32.gmra.mxu0 %v1556
    %v1694 = vpop.f32.mrf.mxu0
    %v1695 = vadd.f32 %v1615, %v1694
    %1696 = vdwg.mxu0
    %1697 = vmatpush.msra.mxu0 %v355
    %1698 = vmatpush.msra.mxu0 %v351
    %1699 = vmatpush.msra.mxu0 %v347
    %1700 = vmatpush.msra.mxu0 %v343
    %1701 = vmatpush.msra.mxu0 %v339
    %1702 = vmatpush.msra.mxu0 %v335
    %1703 = vmatpush.msra.mxu0 %v331
    %1704 = vmatpush.msra.mxu0 %v327
    %1705 = vmatpush.msra.mxu0 %v323
    %1706 = vmatpush.msra.mxu0 %v319
    %1707 = vmatpush.msra.mxu0 %v315
    %1708 = vmatpush.msra.mxu0 %v311
    %1709 = vmatpush.msra.mxu0 %v307
    %1710 = vmatpush.msra.mxu0 %v303
    %1711 = vmatpush.msra.mxu0 %v299
    %1712 = vmatpush.msra.mxu0 %v295
    %1713 = vmatmul.f32.gmra.mxu0 %v1556
    %v1714 = vpop.f32.mrf.mxu0
    %v1715 = vadd.f32 %v1635, %v1714
    %1716 = vdwg.mxu0
    %v1717 = vadd.f32 %v1655, %v73
    %v1718 = vadd.f32 %v1675, %v74
    %v1719 = vadd.f32 %v1695, %v75
    %v1720 = vadd.f32 %v1715, %v76
    %v1721 = vxor.u32 %v1717, 2147483648
    %v1722 = vmul.f32 %v1721, 1.442695
    %v1723 = vpow.pop %v1722
    %v1724 = vadd.f32 %v1723, 1.0
    %v1725 = vrcp.pop %v1724
    %v1726 = vmul.f32 %v1724, %v1725
    %v1727 = vsub.f32 1.0, %v1726
    %v1728 = vmul.f32 %v1725, %v1727
    %v1729 = vadd.f32 %v1725, %v1728
    %vm1730 = vweird.f32 %v1724
    %vm1731 = vweird.f32 %v1725
    %vm1732 = vmor %vm1730, %vm1731
    %v1733 = vsel %vm1732, %v1725, %v1729
    %v1734 = vand.u32 2147483647, %v1724
    %vm1735 = vcmp.eq.f32.partialorder %v1734, 8.507059e+37
    %v1736 = vand.u32 %v1724, 2147483648
    %v1737 = vor.u32 1.1754944e-38, %v1736
    %v1738 = vsel %vm1735, %v1737, %v1733
    %v1739 = vmul.f32 1.0, %v1738
    %v1740 = vxor.u32 %v1718, 2147483648
    %v1741 = vmul.f32 %v1740, 1.442695
    %v1742 = vpow.pop %v1741
    %v1743 = vadd.f32 %v1742, 1.0
    %v1744 = vrcp.pop %v1743
    %v1745 = vmul.f32 %v1743, %v1744
    %v1746 = vsub.f32 1.0, %v1745
    %v1747 = vmul.f32 %v1744, %v1746
    %v1748 = vadd.f32 %v1744, %v1747
    %vm1749 = vweird.f32 %v1743
    %vm1750 = vweird.f32 %v1744
    %vm1751 = vmor %vm1749, %vm1750
    %v1752 = vsel %vm1751, %v1744, %v1748
    %v1753 = vand.u32 2147483647, %v1743
    %vm1754 = vcmp.eq.f32.partialorder %v1753, 8.507059e+37
    %v1755 = vand.u32 %v1743, 2147483648
    %v1756 = vor.u32 1.1754944e-38, %v1755
    %v1757 = vsel %vm1754, %v1756, %v1752
    %v1758 = vmul.f32 1.0, %v1757
    %v1759 = vtanh.pop %v1719
    %v1760 = vxor.u32 %v1720, 2147483648
    %v1761 = vmul.f32 %v1760, 1.442695
    %v1762 = vpow.pop %v1761
    %v1763 = vadd.f32 %v1762, 1.0
    %v1764 = vrcp.pop %v1763
    %v1765 = vmul.f32 %v1763, %v1764
    %v1766 = vsub.f32 1.0, %v1765
    %v1767 = vmul.f32 %v1764, %v1766
    %v1768 = vadd.f32 %v1764, %v1767
    %vm1769 = vweird.f32 %v1763
    %vm1770 = vweird.f32 %v1764
    %vm1771 = vmor %vm1769, %vm1770
    %v1772 = vsel %vm1771, %v1764, %v1768
    %v1773 = vand.u32 2147483647, %v1763
    %vm1774 = vcmp.eq.f32.partialorder %v1773, 8.507059e+37
    %v1775 = vand.u32 %v1763, 2147483648
    %v1776 = vor.u32 1.1754944e-38, %v1775
    %v1777 = vsel %vm1774, %v1776, %v1772
    %v1778 = vmul.f32 1.0, %v1777
    %v1779 = vmul.f32 %v1758, %v1402
    %v1780 = vmul.f32 %v1739, %v1759
    %v1781 = vadd.f32 %v1779, %v1780
    %v1782 = vtanh.pop %v1781
    %v1783 = vmul.f32 %v1778, %v1782
    %s1784 = scalar_lea.vmem %s0, 128
    %v1785 = vld [vmem:[%s1784] sm:$0xff]
    %v1786 = vld [vmem:[%s1784 + $0x8] sm:$0xff]
    %v1787 = vld [vmem:[%s1784 + $0x10] sm:$0xff]
    %v1788 = vld [vmem:[%s1784 + $0x18] sm:$0xff]
    %1789 = vmatpush.msra.mxu0 %v141
    %1790 = vmatpush.msra.mxu0 %v137
    %1791 = vmatpush.msra.mxu0 %v133
    %1792 = vmatpush.msra.mxu0 %v129
    %1793 = vmatpush.msra.mxu0 %v125
    %1794 = vmatpush.msra.mxu0 %v121
    %1795 = vmatpush.msra.mxu0 %v117
    %1796 = vmatpush.msra.mxu0 %v113
    %1797 = vmatpush.msra.mxu0 %v109
    %1798 = vmatpush.msra.mxu0 %v105
    %1799 = vmatpush.msra.mxu0 %v101
    %1800 = vmatpush.msra.mxu0 %v97
    %1801 = vmatpush.msra.mxu0 %v93
    %1802 = vmatpush.msra.mxu0 %v89
    %1803 = vmatpush.msra.mxu0 %v85
    %1804 = vmatpush.msra.mxu0 %v81
    %1805 = vmatmul.f32.gmra.mxu0 %v1556
    %v1806 = vpop.f32.mrf.mxu0
    %v1807 = vadd.f32 0.0, %v1806
    %1808 = vdwg.mxu0
    %1809 = vmatpush.msra.mxu0 %v142
    %1810 = vmatpush.msra.mxu0 %v138
    %1811 = vmatpush.msra.mxu0 %v134
    %1812 = vmatpush.msra.mxu0 %v130
    %1813 = vmatpush.msra.mxu0 %v126
    %1814 = vmatpush.msra.mxu0 %v122
    %1815 = vmatpush.msra.mxu0 %v118
    %1816 = vmatpush.msra.mxu0 %v114
    %1817 = vmatpush.msra.mxu0 %v110
    %1818 = vmatpush.msra.mxu0 %v106
    %1819 = vmatpush.msra.mxu0 %v102
    %1820 = vmatpush.msra.mxu0 %v98
    %1821 = vmatpush.msra.mxu0 %v94
    %1822 = vmatpush.msra.mxu0 %v90
    %1823 = vmatpush.msra.mxu0 %v86
    %1824 = vmatpush.msra.mxu0 %v82
    %1825 = vmatmul.f32.gmra.mxu0 %v1556
    %v1826 = vpop.f32.mrf.mxu0
    %v1827 = vadd.f32 0.0, %v1826
    %1828 = vdwg.mxu0
    %1829 = vmatpush.msra.mxu0 %v143
    %1830 = vmatpush.msra.mxu0 %v139
    %1831 = vmatpush.msra.mxu0 %v135
    %1832 = vmatpush.msra.mxu0 %v131
    %1833 = vmatpush.msra.mxu0 %v127
    %1834 = vmatpush.msra.mxu0 %v123
    %1835 = vmatpush.msra.mxu0 %v119
    %1836 = vmatpush.msra.mxu0 %v115
    %1837 = vmatpush.msra.mxu0 %v111
    %1838 = vmatpush.msra.mxu0 %v107
    %1839 = vmatpush.msra.mxu0 %v103
    %1840 = vmatpush.msra.mxu0 %v99
    %1841 = vmatpush.msra.mxu0 %v95
    %1842 = vmatpush.msra.mxu0 %v91
    %1843 = vmatpush.msra.mxu0 %v87
    %1844 = vmatpush.msra.mxu0 %v83
    %1845 = vmatmul.f32.gmra.mxu0 %v1556
    %v1846 = vpop.f32.mrf.mxu0
    %v1847 = vadd.f32 0.0, %v1846
    %1848 = vdwg.mxu0
    %1849 = vmatpush.msra.mxu0 %v144
    %1850 = vmatpush.msra.mxu0 %v140
    %1851 = vmatpush.msra.mxu0 %v136
    %1852 = vmatpush.msra.mxu0 %v132
    %1853 = vmatpush.msra.mxu0 %v128
    %1854 = vmatpush.msra.mxu0 %v124
    %1855 = vmatpush.msra.mxu0 %v120
    %1856 = vmatpush.msra.mxu0 %v116
    %1857 = vmatpush.msra.mxu0 %v112
    %1858 = vmatpush.msra.mxu0 %v108
    %1859 = vmatpush.msra.mxu0 %v104
    %1860 = vmatpush.msra.mxu0 %v100
    %1861 = vmatpush.msra.mxu0 %v96
    %1862 = vmatpush.msra.mxu0 %v92
    %1863 = vmatpush.msra.mxu0 %v88
    %1864 = vmatpush.msra.mxu0 %v84
    %1865 = vmatmul.f32.gmra.mxu0 %v1556
    %v1866 = vpop.f32.mrf.mxu0
    %v1867 = vadd.f32 0.0, %v1866
    %1868 = vdwg.mxu0
    %v1869 = vadd.f32 %v1785, %v1807
    %v1870 = vadd.f32 %v1786, %v1827
    %v1871 = vadd.f32 %v1787, %v1847
    %v1872 = vadd.f32 %v1788, %v1867
    %v1873 = vxor.u32 %v1869, 2147483648
    %v1874 = vmul.f32 %v1873, 1.442695
    %v1875 = vpow.pop %v1874
    %v1876 = vadd.f32 %v1875, 1.0
    %v1877 = vrcp.pop %v1876
    %v1878 = vmul.f32 %v1876, %v1877
    %v1879 = vsub.f32 1.0, %v1878
    %v1880 = vmul.f32 %v1877, %v1879
    %v1881 = vadd.f32 %v1877, %v1880
    %vm1882 = vweird.f32 %v1876
    %vm1883 = vweird.f32 %v1877
    %vm1884 = vmor %vm1882, %vm1883
    %v1885 = vsel %vm1884, %v1877, %v1881
    %v1886 = vand.u32 2147483647, %v1876
    %vm1887 = vcmp.eq.f32.partialorder %v1886, 8.507059e+37
    %v1888 = vand.u32 %v1876, 2147483648
    %v1889 = vor.u32 1.1754944e-38, %v1888
    %v1890 = vsel %vm1887, %v1889, %v1885
    %v1891 = vmul.f32 1.0, %v1890
    %v1892 = vxor.u32 %v1870, 2147483648
    %v1893 = vmul.f32 %v1892, 1.442695
    %v1894 = vpow.pop %v1893
    %v1895 = vadd.f32 %v1894, 1.0
    %v1896 = vrcp.pop %v1895
    %v1897 = vmul.f32 %v1895, %v1896
    %v1898 = vsub.f32 1.0, %v1897
    %v1899 = vmul.f32 %v1896, %v1898
    %v1900 = vadd.f32 %v1896, %v1899
    %vm1901 = vweird.f32 %v1895
    %vm1902 = vweird.f32 %v1896
    %vm1903 = vmor %vm1901, %vm1902
    %v1904 = vsel %vm1903, %v1896, %v1900
    %v1905 = vand.u32 2147483647, %v1895
    %vm1906 = vcmp.eq.f32.partialorder %v1905, 8.507059e+37
    %v1907 = vand.u32 %v1895, 2147483648
    %v1908 = vor.u32 1.1754944e-38, %v1907
    %v1909 = vsel %vm1906, %v1908, %v1904
    %v1910 = vmul.f32 1.0, %v1909
    %v1911 = vtanh.pop %v1871
    %v1912 = vxor.u32 %v1872, 2147483648
    %v1913 = vmul.f32 %v1912, 1.442695
    %v1914 = vpow.pop %v1913
    %v1915 = vadd.f32 %v1914, 1.0
    %v1916 = vrcp.pop %v1915
    %v1917 = vmul.f32 %v1915, %v1916
    %v1918 = vsub.f32 1.0, %v1917
    %v1919 = vmul.f32 %v1916, %v1918
    %v1920 = vadd.f32 %v1916, %v1919
    %vm1921 = vweird.f32 %v1915
    %vm1922 = vweird.f32 %v1916
    %vm1923 = vmor %vm1921, %vm1922
    %v1924 = vsel %vm1923, %v1916, %v1920
    %v1925 = vand.u32 2147483647, %v1915
    %vm1926 = vcmp.eq.f32.partialorder %v1925, 8.507059e+37
    %v1927 = vand.u32 %v1915, 2147483648
    %v1928 = vor.u32 1.1754944e-38, %v1927
    %v1929 = vsel %vm1926, %v1928, %v1924
    %v1930 = vmul.f32 1.0, %v1929
    %v1931 = vmul.f32 %v1910, %v1554
    %v1932 = vmul.f32 %v1891, %v1911
    %v1933 = vadd.f32 %v1931, %v1932
    %v1934 = vtanh.pop %v1933
    %v1935 = vmul.f32 %v1930, %v1934
    %1936 = vmatpush.msra.mxu0 %v416
    %1937 = vmatpush.msra.mxu0 %v412
    %1938 = vmatpush.msra.mxu0 %v408
    %1939 = vmatpush.msra.mxu0 %v404
    %1940 = vmatpush.msra.mxu0 %v400
    %1941 = vmatpush.msra.mxu0 %v396
    %1942 = vmatpush.msra.mxu0 %v392
    %1943 = vmatpush.msra.mxu0 %v388
    %1944 = vmatpush.msra.mxu0 %v384
    %1945 = vmatpush.msra.mxu0 %v380
    %1946 = vmatpush.msra.mxu0 %v376
    %1947 = vmatpush.msra.mxu0 %v372
    %1948 = vmatpush.msra.mxu0 %v368
    %1949 = vmatpush.msra.mxu0 %v364
    %1950 = vmatpush.msra.mxu0 %v360
    %1951 = vmatpush.msra.mxu0 %v356
    %1952 = vmatmul.f32.gmra.mxu0 %v1783
    %v1953 = vpop.f32.mrf.mxu0
    %v1954 = vadd.f32 0.0, %v1953
    %1955 = vdwg.mxu0
    %1956 = vmatpush.msra.mxu0 %v417
    %1957 = vmatpush.msra.mxu0 %v413
    %1958 = vmatpush.msra.mxu0 %v409
    %1959 = vmatpush.msra.mxu0 %v405
    %1960 = vmatpush.msra.mxu0 %v401
    %1961 = vmatpush.msra.mxu0 %v397
    %1962 = vmatpush.msra.mxu0 %v393
    %1963 = vmatpush.msra.mxu0 %v389
    %1964 = vmatpush.msra.mxu0 %v385
    %1965 = vmatpush.msra.mxu0 %v381
    %1966 = vmatpush.msra.mxu0 %v377
    %1967 = vmatpush.msra.mxu0 %v373
    %1968 = vmatpush.msra.mxu0 %v369
    %1969 = vmatpush.msra.mxu0 %v365
    %1970 = vmatpush.msra.mxu0 %v361
    %1971 = vmatpush.msra.mxu0 %v357
    %1972 = vmatmul.f32.gmra.mxu0 %v1783
    %v1973 = vpop.f32.mrf.mxu0
    %v1974 = vadd.f32 0.0, %v1973
    %1975 = vdwg.mxu0
    %1976 = vmatpush.msra.mxu0 %v418
    %1977 = vmatpush.msra.mxu0 %v414
    %1978 = vmatpush.msra.mxu0 %v410
    %1979 = vmatpush.msra.mxu0 %v406
    %1980 = vmatpush.msra.mxu0 %v402
    %1981 = vmatpush.msra.mxu0 %v398
    %1982 = vmatpush.msra.mxu0 %v394
    %1983 = vmatpush.msra.mxu0 %v390
    %1984 = vmatpush.msra.mxu0 %v386
    %1985 = vmatpush.msra.mxu0 %v382
    %1986 = vmatpush.msra.mxu0 %v378
    %1987 = vmatpush.msra.mxu0 %v374
    %1988 = vmatpush.msra.mxu0 %v370
    %1989 = vmatpush.msra.mxu0 %v366
    %1990 = vmatpush.msra.mxu0 %v362
    %1991 = vmatpush.msra.mxu0 %v358
    %1992 = vmatmul.f32.gmra.mxu0 %v1783
    %v1993 = vpop.f32.mrf.mxu0
    %v1994 = vadd.f32 0.0, %v1993
    %1995 = vdwg.mxu0
    %1996 = vmatpush.msra.mxu0 %v419
    %1997 = vmatpush.msra.mxu0 %v415
    %1998 = vmatpush.msra.mxu0 %v411
    %1999 = vmatpush.msra.mxu0 %v407
    %2000 = vmatpush.msra.mxu0 %v403
    %2001 = vmatpush.msra.mxu0 %v399
    %2002 = vmatpush.msra.mxu0 %v395
    %2003 = vmatpush.msra.mxu0 %v391
    %2004 = vmatpush.msra.mxu0 %v387
    %2005 = vmatpush.msra.mxu0 %v383
    %2006 = vmatpush.msra.mxu0 %v379
    %2007 = vmatpush.msra.mxu0 %v375
    %2008 = vmatpush.msra.mxu0 %v371
    %2009 = vmatpush.msra.mxu0 %v367
    %2010 = vmatpush.msra.mxu0 %v363
    %2011 = vmatpush.msra.mxu0 %v359
    %2012 = vmatmul.f32.gmra.mxu0 %v1783
    %v2013 = vpop.f32.mrf.mxu0
    %v2014 = vadd.f32 0.0, %v2013
    %2015 = vdwg.mxu0
    %2016 = vmatpush.msra.mxu0 %v352
    %2017 = vmatpush.msra.mxu0 %v348
    %2018 = vmatpush.msra.mxu0 %v344
    %2019 = vmatpush.msra.mxu0 %v340
    %2020 = vmatpush.msra.mxu0 %v336
    %2021 = vmatpush.msra.mxu0 %v332
    %2022 = vmatpush.msra.mxu0 %v328
    %2023 = vmatpush.msra.mxu0 %v324
    %2024 = vmatpush.msra.mxu0 %v320
    %2025 = vmatpush.msra.mxu0 %v316
    %2026 = vmatpush.msra.mxu0 %v312
    %2027 = vmatpush.msra.mxu0 %v308
    %2028 = vmatpush.msra.mxu0 %v304
    %2029 = vmatpush.msra.mxu0 %v300
    %2030 = vmatpush.msra.mxu0 %v296
    %2031 = vmatpush.msra.mxu0 %v292
    %2032 = vmatmul.f32.gmra.mxu0 %v1935
    %v2033 = vpop.f32.mrf.mxu0
    %v2034 = vadd.f32 %v1954, %v2033
    %2035 = vdwg.mxu0
    %2036 = vmatpush.msra.mxu0 %v353
    %2037 = vmatpush.msra.mxu0 %v349
    %2038 = vmatpush.msra.mxu0 %v345
    %2039 = vmatpush.msra.mxu0 %v341
    %2040 = vmatpush.msra.mxu0 %v337
    %2041 = vmatpush.msra.mxu0 %v333
    %2042 = vmatpush.msra.mxu0 %v329
    %2043 = vmatpush.msra.mxu0 %v325
    %2044 = vmatpush.msra.mxu0 %v321
    %2045 = vmatpush.msra.mxu0 %v317
    %2046 = vmatpush.msra.mxu0 %v313
    %2047 = vmatpush.msra.mxu0 %v309
    %2048 = vmatpush.msra.mxu0 %v305
    %2049 = vmatpush.msra.mxu0 %v301
    %2050 = vmatpush.msra.mxu0 %v297
    %2051 = vmatpush.msra.mxu0 %v293
    %2052 = vmatmul.f32.gmra.mxu0 %v1935
    %v2053 = vpop.f32.mrf.mxu0
    %v2054 = vadd.f32 %v1974, %v2053
    %2055 = vdwg.mxu0
    %2056 = vmatpush.msra.mxu0 %v354
    %2057 = vmatpush.msra.mxu0 %v350
    %2058 = vmatpush.msra.mxu0 %v346
    %2059 = vmatpush.msra.mxu0 %v342
    %2060 = vmatpush.msra.mxu0 %v338
    %2061 = vmatpush.msra.mxu0 %v334
    %2062 = vmatpush.msra.mxu0 %v330
    %2063 = vmatpush.msra.mxu0 %v326
    %2064 = vmatpush.msra.mxu0 %v322
    %2065 = vmatpush.msra.mxu0 %v318
    %2066 = vmatpush.msra.mxu0 %v314
    %2067 = vmatpush.msra.mxu0 %v310
    %2068 = vmatpush.msra.mxu0 %v306
    %2069 = vmatpush.msra.mxu0 %v302
    %2070 = vmatpush.msra.mxu0 %v298
    %2071 = vmatpush.msra.mxu0 %v294
    %2072 = vmatmul.f32.gmra.mxu0 %v1935
    %v2073 = vpop.f32.mrf.mxu0
    %v2074 = vadd.f32 %v1994, %v2073
    %2075 = vdwg.mxu0
    %2076 = vmatpush.msra.mxu0 %v355
    %2077 = vmatpush.msra.mxu0 %v351
    %2078 = vmatpush.msra.mxu0 %v347
    %2079 = vmatpush.msra.mxu0 %v343
    %2080 = vmatpush.msra.mxu0 %v339
    %2081 = vmatpush.msra.mxu0 %v335
    %2082 = vmatpush.msra.mxu0 %v331
    %2083 = vmatpush.msra.mxu0 %v327
    %2084 = vmatpush.msra.mxu0 %v323
    %2085 = vmatpush.msra.mxu0 %v319
    %2086 = vmatpush.msra.mxu0 %v315
    %2087 = vmatpush.msra.mxu0 %v311
    %2088 = vmatpush.msra.mxu0 %v307
    %2089 = vmatpush.msra.mxu0 %v303
    %2090 = vmatpush.msra.mxu0 %v299
    %2091 = vmatpush.msra.mxu0 %v295
    %2092 = vmatmul.f32.gmra.mxu0 %v1935
    %v2093 = vpop.f32.mrf.mxu0
    %v2094 = vadd.f32 %v2014, %v2093
    %2095 = vdwg.mxu0
    %v2096 = vadd.f32 %v2034, %v73
    %v2097 = vadd.f32 %v2054, %v74
    %v2098 = vadd.f32 %v2074, %v75
    %v2099 = vadd.f32 %v2094, %v76
    %v2100 = vxor.u32 %v2096, 2147483648
    %v2101 = vmul.f32 %v2100, 1.442695
    %v2102 = vpow.pop %v2101
    %v2103 = vadd.f32 %v2102, 1.0
    %v2104 = vrcp.pop %v2103
    %v2105 = vmul.f32 %v2103, %v2104
    %v2106 = vsub.f32 1.0, %v2105
    %v2107 = vmul.f32 %v2104, %v2106
    %v2108 = vadd.f32 %v2104, %v2107
    %vm2109 = vweird.f32 %v2103
    %vm2110 = vweird.f32 %v2104
    %vm2111 = vmor %vm2109, %vm2110
    %v2112 = vsel %vm2111, %v2104, %v2108
    %v2113 = vand.u32 2147483647, %v2103
    %vm2114 = vcmp.eq.f32.partialorder %v2113, 8.507059e+37
    %v2115 = vand.u32 %v2103, 2147483648
    %v2116 = vor.u32 1.1754944e-38, %v2115
    %v2117 = vsel %vm2114, %v2116, %v2112
    %v2118 = vmul.f32 1.0, %v2117
    %v2119 = vxor.u32 %v2097, 2147483648
    %v2120 = vmul.f32 %v2119, 1.442695
    %v2121 = vpow.pop %v2120
    %v2122 = vadd.f32 %v2121, 1.0
    %v2123 = vrcp.pop %v2122
    %v2124 = vmul.f32 %v2122, %v2123
    %v2125 = vsub.f32 1.0, %v2124
    %v2126 = vmul.f32 %v2123, %v2125
    %v2127 = vadd.f32 %v2123, %v2126
    %vm2128 = vweird.f32 %v2122
    %vm2129 = vweird.f32 %v2123
    %vm2130 = vmor %vm2128, %vm2129
    %v2131 = vsel %vm2130, %v2123, %v2127
    %v2132 = vand.u32 2147483647, %v2122
    %vm2133 = vcmp.eq.f32.partialorder %v2132, 8.507059e+37
    %v2134 = vand.u32 %v2122, 2147483648
    %v2135 = vor.u32 1.1754944e-38, %v2134
    %v2136 = vsel %vm2133, %v2135, %v2131
    %v2137 = vmul.f32 1.0, %v2136
    %v2138 = vtanh.pop %v2098
    %v2139 = vxor.u32 %v2099, 2147483648
    %v2140 = vmul.f32 %v2139, 1.442695
    %v2141 = vpow.pop %v2140
    %v2142 = vadd.f32 %v2141, 1.0
    %v2143 = vrcp.pop %v2142
    %v2144 = vmul.f32 %v2142, %v2143
    %v2145 = vsub.f32 1.0, %v2144
    %v2146 = vmul.f32 %v2143, %v2145
    %v2147 = vadd.f32 %v2143, %v2146
    %vm2148 = vweird.f32 %v2142
    %vm2149 = vweird.f32 %v2143
    %vm2150 = vmor %vm2148, %vm2149
    %v2151 = vsel %vm2150, %v2143, %v2147
    %v2152 = vand.u32 2147483647, %v2142
    %vm2153 = vcmp.eq.f32.partialorder %v2152, 8.507059e+37
    %v2154 = vand.u32 %v2142, 2147483648
    %v2155 = vor.u32 1.1754944e-38, %v2154
    %v2156 = vsel %vm2153, %v2155, %v2151
    %v2157 = vmul.f32 1.0, %v2156
    %v2158 = vmul.f32 %v2137, %v1781
    %v2159 = vmul.f32 %v2118, %v2138
    %v2160 = vadd.f32 %v2158, %v2159
    %v2161 = vtanh.pop %v2160
    %v2162 = vmul.f32 %v2157, %v2161
    %s2163 = scalar_lea.vmem %s0, 160
    %v2164 = vld [vmem:[%s2163] sm:$0xff]
    %v2165 = vld [vmem:[%s2163 + $0x8] sm:$0xff]
    %v2166 = vld [vmem:[%s2163 + $0x10] sm:$0xff]
    %v2167 = vld [vmem:[%s2163 + $0x18] sm:$0xff]
    %2168 = vmatpush.msra.mxu0 %v141
    %2169 = vmatpush.msra.mxu0 %v137
    %2170 = vmatpush.msra.mxu0 %v133
    %2171 = vmatpush.msra.mxu0 %v129
    %2172 = vmatpush.msra.mxu0 %v125
    %2173 = vmatpush.msra.mxu0 %v121
    %2174 = vmatpush.msra.mxu0 %v117
    %2175 = vmatpush.msra.mxu0 %v113
    %2176 = vmatpush.msra.mxu0 %v109
    %2177 = vmatpush.msra.mxu0 %v105
    %2178 = vmatpush.msra.mxu0 %v101
    %2179 = vmatpush.msra.mxu0 %v97
    %2180 = vmatpush.msra.mxu0 %v93
    %2181 = vmatpush.msra.mxu0 %v89
    %2182 = vmatpush.msra.mxu0 %v85
    %2183 = vmatpush.msra.mxu0 %v81
    %2184 = vmatmul.f32.gmra.mxu0 %v1935
    %v2185 = vpop.f32.mrf.mxu0
    %v2186 = vadd.f32 0.0, %v2185
    %2187 = vdwg.mxu0
    %2188 = vmatpush.msra.mxu0 %v142
    %2189 = vmatpush.msra.mxu0 %v138
    %2190 = vmatpush.msra.mxu0 %v134
    %2191 = vmatpush.msra.mxu0 %v130
    %2192 = vmatpush.msra.mxu0 %v126
    %2193 = vmatpush.msra.mxu0 %v122
    %2194 = vmatpush.msra.mxu0 %v118
    %2195 = vmatpush.msra.mxu0 %v114
    %2196 = vmatpush.msra.mxu0 %v110
    %2197 = vmatpush.msra.mxu0 %v106
    %2198 = vmatpush.msra.mxu0 %v102
    %2199 = vmatpush.msra.mxu0 %v98
    %2200 = vmatpush.msra.mxu0 %v94
    %2201 = vmatpush.msra.mxu0 %v90
    %2202 = vmatpush.msra.mxu0 %v86
    %2203 = vmatpush.msra.mxu0 %v82
    %2204 = vmatmul.f32.gmra.mxu0 %v1935
    %v2205 = vpop.f32.mrf.mxu0
    %v2206 = vadd.f32 0.0, %v2205
    %2207 = vdwg.mxu0
    %2208 = vmatpush.msra.mxu0 %v143
    %2209 = vmatpush.msra.mxu0 %v139
    %2210 = vmatpush.msra.mxu0 %v135
    %2211 = vmatpush.msra.mxu0 %v131
    %2212 = vmatpush.msra.mxu0 %v127
    %2213 = vmatpush.msra.mxu0 %v123
    %2214 = vmatpush.msra.mxu0 %v119
    %2215 = vmatpush.msra.mxu0 %v115
    %2216 = vmatpush.msra.mxu0 %v111
    %2217 = vmatpush.msra.mxu0 %v107
    %2218 = vmatpush.msra.mxu0 %v103
    %2219 = vmatpush.msra.mxu0 %v99
    %2220 = vmatpush.msra.mxu0 %v95
    %2221 = vmatpush.msra.mxu0 %v91
    %2222 = vmatpush.msra.mxu0 %v87
    %2223 = vmatpush.msra.mxu0 %v83
    %2224 = vmatmul.f32.gmra.mxu0 %v1935
    %v2225 = vpop.f32.mrf.mxu0
    %v2226 = vadd.f32 0.0, %v2225
    %2227 = vdwg.mxu0
    %2228 = vmatpush.msra.mxu0 %v144
    %2229 = vmatpush.msra.mxu0 %v140
    %2230 = vmatpush.msra.mxu0 %v136
    %2231 = vmatpush.msra.mxu0 %v132
    %2232 = vmatpush.msra.mxu0 %v128
    %2233 = vmatpush.msra.mxu0 %v124
    %2234 = vmatpush.msra.mxu0 %v120
    %2235 = vmatpush.msra.mxu0 %v116
    %2236 = vmatpush.msra.mxu0 %v112
    %2237 = vmatpush.msra.mxu0 %v108
    %2238 = vmatpush.msra.mxu0 %v104
    %2239 = vmatpush.msra.mxu0 %v100
    %2240 = vmatpush.msra.mxu0 %v96
    %2241 = vmatpush.msra.mxu0 %v92
    %2242 = vmatpush.msra.mxu0 %v88
    %2243 = vmatpush.msra.mxu0 %v84
    %2244 = vmatmul.f32.gmra.mxu0 %v1935
    %v2245 = vpop.f32.mrf.mxu0
    %v2246 = vadd.f32 0.0, %v2245
    %2247 = vdwg.mxu0
    %v2248 = vadd.f32 %v2164, %v2186
    %v2249 = vadd.f32 %v2165, %v2206
    %v2250 = vadd.f32 %v2166, %v2226
    %v2251 = vadd.f32 %v2167, %v2246
    %v2252 = vxor.u32 %v2248, 2147483648
    %v2253 = vmul.f32 %v2252, 1.442695
    %v2254 = vpow.pop %v2253
    %v2255 = vadd.f32 %v2254, 1.0
    %v2256 = vrcp.pop %v2255
    %v2257 = vmul.f32 %v2255, %v2256
    %v2258 = vsub.f32 1.0, %v2257
    %v2259 = vmul.f32 %v2256, %v2258
    %v2260 = vadd.f32 %v2256, %v2259
    %vm2261 = vweird.f32 %v2255
    %vm2262 = vweird.f32 %v2256
    %vm2263 = vmor %vm2261, %vm2262
    %v2264 = vsel %vm2263, %v2256, %v2260
    %v2265 = vand.u32 2147483647, %v2255
    %vm2266 = vcmp.eq.f32.partialorder %v2265, 8.507059e+37
    %v2267 = vand.u32 %v2255, 2147483648
    %v2268 = vor.u32 1.1754944e-38, %v2267
    %v2269 = vsel %vm2266, %v2268, %v2264
    %v2270 = vmul.f32 1.0, %v2269
    %v2271 = vxor.u32 %v2249, 2147483648
    %v2272 = vmul.f32 %v2271, 1.442695
    %v2273 = vpow.pop %v2272
    %v2274 = vadd.f32 %v2273, 1.0
    %v2275 = vrcp.pop %v2274
    %v2276 = vmul.f32 %v2274, %v2275
    %v2277 = vsub.f32 1.0, %v2276
    %v2278 = vmul.f32 %v2275, %v2277
    %v2279 = vadd.f32 %v2275, %v2278
    %vm2280 = vweird.f32 %v2274
    %vm2281 = vweird.f32 %v2275
    %vm2282 = vmor %vm2280, %vm2281
    %v2283 = vsel %vm2282, %v2275, %v2279
    %v2284 = vand.u32 2147483647, %v2274
    %vm2285 = vcmp.eq.f32.partialorder %v2284, 8.507059e+37
    %v2286 = vand.u32 %v2274, 2147483648
    %v2287 = vor.u32 1.1754944e-38, %v2286
    %v2288 = vsel %vm2285, %v2287, %v2283
    %v2289 = vmul.f32 1.0, %v2288
    %v2290 = vtanh.pop %v2250
    %v2291 = vxor.u32 %v2251, 2147483648
    %v2292 = vmul.f32 %v2291, 1.442695
    %v2293 = vpow.pop %v2292
    %v2294 = vadd.f32 %v2293, 1.0
    %v2295 = vrcp.pop %v2294
    %v2296 = vmul.f32 %v2294, %v2295
    %v2297 = vsub.f32 1.0, %v2296
    %v2298 = vmul.f32 %v2295, %v2297
    %v2299 = vadd.f32 %v2295, %v2298
    %vm2300 = vweird.f32 %v2294
    %vm2301 = vweird.f32 %v2295
    %vm2302 = vmor %vm2300, %vm2301
    %v2303 = vsel %vm2302, %v2295, %v2299
    %v2304 = vand.u32 2147483647, %v2294
    %vm2305 = vcmp.eq.f32.partialorder %v2304, 8.507059e+37
    %v2306 = vand.u32 %v2294, 2147483648
    %v2307 = vor.u32 1.1754944e-38, %v2306
    %v2308 = vsel %vm2305, %v2307, %v2303
    %v2309 = vmul.f32 1.0, %v2308
    %v2310 = vmul.f32 %v2289, %v1933
    %v2311 = vmul.f32 %v2270, %v2290
    %v2312 = vadd.f32 %v2310, %v2311
    %v2313 = vtanh.pop %v2312
    %v2314 = vmul.f32 %v2309, %v2313
    %2315 = vmatpush.msra.mxu0 %v416
    %2316 = vmatpush.msra.mxu0 %v412
    %2317 = vmatpush.msra.mxu0 %v408
    %2318 = vmatpush.msra.mxu0 %v404
    %2319 = vmatpush.msra.mxu0 %v400
    %2320 = vmatpush.msra.mxu0 %v396
    %2321 = vmatpush.msra.mxu0 %v392
    %2322 = vmatpush.msra.mxu0 %v388
    %2323 = vmatpush.msra.mxu0 %v384
    %2324 = vmatpush.msra.mxu0 %v380
    %2325 = vmatpush.msra.mxu0 %v376
    %2326 = vmatpush.msra.mxu0 %v372
    %2327 = vmatpush.msra.mxu0 %v368
    %2328 = vmatpush.msra.mxu0 %v364
    %2329 = vmatpush.msra.mxu0 %v360
    %2330 = vmatpush.msra.mxu0 %v356
    %2331 = vmatmul.f32.gmra.mxu0 %v2162
    %v2332 = vpop.f32.mrf.mxu0
    %v2333 = vadd.f32 0.0, %v2332
    %2334 = vdwg.mxu0
    %2335 = vmatpush.msra.mxu0 %v417
    %2336 = vmatpush.msra.mxu0 %v413
    %2337 = vmatpush.msra.mxu0 %v409
    %2338 = vmatpush.msra.mxu0 %v405
    %2339 = vmatpush.msra.mxu0 %v401
    %2340 = vmatpush.msra.mxu0 %v397
    %2341 = vmatpush.msra.mxu0 %v393
    %2342 = vmatpush.msra.mxu0 %v389
    %2343 = vmatpush.msra.mxu0 %v385
    %2344 = vmatpush.msra.mxu0 %v381
    %2345 = vmatpush.msra.mxu0 %v377
    %2346 = vmatpush.msra.mxu0 %v373
    %2347 = vmatpush.msra.mxu0 %v369
    %2348 = vmatpush.msra.mxu0 %v365
    %2349 = vmatpush.msra.mxu0 %v361
    %2350 = vmatpush.msra.mxu0 %v357
    %2351 = vmatmul.f32.gmra.mxu0 %v2162
    %v2352 = vpop.f32.mrf.mxu0
    %v2353 = vadd.f32 0.0, %v2352
    %2354 = vdwg.mxu0
    %2355 = vmatpush.msra.mxu0 %v418
    %2356 = vmatpush.msra.mxu0 %v414
    %2357 = vmatpush.msra.mxu0 %v410
    %2358 = vmatpush.msra.mxu0 %v406
    %2359 = vmatpush.msra.mxu0 %v402
    %2360 = vmatpush.msra.mxu0 %v398
    %2361 = vmatpush.msra.mxu0 %v394
    %2362 = vmatpush.msra.mxu0 %v390
    %2363 = vmatpush.msra.mxu0 %v386
    %2364 = vmatpush.msra.mxu0 %v382
    %2365 = vmatpush.msra.mxu0 %v378
    %2366 = vmatpush.msra.mxu0 %v374
    %2367 = vmatpush.msra.mxu0 %v370
    %2368 = vmatpush.msra.mxu0 %v366
    %2369 = vmatpush.msra.mxu0 %v362
    %2370 = vmatpush.msra.mxu0 %v358
    %2371 = vmatmul.f32.gmra.mxu0 %v2162
    %v2372 = vpop.f32.mrf.mxu0
    %v2373 = vadd.f32 0.0, %v2372
    %2374 = vdwg.mxu0
    %2375 = vmatpush.msra.mxu0 %v419
    %2376 = vmatpush.msra.mxu0 %v415
    %2377 = vmatpush.msra.mxu0 %v411
    %2378 = vmatpush.msra.mxu0 %v407
    %2379 = vmatpush.msra.mxu0 %v403
    %2380 = vmatpush.msra.mxu0 %v399
    %2381 = vmatpush.msra.mxu0 %v395
    %2382 = vmatpush.msra.mxu0 %v391
    %2383 = vmatpush.msra.mxu0 %v387
    %2384 = vmatpush.msra.mxu0 %v383
    %2385 = vmatpush.msra.mxu0 %v379
    %2386 = vmatpush.msra.mxu0 %v375
    %2387 = vmatpush.msra.mxu0 %v371
    %2388 = vmatpush.msra.mxu0 %v367
    %2389 = vmatpush.msra.mxu0 %v363
    %2390 = vmatpush.msra.mxu0 %v359
    %2391 = vmatmul.f32.gmra.mxu0 %v2162
    %v2392 = vpop.f32.mrf.mxu0
    %v2393 = vadd.f32 0.0, %v2392
    %2394 = vdwg.mxu0
    %2395 = vmatpush.msra.mxu0 %v352
    %2396 = vmatpush.msra.mxu0 %v348
    %2397 = vmatpush.msra.mxu0 %v344
    %2398 = vmatpush.msra.mxu0 %v340
    %2399 = vmatpush.msra.mxu0 %v336
    %2400 = vmatpush.msra.mxu0 %v332
    %2401 = vmatpush.msra.mxu0 %v328
    %2402 = vmatpush.msra.mxu0 %v324
    %2403 = vmatpush.msra.mxu0 %v320
    %2404 = vmatpush.msra.mxu0 %v316
    %2405 = vmatpush.msra.mxu0 %v312
    %2406 = vmatpush.msra.mxu0 %v308
    %2407 = vmatpush.msra.mxu0 %v304
    %2408 = vmatpush.msra.mxu0 %v300
    %2409 = vmatpush.msra.mxu0 %v296
    %2410 = vmatpush.msra.mxu0 %v292
    %2411 = vmatmul.f32.gmra.mxu0 %v2314
    %v2412 = vpop.f32.mrf.mxu0
    %v2413 = vadd.f32 %v2333, %v2412
    %2414 = vdwg.mxu0
    %2415 = vmatpush.msra.mxu0 %v353
    %2416 = vmatpush.msra.mxu0 %v349
    %2417 = vmatpush.msra.mxu0 %v345
    %2418 = vmatpush.msra.mxu0 %v341
    %2419 = vmatpush.msra.mxu0 %v337
    %2420 = vmatpush.msra.mxu0 %v333
    %2421 = vmatpush.msra.mxu0 %v329
    %2422 = vmatpush.msra.mxu0 %v325
    %2423 = vmatpush.msra.mxu0 %v321
    %2424 = vmatpush.msra.mxu0 %v317
    %2425 = vmatpush.msra.mxu0 %v313
    %2426 = vmatpush.msra.mxu0 %v309
    %2427 = vmatpush.msra.mxu0 %v305
    %2428 = vmatpush.msra.mxu0 %v301
    %2429 = vmatpush.msra.mxu0 %v297
    %2430 = vmatpush.msra.mxu0 %v293
    %2431 = vmatmul.f32.gmra.mxu0 %v2314
    %v2432 = vpop.f32.mrf.mxu0
    %v2433 = vadd.f32 %v2353, %v2432
    %2434 = vdwg.mxu0
    %2435 = vmatpush.msra.mxu0 %v354
    %2436 = vmatpush.msra.mxu0 %v350
    %2437 = vmatpush.msra.mxu0 %v346
    %2438 = vmatpush.msra.mxu0 %v342
    %2439 = vmatpush.msra.mxu0 %v338
    %2440 = vmatpush.msra.mxu0 %v334
    %2441 = vmatpush.msra.mxu0 %v330
    %2442 = vmatpush.msra.mxu0 %v326
    %2443 = vmatpush.msra.mxu0 %v322
    %2444 = vmatpush.msra.mxu0 %v318
    %2445 = vmatpush.msra.mxu0 %v314
    %2446 = vmatpush.msra.mxu0 %v310
    %2447 = vmatpush.msra.mxu0 %v306
    %2448 = vmatpush.msra.mxu0 %v302
    %2449 = vmatpush.msra.mxu0 %v298
    %2450 = vmatpush.msra.mxu0 %v294
    %2451 = vmatmul.f32.gmra.mxu0 %v2314
    %v2452 = vpop.f32.mrf.mxu0
    %v2453 = vadd.f32 %v2373, %v2452
    %2454 = vdwg.mxu0
    %2455 = vmatpush.msra.mxu0 %v355
    %2456 = vmatpush.msra.mxu0 %v351
    %2457 = vmatpush.msra.mxu0 %v347
    %2458 = vmatpush.msra.mxu0 %v343
    %2459 = vmatpush.msra.mxu0 %v339
    %2460 = vmatpush.msra.mxu0 %v335
    %2461 = vmatpush.msra.mxu0 %v331
    %2462 = vmatpush.msra.mxu0 %v327
    %2463 = vmatpush.msra.mxu0 %v323
    %2464 = vmatpush.msra.mxu0 %v319
    %2465 = vmatpush.msra.mxu0 %v315
    %2466 = vmatpush.msra.mxu0 %v311
    %2467 = vmatpush.msra.mxu0 %v307
    %2468 = vmatpush.msra.mxu0 %v303
    %2469 = vmatpush.msra.mxu0 %v299
    %2470 = vmatpush.msra.mxu0 %v295
    %2471 = vmatmul.f32.gmra.mxu0 %v2314
    %v2472 = vpop.f32.mrf.mxu0
    %v2473 = vadd.f32 %v2393, %v2472
    %2474 = vdwg.mxu0
    %v2475 = vadd.f32 %v2413, %v73
    %v2476 = vadd.f32 %v2433, %v74
    %v2477 = vadd.f32 %v2453, %v75
    %v2478 = vadd.f32 %v2473, %v76
    %v2479 = vxor.u32 %v2475, 2147483648
    %v2480 = vmul.f32 %v2479, 1.442695
    %v2481 = vpow.pop %v2480
    %v2482 = vadd.f32 %v2481, 1.0
    %v2483 = vrcp.pop %v2482
    %v2484 = vmul.f32 %v2482, %v2483
    %v2485 = vsub.f32 1.0, %v2484
    %v2486 = vmul.f32 %v2483, %v2485
    %v2487 = vadd.f32 %v2483, %v2486
    %vm2488 = vweird.f32 %v2482
    %vm2489 = vweird.f32 %v2483
    %vm2490 = vmor %vm2488, %vm2489
    %v2491 = vsel %vm2490, %v2483, %v2487
    %v2492 = vand.u32 2147483647, %v2482
    %vm2493 = vcmp.eq.f32.partialorder %v2492, 8.507059e+37
    %v2494 = vand.u32 %v2482, 2147483648
    %v2495 = vor.u32 1.1754944e-38, %v2494
    %v2496 = vsel %vm2493, %v2495, %v2491
    %v2497 = vmul.f32 1.0, %v2496
    %v2498 = vxor.u32 %v2476, 2147483648
    %v2499 = vmul.f32 %v2498, 1.442695
    %v2500 = vpow.pop %v2499
    %v2501 = vadd.f32 %v2500, 1.0
    %v2502 = vrcp.pop %v2501
    %v2503 = vmul.f32 %v2501, %v2502
    %v2504 = vsub.f32 1.0, %v2503
    %v2505 = vmul.f32 %v2502, %v2504
    %v2506 = vadd.f32 %v2502, %v2505
    %vm2507 = vweird.f32 %v2501
    %vm2508 = vweird.f32 %v2502
    %vm2509 = vmor %vm2507, %vm2508
    %v2510 = vsel %vm2509, %v2502, %v2506
    %v2511 = vand.u32 2147483647, %v2501
    %vm2512 = vcmp.eq.f32.partialorder %v2511, 8.507059e+37
    %v2513 = vand.u32 %v2501, 2147483648
    %v2514 = vor.u32 1.1754944e-38, %v2513
    %v2515 = vsel %vm2512, %v2514, %v2510
    %v2516 = vmul.f32 1.0, %v2515
    %v2517 = vtanh.pop %v2477
    %v2518 = vxor.u32 %v2478, 2147483648
    %v2519 = vmul.f32 %v2518, 1.442695
    %v2520 = vpow.pop %v2519
    %v2521 = vadd.f32 %v2520, 1.0
    %v2522 = vrcp.pop %v2521
    %v2523 = vmul.f32 %v2521, %v2522
    %v2524 = vsub.f32 1.0, %v2523
    %v2525 = vmul.f32 %v2522, %v2524
    %v2526 = vadd.f32 %v2522, %v2525
    %vm2527 = vweird.f32 %v2521
    %vm2528 = vweird.f32 %v2522
    %vm2529 = vmor %vm2527, %vm2528
    %v2530 = vsel %vm2529, %v2522, %v2526
    %v2531 = vand.u32 2147483647, %v2521
    %vm2532 = vcmp.eq.f32.partialorder %v2531, 8.507059e+37
    %v2533 = vand.u32 %v2521, 2147483648
    %v2534 = vor.u32 1.1754944e-38, %v2533
    %v2535 = vsel %vm2532, %v2534, %v2530
    %v2536 = vmul.f32 1.0, %v2535
    %v2537 = vmul.f32 %v2516, %v2160
    %v2538 = vmul.f32 %v2497, %v2517
    %v2539 = vadd.f32 %v2537, %v2538
    %v2540 = vtanh.pop %v2539
    %v2541 = vmul.f32 %v2536, %v2540
    %s2542 = scalar_lea.vmem %s0, 192
    %v2543 = vld [vmem:[%s2542] sm:$0xff]
    %v2544 = vld [vmem:[%s2542 + $0x8] sm:$0xff]
    %v2545 = vld [vmem:[%s2542 + $0x10] sm:$0xff]
    %v2546 = vld [vmem:[%s2542 + $0x18] sm:$0xff]
    %2547 = vmatpush.msra.mxu0 %v141
    %2548 = vmatpush.msra.mxu0 %v137
    %2549 = vmatpush.msra.mxu0 %v133
    %2550 = vmatpush.msra.mxu0 %v129
    %2551 = vmatpush.msra.mxu0 %v125
    %2552 = vmatpush.msra.mxu0 %v121
    %2553 = vmatpush.msra.mxu0 %v117
    %2554 = vmatpush.msra.mxu0 %v113
    %2555 = vmatpush.msra.mxu0 %v109
    %2556 = vmatpush.msra.mxu0 %v105
    %2557 = vmatpush.msra.mxu0 %v101
    %2558 = vmatpush.msra.mxu0 %v97
    %2559 = vmatpush.msra.mxu0 %v93
    %2560 = vmatpush.msra.mxu0 %v89
    %2561 = vmatpush.msra.mxu0 %v85
    %2562 = vmatpush.msra.mxu0 %v81
    %2563 = vmatmul.f32.gmra.mxu0 %v2314
    %v2564 = vpop.f32.mrf.mxu0
    %v2565 = vadd.f32 0.0, %v2564
    %2566 = vdwg.mxu0
    %2567 = vmatpush.msra.mxu0 %v142
    %2568 = vmatpush.msra.mxu0 %v138
    %2569 = vmatpush.msra.mxu0 %v134
    %2570 = vmatpush.msra.mxu0 %v130
    %2571 = vmatpush.msra.mxu0 %v126
    %2572 = vmatpush.msra.mxu0 %v122
    %2573 = vmatpush.msra.mxu0 %v118
    %2574 = vmatpush.msra.mxu0 %v114
    %2575 = vmatpush.msra.mxu0 %v110
    %2576 = vmatpush.msra.mxu0 %v106
    %2577 = vmatpush.msra.mxu0 %v102
    %2578 = vmatpush.msra.mxu0 %v98
    %2579 = vmatpush.msra.mxu0 %v94
    %2580 = vmatpush.msra.mxu0 %v90
    %2581 = vmatpush.msra.mxu0 %v86
    %2582 = vmatpush.msra.mxu0 %v82
    %2583 = vmatmul.f32.gmra.mxu0 %v2314
    %v2584 = vpop.f32.mrf.mxu0
    %v2585 = vadd.f32 0.0, %v2584
    %2586 = vdwg.mxu0
    %2587 = vmatpush.msra.mxu0 %v143
    %2588 = vmatpush.msra.mxu0 %v139
    %2589 = vmatpush.msra.mxu0 %v135
    %2590 = vmatpush.msra.mxu0 %v131
    %2591 = vmatpush.msra.mxu0 %v127
    %2592 = vmatpush.msra.mxu0 %v123
    %2593 = vmatpush.msra.mxu0 %v119
    %2594 = vmatpush.msra.mxu0 %v115
    %2595 = vmatpush.msra.mxu0 %v111
    %2596 = vmatpush.msra.mxu0 %v107
    %2597 = vmatpush.msra.mxu0 %v103
    %2598 = vmatpush.msra.mxu0 %v99
    %2599 = vmatpush.msra.mxu0 %v95
    %2600 = vmatpush.msra.mxu0 %v91
    %2601 = vmatpush.msra.mxu0 %v87
    %2602 = vmatpush.msra.mxu0 %v83
    %2603 = vmatmul.f32.gmra.mxu0 %v2314
    %v2604 = vpop.f32.mrf.mxu0
    %v2605 = vadd.f32 0.0, %v2604
    %2606 = vdwg.mxu0
    %2607 = vmatpush.msra.mxu0 %v144
    %2608 = vmatpush.msra.mxu0 %v140
    %2609 = vmatpush.msra.mxu0 %v136
    %2610 = vmatpush.msra.mxu0 %v132
    %2611 = vmatpush.msra.mxu0 %v128
    %2612 = vmatpush.msra.mxu0 %v124
    %2613 = vmatpush.msra.mxu0 %v120
    %2614 = vmatpush.msra.mxu0 %v116
    %2615 = vmatpush.msra.mxu0 %v112
    %2616 = vmatpush.msra.mxu0 %v108
    %2617 = vmatpush.msra.mxu0 %v104
    %2618 = vmatpush.msra.mxu0 %v100
    %2619 = vmatpush.msra.mxu0 %v96
    %2620 = vmatpush.msra.mxu0 %v92
    %2621 = vmatpush.msra.mxu0 %v88
    %2622 = vmatpush.msra.mxu0 %v84
    %2623 = vmatmul.f32.gmra.mxu0 %v2314
    %v2624 = vpop.f32.mrf.mxu0
    %v2625 = vadd.f32 0.0, %v2624
    %2626 = vdwg.mxu0
    %v2627 = vadd.f32 %v2543, %v2565
    %v2628 = vadd.f32 %v2544, %v2585
    %v2629 = vadd.f32 %v2545, %v2605
    %v2630 = vadd.f32 %v2546, %v2625
    %v2631 = vxor.u32 %v2627, 2147483648
    %v2632 = vmul.f32 %v2631, 1.442695
    %v2633 = vpow.pop %v2632
    %v2634 = vadd.f32 %v2633, 1.0
    %v2635 = vrcp.pop %v2634
    %v2636 = vmul.f32 %v2634, %v2635
    %v2637 = vsub.f32 1.0, %v2636
    %v2638 = vmul.f32 %v2635, %v2637
    %v2639 = vadd.f32 %v2635, %v2638
    %vm2640 = vweird.f32 %v2634
    %vm2641 = vweird.f32 %v2635
    %vm2642 = vmor %vm2640, %vm2641
    %v2643 = vsel %vm2642, %v2635, %v2639
    %v2644 = vand.u32 2147483647, %v2634
    %vm2645 = vcmp.eq.f32.partialorder %v2644, 8.507059e+37
    %v2646 = vand.u32 %v2634, 2147483648
    %v2647 = vor.u32 1.1754944e-38, %v2646
    %v2648 = vsel %vm2645, %v2647, %v2643
    %v2649 = vmul.f32 1.0, %v2648
    %v2650 = vxor.u32 %v2628, 2147483648
    %v2651 = vmul.f32 %v2650, 1.442695
    %v2652 = vpow.pop %v2651
    %v2653 = vadd.f32 %v2652, 1.0
    %v2654 = vrcp.pop %v2653
    %v2655 = vmul.f32 %v2653, %v2654
    %v2656 = vsub.f32 1.0, %v2655
    %v2657 = vmul.f32 %v2654, %v2656
    %v2658 = vadd.f32 %v2654, %v2657
    %vm2659 = vweird.f32 %v2653
    %vm2660 = vweird.f32 %v2654
    %vm2661 = vmor %vm2659, %vm2660
    %v2662 = vsel %vm2661, %v2654, %v2658
    %v2663 = vand.u32 2147483647, %v2653
    %vm2664 = vcmp.eq.f32.partialorder %v2663, 8.507059e+37
    %v2665 = vand.u32 %v2653, 2147483648
    %v2666 = vor.u32 1.1754944e-38, %v2665
    %v2667 = vsel %vm2664, %v2666, %v2662
    %v2668 = vmul.f32 1.0, %v2667
    %v2669 = vtanh.pop %v2629
    %v2670 = vxor.u32 %v2630, 2147483648
    %v2671 = vmul.f32 %v2670, 1.442695
    %v2672 = vpow.pop %v2671
    %v2673 = vadd.f32 %v2672, 1.0
    %v2674 = vrcp.pop %v2673
    %v2675 = vmul.f32 %v2673, %v2674
    %v2676 = vsub.f32 1.0, %v2675
    %v2677 = vmul.f32 %v2674, %v2676
    %v2678 = vadd.f32 %v2674, %v2677
    %vm2679 = vweird.f32 %v2673
    %vm2680 = vweird.f32 %v2674
    %vm2681 = vmor %vm2679, %vm2680
    %v2682 = vsel %vm2681, %v2674, %v2678
    %v2683 = vand.u32 2147483647, %v2673
    %vm2684 = vcmp.eq.f32.partialorder %v2683, 8.507059e+37
    %v2685 = vand.u32 %v2673, 2147483648
    %v2686 = vor.u32 1.1754944e-38, %v2685
    %v2687 = vsel %vm2684, %v2686, %v2682
    %v2688 = vmul.f32 1.0, %v2687
    %v2689 = vmul.f32 %v2668, %v2312
    %v2690 = vmul.f32 %v2649, %v2669
    %v2691 = vadd.f32 %v2689, %v2690
    %v2692 = vtanh.pop %v2691
    %v2693 = vmul.f32 %v2688, %v2692
    %2694 = vmatpush.msra.mxu0 %v416
    %2695 = vmatpush.msra.mxu0 %v412
    %2696 = vmatpush.msra.mxu0 %v408
    %2697 = vmatpush.msra.mxu0 %v404
    %2698 = vmatpush.msra.mxu0 %v400
    %2699 = vmatpush.msra.mxu0 %v396
    %2700 = vmatpush.msra.mxu0 %v392
    %2701 = vmatpush.msra.mxu0 %v388
    %2702 = vmatpush.msra.mxu0 %v384
    %2703 = vmatpush.msra.mxu0 %v380
    %2704 = vmatpush.msra.mxu0 %v376
    %2705 = vmatpush.msra.mxu0 %v372
    %2706 = vmatpush.msra.mxu0 %v368
    %2707 = vmatpush.msra.mxu0 %v364
    %2708 = vmatpush.msra.mxu0 %v360
    %2709 = vmatpush.msra.mxu0 %v356
    %2710 = vmatmul.f32.gmra.mxu0 %v2541
    %v2711 = vpop.f32.mrf.mxu0
    %v2712 = vadd.f32 0.0, %v2711
    %2713 = vdwg.mxu0
    %2714 = vmatpush.msra.mxu0 %v417
    %2715 = vmatpush.msra.mxu0 %v413
    %2716 = vmatpush.msra.mxu0 %v409
    %2717 = vmatpush.msra.mxu0 %v405
    %2718 = vmatpush.msra.mxu0 %v401
    %2719 = vmatpush.msra.mxu0 %v397
    %2720 = vmatpush.msra.mxu0 %v393
    %2721 = vmatpush.msra.mxu0 %v389
    %2722 = vmatpush.msra.mxu0 %v385
    %2723 = vmatpush.msra.mxu0 %v381
    %2724 = vmatpush.msra.mxu0 %v377
    %2725 = vmatpush.msra.mxu0 %v373
    %2726 = vmatpush.msra.mxu0 %v369
    %2727 = vmatpush.msra.mxu0 %v365
    %2728 = vmatpush.msra.mxu0 %v361
    %2729 = vmatpush.msra.mxu0 %v357
    %2730 = vmatmul.f32.gmra.mxu0 %v2541
    %v2731 = vpop.f32.mrf.mxu0
    %v2732 = vadd.f32 0.0, %v2731
    %2733 = vdwg.mxu0
    %2734 = vmatpush.msra.mxu0 %v418
    %2735 = vmatpush.msra.mxu0 %v414
    %2736 = vmatpush.msra.mxu0 %v410
    %2737 = vmatpush.msra.mxu0 %v406
    %2738 = vmatpush.msra.mxu0 %v402
    %2739 = vmatpush.msra.mxu0 %v398
    %2740 = vmatpush.msra.mxu0 %v394
    %2741 = vmatpush.msra.mxu0 %v390
    %2742 = vmatpush.msra.mxu0 %v386
    %2743 = vmatpush.msra.mxu0 %v382
    %2744 = vmatpush.msra.mxu0 %v378
    %2745 = vmatpush.msra.mxu0 %v374
    %2746 = vmatpush.msra.mxu0 %v370
    %2747 = vmatpush.msra.mxu0 %v366
    %2748 = vmatpush.msra.mxu0 %v362
    %2749 = vmatpush.msra.mxu0 %v358
    %2750 = vmatmul.f32.gmra.mxu0 %v2541
    %v2751 = vpop.f32.mrf.mxu0
    %v2752 = vadd.f32 0.0, %v2751
    %2753 = vdwg.mxu0
    %2754 = vmatpush.msra.mxu0 %v419
    %2755 = vmatpush.msra.mxu0 %v415
    %2756 = vmatpush.msra.mxu0 %v411
    %2757 = vmatpush.msra.mxu0 %v407
    %2758 = vmatpush.msra.mxu0 %v403
    %2759 = vmatpush.msra.mxu0 %v399
    %2760 = vmatpush.msra.mxu0 %v395
    %2761 = vmatpush.msra.mxu0 %v391
    %2762 = vmatpush.msra.mxu0 %v387
    %2763 = vmatpush.msra.mxu0 %v383
    %2764 = vmatpush.msra.mxu0 %v379
    %2765 = vmatpush.msra.mxu0 %v375
    %2766 = vmatpush.msra.mxu0 %v371
    %2767 = vmatpush.msra.mxu0 %v367
    %2768 = vmatpush.msra.mxu0 %v363
    %2769 = vmatpush.msra.mxu0 %v359
    %2770 = vmatmul.f32.gmra.mxu0 %v2541
    %v2771 = vpop.f32.mrf.mxu0
    %v2772 = vadd.f32 0.0, %v2771
    %2773 = vdwg.mxu0
    %2774 = vmatpush.msra.mxu0 %v352
    %2775 = vmatpush.msra.mxu0 %v348
    %2776 = vmatpush.msra.mxu0 %v344
    %2777 = vmatpush.msra.mxu0 %v340
    %2778 = vmatpush.msra.mxu0 %v336
    %2779 = vmatpush.msra.mxu0 %v332
    %2780 = vmatpush.msra.mxu0 %v328
    %2781 = vmatpush.msra.mxu0 %v324
    %2782 = vmatpush.msra.mxu0 %v320
    %2783 = vmatpush.msra.mxu0 %v316
    %2784 = vmatpush.msra.mxu0 %v312
    %2785 = vmatpush.msra.mxu0 %v308
    %2786 = vmatpush.msra.mxu0 %v304
    %2787 = vmatpush.msra.mxu0 %v300
    %2788 = vmatpush.msra.mxu0 %v296
    %2789 = vmatpush.msra.mxu0 %v292
    %2790 = vmatmul.f32.gmra.mxu0 %v2693
    %v2791 = vpop.f32.mrf.mxu0
    %v2792 = vadd.f32 %v2712, %v2791
    %2793 = vdwg.mxu0
    %2794 = vmatpush.msra.mxu0 %v353
    %2795 = vmatpush.msra.mxu0 %v349
    %2796 = vmatpush.msra.mxu0 %v345
    %2797 = vmatpush.msra.mxu0 %v341
    %2798 = vmatpush.msra.mxu0 %v337
    %2799 = vmatpush.msra.mxu0 %v333
    %2800 = vmatpush.msra.mxu0 %v329
    %2801 = vmatpush.msra.mxu0 %v325
    %2802 = vmatpush.msra.mxu0 %v321
    %2803 = vmatpush.msra.mxu0 %v317
    %2804 = vmatpush.msra.mxu0 %v313
    %2805 = vmatpush.msra.mxu0 %v309
    %2806 = vmatpush.msra.mxu0 %v305
    %2807 = vmatpush.msra.mxu0 %v301
    %2808 = vmatpush.msra.mxu0 %v297
    %2809 = vmatpush.msra.mxu0 %v293
    %2810 = vmatmul.f32.gmra.mxu0 %v2693
    %v2811 = vpop.f32.mrf.mxu0
    %v2812 = vadd.f32 %v2732, %v2811
    %2813 = vdwg.mxu0
    %2814 = vmatpush.msra.mxu0 %v354
    %2815 = vmatpush.msra.mxu0 %v350
    %2816 = vmatpush.msra.mxu0 %v346
    %2817 = vmatpush.msra.mxu0 %v342
    %2818 = vmatpush.msra.mxu0 %v338
    %2819 = vmatpush.msra.mxu0 %v334
    %2820 = vmatpush.msra.mxu0 %v330
    %2821 = vmatpush.msra.mxu0 %v326
    %2822 = vmatpush.msra.mxu0 %v322
    %2823 = vmatpush.msra.mxu0 %v318
    %2824 = vmatpush.msra.mxu0 %v314
    %2825 = vmatpush.msra.mxu0 %v310
    %2826 = vmatpush.msra.mxu0 %v306
    %2827 = vmatpush.msra.mxu0 %v302
    %2828 = vmatpush.msra.mxu0 %v298
    %2829 = vmatpush.msra.mxu0 %v294
    %2830 = vmatmul.f32.gmra.mxu0 %v2693
    %v2831 = vpop.f32.mrf.mxu0
    %v2832 = vadd.f32 %v2752, %v2831
    %2833 = vdwg.mxu0
    %2834 = vmatpush.msra.mxu0 %v355
    %2835 = vmatpush.msra.mxu0 %v351
    %2836 = vmatpush.msra.mxu0 %v347
    %2837 = vmatpush.msra.mxu0 %v343
    %2838 = vmatpush.msra.mxu0 %v339
    %2839 = vmatpush.msra.mxu0 %v335
    %2840 = vmatpush.msra.mxu0 %v331
    %2841 = vmatpush.msra.mxu0 %v327
    %2842 = vmatpush.msra.mxu0 %v323
    %2843 = vmatpush.msra.mxu0 %v319
    %2844 = vmatpush.msra.mxu0 %v315
    %2845 = vmatpush.msra.mxu0 %v311
    %2846 = vmatpush.msra.mxu0 %v307
    %2847 = vmatpush.msra.mxu0 %v303
    %2848 = vmatpush.msra.mxu0 %v299
    %2849 = vmatpush.msra.mxu0 %v295
    %2850 = vmatmul.f32.gmra.mxu0 %v2693
    %v2851 = vpop.f32.mrf.mxu0
    %v2852 = vadd.f32 %v2772, %v2851
    %2853 = vdwg.mxu0
    %v2854 = vadd.f32 %v2792, %v73
    %v2855 = vadd.f32 %v2812, %v74
    %v2856 = vadd.f32 %v2832, %v75
    %v2857 = vadd.f32 %v2852, %v76
    %v2858 = vxor.u32 %v2854, 2147483648
    %v2859 = vmul.f32 %v2858, 1.442695
    %v2860 = vpow.pop %v2859
    %v2861 = vadd.f32 %v2860, 1.0
    %v2862 = vrcp.pop %v2861
    %v2863 = vmul.f32 %v2861, %v2862
    %v2864 = vsub.f32 1.0, %v2863
    %v2865 = vmul.f32 %v2862, %v2864
    %v2866 = vadd.f32 %v2862, %v2865
    %vm2867 = vweird.f32 %v2861
    %vm2868 = vweird.f32 %v2862
    %vm2869 = vmor %vm2867, %vm2868
    %v2870 = vsel %vm2869, %v2862, %v2866
    %v2871 = vand.u32 2147483647, %v2861
    %vm2872 = vcmp.eq.f32.partialorder %v2871, 8.507059e+37
    %v2873 = vand.u32 %v2861, 2147483648
    %v2874 = vor.u32 1.1754944e-38, %v2873
    %v2875 = vsel %vm2872, %v2874, %v2870
    %v2876 = vmul.f32 1.0, %v2875
    %v2877 = vxor.u32 %v2855, 2147483648
    %v2878 = vmul.f32 %v2877, 1.442695
    %v2879 = vpow.pop %v2878
    %v2880 = vadd.f32 %v2879, 1.0
    %v2881 = vrcp.pop %v2880
    %v2882 = vmul.f32 %v2880, %v2881
    %v2883 = vsub.f32 1.0, %v2882
    %v2884 = vmul.f32 %v2881, %v2883
    %v2885 = vadd.f32 %v2881, %v2884
    %vm2886 = vweird.f32 %v2880
    %vm2887 = vweird.f32 %v2881
    %vm2888 = vmor %vm2886, %vm2887
    %v2889 = vsel %vm2888, %v2881, %v2885
    %v2890 = vand.u32 2147483647, %v2880
    %vm2891 = vcmp.eq.f32.partialorder %v2890, 8.507059e+37
    %v2892 = vand.u32 %v2880, 2147483648
    %v2893 = vor.u32 1.1754944e-38, %v2892
    %v2894 = vsel %vm2891, %v2893, %v2889
    %v2895 = vmul.f32 1.0, %v2894
    %v2896 = vtanh.pop %v2856
    %v2897 = vxor.u32 %v2857, 2147483648
    %v2898 = vmul.f32 %v2897, 1.442695
    %v2899 = vpow.pop %v2898
    %v2900 = vadd.f32 %v2899, 1.0
    %v2901 = vrcp.pop %v2900
    %v2902 = vmul.f32 %v2900, %v2901
    %v2903 = vsub.f32 1.0, %v2902
    %v2904 = vmul.f32 %v2901, %v2903
    %v2905 = vadd.f32 %v2901, %v2904
    %vm2906 = vweird.f32 %v2900
    %vm2907 = vweird.f32 %v2901
    %vm2908 = vmor %vm2906, %vm2907
    %v2909 = vsel %vm2908, %v2901, %v2905
    %v2910 = vand.u32 2147483647, %v2900
    %vm2911 = vcmp.eq.f32.partialorder %v2910, 8.507059e+37
    %v2912 = vand.u32 %v2900, 2147483648
    %v2913 = vor.u32 1.1754944e-38, %v2912
    %v2914 = vsel %vm2911, %v2913, %v2909
    %v2915 = vmul.f32 1.0, %v2914
    %v2916 = vmul.f32 %v2895, %v2539
    %v2917 = vmul.f32 %v2876, %v2896
    %v2918 = vadd.f32 %v2916, %v2917
    %v2919 = vtanh.pop %v2918
    %v2920 = vmul.f32 %v2915, %v2919
    %s2921 = scalar_lea.vmem %s0, 224
    %v2922 = vld [vmem:[%s2921] sm:$0xff]
    %v2923 = vld [vmem:[%s2921 + $0x8] sm:$0xff]
    %v2924 = vld [vmem:[%s2921 + $0x10] sm:$0xff]
    %v2925 = vld [vmem:[%s2921 + $0x18] sm:$0xff]
    %2926 = vmatpush.msra.mxu0 %v141
    %2927 = vmatpush.msra.mxu0 %v137
    %2928 = vmatpush.msra.mxu0 %v133
    %2929 = vmatpush.msra.mxu0 %v129
    %2930 = vmatpush.msra.mxu0 %v125
    %2931 = vmatpush.msra.mxu0 %v121
    %2932 = vmatpush.msra.mxu0 %v117
    %2933 = vmatpush.msra.mxu0 %v113
    %2934 = vmatpush.msra.mxu0 %v109
    %2935 = vmatpush.msra.mxu0 %v105
    %2936 = vmatpush.msra.mxu0 %v101
    %2937 = vmatpush.msra.mxu0 %v97
    %2938 = vmatpush.msra.mxu0 %v93
    %2939 = vmatpush.msra.mxu0 %v89
    %2940 = vmatpush.msra.mxu0 %v85
    %2941 = vmatpush.msra.mxu0 %v81
    %2942 = vmatmul.f32.gmra.mxu0 %v2693
    %v2943 = vpop.f32.mrf.mxu0
    %v2944 = vadd.f32 0.0, %v2943
    %2945 = vdwg.mxu0
    %2946 = vmatpush.msra.mxu0 %v142
    %2947 = vmatpush.msra.mxu0 %v138
    %2948 = vmatpush.msra.mxu0 %v134
    %2949 = vmatpush.msra.mxu0 %v130
    %2950 = vmatpush.msra.mxu0 %v126
    %2951 = vmatpush.msra.mxu0 %v122
    %2952 = vmatpush.msra.mxu0 %v118
    %2953 = vmatpush.msra.mxu0 %v114
    %2954 = vmatpush.msra.mxu0 %v110
    %2955 = vmatpush.msra.mxu0 %v106
    %2956 = vmatpush.msra.mxu0 %v102
    %2957 = vmatpush.msra.mxu0 %v98
    %2958 = vmatpush.msra.mxu0 %v94
    %2959 = vmatpush.msra.mxu0 %v90
    %2960 = vmatpush.msra.mxu0 %v86
    %2961 = vmatpush.msra.mxu0 %v82
    %2962 = vmatmul.f32.gmra.mxu0 %v2693
    %v2963 = vpop.f32.mrf.mxu0
    %v2964 = vadd.f32 0.0, %v2963
    %2965 = vdwg.mxu0
    %2966 = vmatpush.msra.mxu0 %v143
    %2967 = vmatpush.msra.mxu0 %v139
    %2968 = vmatpush.msra.mxu0 %v135
    %2969 = vmatpush.msra.mxu0 %v131
    %2970 = vmatpush.msra.mxu0 %v127
    %2971 = vmatpush.msra.mxu0 %v123
    %2972 = vmatpush.msra.mxu0 %v119
    %2973 = vmatpush.msra.mxu0 %v115
    %2974 = vmatpush.msra.mxu0 %v111
    %2975 = vmatpush.msra.mxu0 %v107
    %2976 = vmatpush.msra.mxu0 %v103
    %2977 = vmatpush.msra.mxu0 %v99
    %2978 = vmatpush.msra.mxu0 %v95
    %2979 = vmatpush.msra.mxu0 %v91
    %2980 = vmatpush.msra.mxu0 %v87
    %2981 = vmatpush.msra.mxu0 %v83
    %2982 = vmatmul.f32.gmra.mxu0 %v2693
    %v2983 = vpop.f32.mrf.mxu0
    %v2984 = vadd.f32 0.0, %v2983
    %2985 = vdwg.mxu0
    %2986 = vmatpush.msra.mxu0 %v144
    %2987 = vmatpush.msra.mxu0 %v140
    %2988 = vmatpush.msra.mxu0 %v136
    %2989 = vmatpush.msra.mxu0 %v132
    %2990 = vmatpush.msra.mxu0 %v128
    %2991 = vmatpush.msra.mxu0 %v124
    %2992 = vmatpush.msra.mxu0 %v120
    %2993 = vmatpush.msra.mxu0 %v116
    %2994 = vmatpush.msra.mxu0 %v112
    %2995 = vmatpush.msra.mxu0 %v108
    %2996 = vmatpush.msra.mxu0 %v104
    %2997 = vmatpush.msra.mxu0 %v100
    %2998 = vmatpush.msra.mxu0 %v96
    %2999 = vmatpush.msra.mxu0 %v92
    %3000 = vmatpush.msra.mxu0 %v88
    %3001 = vmatpush.msra.mxu0 %v84
    %3002 = vmatmul.f32.gmra.mxu0 %v2693
    %v3003 = vpop.f32.mrf.mxu0
    %v3004 = vadd.f32 0.0, %v3003
    %3005 = vdwg.mxu0
    %v3006 = vadd.f32 %v2922, %v2944
    %v3007 = vadd.f32 %v2923, %v2964
    %v3008 = vadd.f32 %v2924, %v2984
    %v3009 = vadd.f32 %v2925, %v3004
    %v3010 = vxor.u32 %v3006, 2147483648
    %v3011 = vmul.f32 %v3010, 1.442695
    %v3012 = vpow.pop %v3011
    %v3013 = vadd.f32 %v3012, 1.0
    %v3014 = vrcp.pop %v3013
    %v3015 = vmul.f32 %v3013, %v3014
    %v3016 = vsub.f32 1.0, %v3015
    %v3017 = vmul.f32 %v3014, %v3016
    %v3018 = vadd.f32 %v3014, %v3017
    %vm3019 = vweird.f32 %v3013
    %vm3020 = vweird.f32 %v3014
    %vm3021 = vmor %vm3019, %vm3020
    %v3022 = vsel %vm3021, %v3014, %v3018
    %v3023 = vand.u32 2147483647, %v3013
    %vm3024 = vcmp.eq.f32.partialorder %v3023, 8.507059e+37
    %v3025 = vand.u32 %v3013, 2147483648
    %v3026 = vor.u32 1.1754944e-38, %v3025
    %v3027 = vsel %vm3024, %v3026, %v3022
    %v3028 = vmul.f32 1.0, %v3027
    %v3029 = vxor.u32 %v3007, 2147483648
    %v3030 = vmul.f32 %v3029, 1.442695
    %v3031 = vpow.pop %v3030
    %v3032 = vadd.f32 %v3031, 1.0
    %v3033 = vrcp.pop %v3032
    %v3034 = vmul.f32 %v3032, %v3033
    %v3035 = vsub.f32 1.0, %v3034
    %v3036 = vmul.f32 %v3033, %v3035
    %v3037 = vadd.f32 %v3033, %v3036
    %vm3038 = vweird.f32 %v3032
    %vm3039 = vweird.f32 %v3033
    %vm3040 = vmor %vm3038, %vm3039
    %v3041 = vsel %vm3040, %v3033, %v3037
    %v3042 = vand.u32 2147483647, %v3032
    %vm3043 = vcmp.eq.f32.partialorder %v3042, 8.507059e+37
    %v3044 = vand.u32 %v3032, 2147483648
    %v3045 = vor.u32 1.1754944e-38, %v3044
    %v3046 = vsel %vm3043, %v3045, %v3041
    %v3047 = vmul.f32 1.0, %v3046
    %v3048 = vtanh.pop %v3008
    %v3049 = vxor.u32 %v3009, 2147483648
    %v3050 = vmul.f32 %v3049, 1.442695
    %v3051 = vpow.pop %v3050
    %v3052 = vadd.f32 %v3051, 1.0
    %v3053 = vrcp.pop %v3052
    %v3054 = vmul.f32 %v3052, %v3053
    %v3055 = vsub.f32 1.0, %v3054
    %v3056 = vmul.f32 %v3053, %v3055
    %v3057 = vadd.f32 %v3053, %v3056
    %vm3058 = vweird.f32 %v3052
    %vm3059 = vweird.f32 %v3053
    %vm3060 = vmor %vm3058, %vm3059
    %v3061 = vsel %vm3060, %v3053, %v3057
    %v3062 = vand.u32 2147483647, %v3052
    %vm3063 = vcmp.eq.f32.partialorder %v3062, 8.507059e+37
    %v3064 = vand.u32 %v3052, 2147483648
    %v3065 = vor.u32 1.1754944e-38, %v3064
    %v3066 = vsel %vm3063, %v3065, %v3061
    %v3067 = vmul.f32 1.0, %v3066
    %v3068 = vmul.f32 %v3047, %v2691
    %v3069 = vmul.f32 %v3028, %v3048
    %v3070 = vadd.f32 %v3068, %v3069
    %v3071 = vtanh.pop %v3070
    %v3072 = vmul.f32 %v3067, %v3071
    %3073 = vmatpush.msra.mxu0 %v416
    %3074 = vmatpush.msra.mxu0 %v412
    %3075 = vmatpush.msra.mxu0 %v408
    %3076 = vmatpush.msra.mxu0 %v404
    %3077 = vmatpush.msra.mxu0 %v400
    %3078 = vmatpush.msra.mxu0 %v396
    %3079 = vmatpush.msra.mxu0 %v392
    %3080 = vmatpush.msra.mxu0 %v388
    %3081 = vmatpush.msra.mxu0 %v384
    %3082 = vmatpush.msra.mxu0 %v380
    %3083 = vmatpush.msra.mxu0 %v376
    %3084 = vmatpush.msra.mxu0 %v372
    %3085 = vmatpush.msra.mxu0 %v368
    %3086 = vmatpush.msra.mxu0 %v364
    %3087 = vmatpush.msra.mxu0 %v360
    %3088 = vmatpush.msra.mxu0 %v356
    %3089 = vmatmul.f32.gmra.mxu0 %v2920
    %v3090 = vpop.f32.mrf.mxu0
    %v3091 = vadd.f32 0.0, %v3090
    %3092 = vdwg.mxu0
    %3093 = vmatpush.msra.mxu0 %v417
    %3094 = vmatpush.msra.mxu0 %v413
    %3095 = vmatpush.msra.mxu0 %v409
    %3096 = vmatpush.msra.mxu0 %v405
    %3097 = vmatpush.msra.mxu0 %v401
    %3098 = vmatpush.msra.mxu0 %v397
    %3099 = vmatpush.msra.mxu0 %v393
    %3100 = vmatpush.msra.mxu0 %v389
    %3101 = vmatpush.msra.mxu0 %v385
    %3102 = vmatpush.msra.mxu0 %v381
    %3103 = vmatpush.msra.mxu0 %v377
    %3104 = vmatpush.msra.mxu0 %v373
    %3105 = vmatpush.msra.mxu0 %v369
    %3106 = vmatpush.msra.mxu0 %v365
    %3107 = vmatpush.msra.mxu0 %v361
    %3108 = vmatpush.msra.mxu0 %v357
    %3109 = vmatmul.f32.gmra.mxu0 %v2920
    %v3110 = vpop.f32.mrf.mxu0
    %v3111 = vadd.f32 0.0, %v3110
    %3112 = vdwg.mxu0
    %3113 = vmatpush.msra.mxu0 %v418
    %3114 = vmatpush.msra.mxu0 %v414
    %3115 = vmatpush.msra.mxu0 %v410
    %3116 = vmatpush.msra.mxu0 %v406
    %3117 = vmatpush.msra.mxu0 %v402
    %3118 = vmatpush.msra.mxu0 %v398
    %3119 = vmatpush.msra.mxu0 %v394
    %3120 = vmatpush.msra.mxu0 %v390
    %3121 = vmatpush.msra.mxu0 %v386
    %3122 = vmatpush.msra.mxu0 %v382
    %3123 = vmatpush.msra.mxu0 %v378
    %3124 = vmatpush.msra.mxu0 %v374
    %3125 = vmatpush.msra.mxu0 %v370
    %3126 = vmatpush.msra.mxu0 %v366
    %3127 = vmatpush.msra.mxu0 %v362
    %3128 = vmatpush.msra.mxu0 %v358
    %3129 = vmatmul.f32.gmra.mxu0 %v2920
    %v3130 = vpop.f32.mrf.mxu0
    %v3131 = vadd.f32 0.0, %v3130
    %3132 = vdwg.mxu0
    %3133 = vmatpush.msra.mxu0 %v419
    %3134 = vmatpush.msra.mxu0 %v415
    %3135 = vmatpush.msra.mxu0 %v411
    %3136 = vmatpush.msra.mxu0 %v407
    %3137 = vmatpush.msra.mxu0 %v403
    %3138 = vmatpush.msra.mxu0 %v399
    %3139 = vmatpush.msra.mxu0 %v395
    %3140 = vmatpush.msra.mxu0 %v391
    %3141 = vmatpush.msra.mxu0 %v387
    %3142 = vmatpush.msra.mxu0 %v383
    %3143 = vmatpush.msra.mxu0 %v379
    %3144 = vmatpush.msra.mxu0 %v375
    %3145 = vmatpush.msra.mxu0 %v371
    %3146 = vmatpush.msra.mxu0 %v367
    %3147 = vmatpush.msra.mxu0 %v363
    %3148 = vmatpush.msra.mxu0 %v359
    %3149 = vmatmul.f32.gmra.mxu0 %v2920
    %v3150 = vpop.f32.mrf.mxu0
    %v3151 = vadd.f32 0.0, %v3150
    %3152 = vdwg.mxu0
    %3153 = vmatpush.msra.mxu0 %v352
    %3154 = vmatpush.msra.mxu0 %v348
    %3155 = vmatpush.msra.mxu0 %v344
    %3156 = vmatpush.msra.mxu0 %v340
    %3157 = vmatpush.msra.mxu0 %v336
    %3158 = vmatpush.msra.mxu0 %v332
    %3159 = vmatpush.msra.mxu0 %v328
    %3160 = vmatpush.msra.mxu0 %v324
    %3161 = vmatpush.msra.mxu0 %v320
    %3162 = vmatpush.msra.mxu0 %v316
    %3163 = vmatpush.msra.mxu0 %v312
    %3164 = vmatpush.msra.mxu0 %v308
    %3165 = vmatpush.msra.mxu0 %v304
    %3166 = vmatpush.msra.mxu0 %v300
    %3167 = vmatpush.msra.mxu0 %v296
    %3168 = vmatpush.msra.mxu0 %v292
    %3169 = vmatmul.f32.gmra.mxu0 %v3072
    %v3170 = vpop.f32.mrf.mxu0
    %v3171 = vadd.f32 %v3091, %v3170
    %3172 = vdwg.mxu0
    %3173 = vmatpush.msra.mxu0 %v353
    %3174 = vmatpush.msra.mxu0 %v349
    %3175 = vmatpush.msra.mxu0 %v345
    %3176 = vmatpush.msra.mxu0 %v341
    %3177 = vmatpush.msra.mxu0 %v337
    %3178 = vmatpush.msra.mxu0 %v333
    %3179 = vmatpush.msra.mxu0 %v329
    %3180 = vmatpush.msra.mxu0 %v325
    %3181 = vmatpush.msra.mxu0 %v321
    %3182 = vmatpush.msra.mxu0 %v317
    %3183 = vmatpush.msra.mxu0 %v313
    %3184 = vmatpush.msra.mxu0 %v309
    %3185 = vmatpush.msra.mxu0 %v305
    %3186 = vmatpush.msra.mxu0 %v301
    %3187 = vmatpush.msra.mxu0 %v297
    %3188 = vmatpush.msra.mxu0 %v293
    %3189 = vmatmul.f32.gmra.mxu0 %v3072
    %v3190 = vpop.f32.mrf.mxu0
    %v3191 = vadd.f32 %v3111, %v3190
    %3192 = vdwg.mxu0
    %3193 = vmatpush.msra.mxu0 %v354
    %3194 = vmatpush.msra.mxu0 %v350
    %3195 = vmatpush.msra.mxu0 %v346
    %3196 = vmatpush.msra.mxu0 %v342
    %3197 = vmatpush.msra.mxu0 %v338
    %3198 = vmatpush.msra.mxu0 %v334
    %3199 = vmatpush.msra.mxu0 %v330
    %3200 = vmatpush.msra.mxu0 %v326
    %3201 = vmatpush.msra.mxu0 %v322
    %3202 = vmatpush.msra.mxu0 %v318
    %3203 = vmatpush.msra.mxu0 %v314
    %3204 = vmatpush.msra.mxu0 %v310
    %3205 = vmatpush.msra.mxu0 %v306
    %3206 = vmatpush.msra.mxu0 %v302
    %3207 = vmatpush.msra.mxu0 %v298
    %3208 = vmatpush.msra.mxu0 %v294
    %3209 = vmatmul.f32.gmra.mxu0 %v3072
    %v3210 = vpop.f32.mrf.mxu0
    %v3211 = vadd.f32 %v3131, %v3210
    %3212 = vdwg.mxu0
    %3213 = vmatpush.msra.mxu0 %v355
    %3214 = vmatpush.msra.mxu0 %v351
    %3215 = vmatpush.msra.mxu0 %v347
    %3216 = vmatpush.msra.mxu0 %v343
    %3217 = vmatpush.msra.mxu0 %v339
    %3218 = vmatpush.msra.mxu0 %v335
    %3219 = vmatpush.msra.mxu0 %v331
    %3220 = vmatpush.msra.mxu0 %v327
    %3221 = vmatpush.msra.mxu0 %v323
    %3222 = vmatpush.msra.mxu0 %v319
    %3223 = vmatpush.msra.mxu0 %v315
    %3224 = vmatpush.msra.mxu0 %v311
    %3225 = vmatpush.msra.mxu0 %v307
    %3226 = vmatpush.msra.mxu0 %v303
    %3227 = vmatpush.msra.mxu0 %v299
    %3228 = vmatpush.msra.mxu0 %v295
    %3229 = vmatmul.f32.gmra.mxu0 %v3072
    %v3230 = vpop.f32.mrf.mxu0
    %v3231 = vadd.f32 %v3151, %v3230
    %3232 = vdwg.mxu0
    %v3233 = vadd.f32 %v3171, %v73
    %v3234 = vadd.f32 %v3191, %v74
    %v3235 = vadd.f32 %v3211, %v75
    %v3236 = vadd.f32 %v3231, %v76
    %v3237 = vxor.u32 %v3233, 2147483648
    %v3238 = vmul.f32 %v3237, 1.442695
    %v3239 = vpow.pop %v3238
    %v3240 = vadd.f32 %v3239, 1.0
    %v3241 = vrcp.pop %v3240
    %v3242 = vmul.f32 %v3240, %v3241
    %v3243 = vsub.f32 1.0, %v3242
    %v3244 = vmul.f32 %v3241, %v3243
    %v3245 = vadd.f32 %v3241, %v3244
    %vm3246 = vweird.f32 %v3240
    %vm3247 = vweird.f32 %v3241
    %vm3248 = vmor %vm3246, %vm3247
    %v3249 = vsel %vm3248, %v3241, %v3245
    %v3250 = vand.u32 2147483647, %v3240
    %vm3251 = vcmp.eq.f32.partialorder %v3250, 8.507059e+37
    %v3252 = vand.u32 %v3240, 2147483648
    %v3253 = vor.u32 1.1754944e-38, %v3252
    %v3254 = vsel %vm3251, %v3253, %v3249
    %v3255 = vmul.f32 1.0, %v3254
    %v3256 = vxor.u32 %v3234, 2147483648
    %v3257 = vmul.f32 %v3256, 1.442695
    %v3258 = vpow.pop %v3257
    %v3259 = vadd.f32 %v3258, 1.0
    %v3260 = vrcp.pop %v3259
    %v3261 = vmul.f32 %v3259, %v3260
    %v3262 = vsub.f32 1.0, %v3261
    %v3263 = vmul.f32 %v3260, %v3262
    %v3264 = vadd.f32 %v3260, %v3263
    %vm3265 = vweird.f32 %v3259
    %vm3266 = vweird.f32 %v3260
    %vm3267 = vmor %vm3265, %vm3266
    %v3268 = vsel %vm3267, %v3260, %v3264
    %v3269 = vand.u32 2147483647, %v3259
    %vm3270 = vcmp.eq.f32.partialorder %v3269, 8.507059e+37
    %v3271 = vand.u32 %v3259, 2147483648
    %v3272 = vor.u32 1.1754944e-38, %v3271
    %v3273 = vsel %vm3270, %v3272, %v3268
    %v3274 = vmul.f32 1.0, %v3273
    %v3275 = vtanh.pop %v3235
    %v3276 = vxor.u32 %v3236, 2147483648
    %v3277 = vmul.f32 %v3276, 1.442695
    %v3278 = vpow.pop %v3277
    %v3279 = vadd.f32 %v3278, 1.0
    %v3280 = vrcp.pop %v3279
    %v3281 = vmul.f32 %v3279, %v3280
    %v3282 = vsub.f32 1.0, %v3281
    %v3283 = vmul.f32 %v3280, %v3282
    %v3284 = vadd.f32 %v3280, %v3283
    %vm3285 = vweird.f32 %v3279
    %vm3286 = vweird.f32 %v3280
    %vm3287 = vmor %vm3285, %vm3286
    %v3288 = vsel %vm3287, %v3280, %v3284
    %v3289 = vand.u32 2147483647, %v3279
    %vm3290 = vcmp.eq.f32.partialorder %v3289, 8.507059e+37
    %v3291 = vand.u32 %v3279, 2147483648
    %v3292 = vor.u32 1.1754944e-38, %v3291
    %v3293 = vsel %vm3290, %v3292, %v3288
    %v3294 = vmul.f32 1.0, %v3293
    %v3295 = vmul.f32 %v3274, %v2918
    %v3296 = vmul.f32 %v3255, %v3275
    %v3297 = vadd.f32 %v3295, %v3296
    %v3298 = vtanh.pop %v3297
    %v3299 = vmul.f32 %v3294, %v3298
    %v3300 = vld [vmem:[#allocation6] sm:$0xff]
    %v3301 = vld [vmem:[#allocation6 + $0x8] sm:$0xff]
    %v3302 = vld [vmem:[#allocation6 + $0x10] sm:$0xff]
    %v3303 = vld [vmem:[#allocation6 + $0x18] sm:$0xff]
    %v3304 = vld [vmem:[#allocation6 + $0x20] sm:$0xff]
    %v3305 = vld [vmem:[#allocation6 + $0x28] sm:$0xff]
    %v3306 = vld [vmem:[#allocation6 + $0x30] sm:$0xff]
    %v3307 = vld [vmem:[#allocation6 + $0x38] sm:$0xff]
    %v3308 = vld [vmem:[#allocation6 + $0x40] sm:$0xff]
    %v3309 = vld [vmem:[#allocation6 + $0x48] sm:$0xff]
    %v3310 = vld [vmem:[#allocation6 + $0x50] sm:$0xff]
    %v3311 = vld [vmem:[#allocation6 + $0x58] sm:$0xff]
    %v3312 = vld [vmem:[#allocation6 + $0x60] sm:$0xff]
    %v3313 = vld [vmem:[#allocation6 + $0x68] sm:$0xff]
    %v3314 = vld [vmem:[#allocation6 + $0x70] sm:$0xff]
    %v3315 = vld [vmem:[#allocation6 + $0x78] sm:$0xff]
    %v3316 = vld [vmem:[%s6] sm:$0xff]
    %3317 = vmatpush.msra.mxu0 %v3315
    %3318 = vmatpush.msra.mxu0 %v3314
    %3319 = vmatpush.msra.mxu0 %v3313
    %3320 = vmatpush.msra.mxu0 %v3312
    %3321 = vmatpush.msra.mxu0 %v3311
    %3322 = vmatpush.msra.mxu0 %v3310
    %3323 = vmatpush.msra.mxu0 %v3309
    %3324 = vmatpush.msra.mxu0 %v3308
    %3325 = vmatpush.msra.mxu0 %v3307
    %3326 = vmatpush.msra.mxu0 %v3306
    %3327 = vmatpush.msra.mxu0 %v3305
    %3328 = vmatpush.msra.mxu0 %v3304
    %3329 = vmatpush.msra.mxu0 %v3303
    %3330 = vmatpush.msra.mxu0 %v3302
    %3331 = vmatpush.msra.mxu0 %v3301
    %3332 = vmatpush.msra.mxu0 %v3300
    %3333 = vmatmul.f32.gmra.mxu0 %v3299
    %v3334 = vpop.f32.mrf.mxu0
    %v3335 = vadd.f32 %v3316, %v3334
    %3336 = vdwg.mxu0
    %3337 = vst [vmem:[%s7] sm:$0xff] %v3335
    // Predicated region
    $region42: #{stock_indicator_forward.1} parent=1 // pred_check
      _
    $region43: #{stock_indicator_forward.1} parent=1 // pred_check_branch
      %3339 = sbr.rel (0) target = $region45
    $region44: #{stock_indicator_forward.1} parent=1 // pred_region
      _
    $region45: #{stock_indicator_forward.1} parent=1 // pred_fallthru
      _
    // Predicated region
    $region46: #{stock_indicator_forward.1} parent=1 // pred_check
      _
    $region47: #{stock_indicator_forward.1} parent=1 // pred_check_branch
      %3341 = sbr.rel (0) target = $region49
    $region48: #{stock_indicator_forward.1} parent=1 // pred_region
      _
    $region49: #{stock_indicator_forward.1} parent=1 // pred_fallthru
      _
    %3342 = vsyncpa [#allocation3], 1
    %3343 = vsyncpa [#allocation5], 1

</llo_original>
